<compile_context>
chip_gen: v5e
topology: v5e:2x2
jax: 0.10.0
libtpu: 0.0.40
codegen_flags: <defaults>
</compile_context>

<pallas_src>
import functools
import math

import jax
import jax.numpy as jnp
from jax.experimental import pallas as pl
from jax.experimental.pallas import tpu as pltpu


# ----------------------------------------------------------------------------
# generation-aware VMEM budget
# ----------------------------------------------------------------------------
@functools.lru_cache(maxsize=None)
def _vmem_limit():
    """Scoped-VMEM budget: ~65% of physical VMEM (v5e/v6e 128 MiB -> ~83 MiB,
    v7x 64 MiB -> ~41 MiB).  Conservative fallback if the query fails."""
    phys = 64 * 1024 * 1024
    try:
        phys = int(pltpu.get_tpu_info().vmem_capacity_bytes)
    except Exception:
        pass
    return max(32 * 1024 * 1024, min(int(phys * 0.65), 100 * 1024 * 1024))


def _params(*dims):
    return pltpu.CompilerParams(dimension_semantics=dims,
                                vmem_limit_bytes=_vmem_limit())


# ----------------------------------------------------------------------------
# tiling helpers
# ----------------------------------------------------------------------------
def _row_quantum(dtype):
    """Sublane-packing-aligned row quantum: f32 -> 8, bf16 -> 16, int8 -> 32."""
    return max(8, 32 // jnp.dtype(dtype).itemsize)


def _tile(desired, total, q):
    """Largest tile <= desired that is a multiple of q (or the full dim)."""
    if desired >= total or total <= q:
        return total
    return max(q, (desired // q) * q)


def _reduction_tile(desired, total, q=128):
    """Reduction-axis tile: must exactly divide `total` (padded garbage would
    otherwise pollute the accumulator)."""
    if total <= desired:
        return total
    t = max(q, (desired // q) * q)
    while t > q and total % t != 0:
        t -= q
    return t if total % t == 0 else total


def _divisor_tile(desired, total):
    d = min(desired, total)
    while d > 1 and total % d != 0:
        d -= 1
    return max(d, 1)


def _kv_tile(desired, S):
    """KV tile must divide S exactly (padded keys would pollute the softmax)."""
    if S <= desired:
        return S
    start = min(desired, S)
    start -= start % 8
    for t in range(start, 7, -8):
        if S % t == 0:
            return t
    return S


# ----------------------------------------------------------------------------
# shared LayerNorm epilogue (f32 math)
# ----------------------------------------------------------------------------
def _layer_norm(y, gamma, beta, eps):
    mean = jnp.mean(y, axis=-1, keepdims=True)
    yc = y - mean
    var = jnp.mean(yc * yc, axis=-1, keepdims=True)
    inv = jax.lax.rsqrt(var + eps)
    return yc * inv * gamma + beta


# ----------------------------------------------------------------------------
# linear kernels
# ----------------------------------------------------------------------------
def _linear_kernel(x_ref, w_ref, b_ref, o_ref):
    # x: (tm, K), w: (tn, K) (PyTorch (out, in) layout), b: (1, tn) -> (tm, tn)
    y = jax.lax.dot_general(
        x_ref[...], w_ref[...],
        (((1,), (1,)), ((), ())),                 # contract K vs K (no .T)
        preferred_element_type=jnp.float32)
    y = y + b_ref[...].astype(jnp.float32)
    o_ref[...] = y.astype(o_ref.dtype)


def linear(x, w, b, *, tm=512, tn=None):
    """y = x @ w.T + b (weight-stationary).

    Grid order is (out-tile, row-tile): the weight block index only depends on
    the outer axis, so it stays VMEM-resident while row tiles stream through.
    tn=None keeps the full output dim in one weight block (QKV / out-proj).
    tm=None keeps the whole activation resident (vocab projection) so the big
    weight streams from HBM exactly once."""
    M, K = x.shape
    d_out = w.shape[0]
    qm = _row_quantum(x.dtype)
    itemsize = jnp.dtype(x.dtype).itemsize
    if tm is None:
        if M * K * itemsize <= _vmem_limit() // 6:
            tm = M                                # whole activation resident
        else:
            tm = _tile(2048, M, qm)
    else:
        tm = _tile(tm, M, qm)
    tn = d_out if tn is None else _tile(tn, d_out, 128)
    grid = (pl.cdiv(d_out, tn), pl.cdiv(M, tm))   # weight tile outer, rows inner
    return pl.pallas_call(
        _linear_kernel,
        out_shape=jax.ShapeDtypeStruct((M, d_out), x.dtype),
        grid=grid,
        in_specs=[
            pl.BlockSpec((tm, K), lambda j, i: (i, 0)),
            pl.BlockSpec((tn, K), lambda j, i: (j, 0)),
            pl.BlockSpec((1, tn), lambda j, i: (0, j)),
        ],
        out_specs=pl.BlockSpec((tm, tn), lambda j, i: (i, j)),
        compiler_params=_params("parallel", "parallel"),
    )(x, w, b.reshape(1, d_out))


def _linear_add_ln_kernel(x_ref, w_ref, b_ref, res_ref, g_ref, bt_ref, o_ref,
                          *, eps):
    # out = LayerNorm(x @ w.T + b + residual)  -- matmul + post-norm epilogue.
    y = jax.lax.dot_general(
        x_ref[...], w_ref[...],
        (((1,), (1,)), ((), ())),
        preferred_element_type=jnp.float32)
    y = y + b_ref[...].astype(jnp.float32) + res_ref[...].astype(jnp.float32)
    o_ref[...] = _layer_norm(y, g_ref[...].astype(jnp.float32),
                             bt_ref[...].astype(jnp.float32), eps
                             ).astype(o_ref.dtype)


def linear_add_ln(x, w, b, res, gamma, beta, *, eps=1e-5, tm=512):
    """LayerNorm(x @ w.T + b + res); LN needs the whole D row so only M is
    tiled.  The (D, D) out-projection weight is VMEM-resident."""
    M, K = x.shape
    D = w.shape[0]
    tm = _tile(tm, M, _row_quantum(x.dtype))
    grid = (pl.cdiv(M, tm),)
    return pl.pallas_call(
        functools.partial(_linear_add_ln_kernel, eps=eps),
        out_shape=jax.ShapeDtypeStruct((M, D), x.dtype),
        grid=grid,
        in_specs=[
            pl.BlockSpec((tm, K), lambda i: (i, 0)),
            pl.BlockSpec((D, K), lambda i: (0, 0)),
            pl.BlockSpec((1, D), lambda i: (0, 0)),
            pl.BlockSpec((tm, D), lambda i: (i, 0)),
            pl.BlockSpec((1, D), lambda i: (0, 0)),
            pl.BlockSpec((1, D), lambda i: (0, 0)),
        ],
        out_specs=pl.BlockSpec((tm, D), lambda i: (i, 0)),
        compiler_params=_params("parallel"),
    )(x, w, b.reshape(1, D), res, gamma.reshape(1, D), beta.reshape(1, D))


# ----------------------------------------------------------------------------
# fused FFN (+ residual + LayerNorm)
# ----------------------------------------------------------------------------
def _ffn_add_ln_full_kernel(x_ref, w1_ref, b1_ref, w2_ref, b2_ref, res_ref,
                            g_ref, bt_ref, o_ref, *, eps):
    # Weight-resident FFN: both w1/w2 blocks cover the full dff, so the
    # (tm, dff) hidden lives only in VMEM and there is no accumulator RMW.
    h = jax.lax.dot_general(
        x_ref[...], w1_ref[...],
        (((1,), (1,)), ((), ())),
        preferred_element_type=jnp.float32)
    h = jnp.maximum(h + b1_ref[...].astype(jnp.float32), 0.0)
    y = jax.lax.dot_general(
        h.astype(x_ref.dtype), w2_ref[...],          # native dtype -> MXU rate
        (((1,), (1,)), ((), ())),
        preferred_element_type=jnp.float32)
    y = y + b2_ref[...].astype(jnp.float32) + res_ref[...].astype(jnp.float32)
    o_ref[...] = _layer_norm(y, g_ref[...].astype(jnp.float32),
                             bt_ref[...].astype(jnp.float32), eps
                             ).astype(o_ref.dtype)


def _ffn_add_ln_kernel(x_ref, w1_ref, b1_ref, w2_ref, b2_ref, res_ref,
                       g_ref, bt_ref, o_ref, acc_ref, *, eps):
    # Fallback for very large dff: acc += relu(x @ w1_blk.T + b1_blk) @ w2_blk.T
    # over dff blocks, then residual-add + LayerNorm epilogue on the last step.
    l = pl.program_id(1)

    @pl.when(l == 0)
    def _():
        acc_ref[...] = jnp.zeros_like(acc_ref)

    h = jax.lax.dot_general(
        x_ref[...], w1_ref[...],
        (((1,), (1,)), ((), ())),
        preferred_element_type=jnp.float32)
    h = jnp.maximum(h + b1_ref[...].astype(jnp.float32), 0.0)
    acc_ref[...] += jax.lax.dot_general(
        h.astype(x_ref.dtype), w2_ref[...],
        (((1,), (1,)), ((), ())),
        preferred_element_type=jnp.float32)

    @pl.when(l == pl.num_programs(1) - 1)
    def _():
        y = acc_ref[...] + b2_ref[...].astype(jnp.float32) \
            + res_ref[...].astype(jnp.float32)
        o_ref[...] = _layer_norm(y, g_ref[...].astype(jnp.float32),
                                 bt_ref[...].astype(jnp.float32), eps
                                 ).astype(o_ref.dtype)


def ffn_add_ln(x, w1, b1, w2, b2, res, gamma, beta, *, eps=1e-5,
               tm=512, t_dff=1024):
    """LayerNorm(relu(x @ w1.T + b1) @ w2.T + b2 + res) without materializing
    the (M, dff) intermediate in HBM."""
    M, D = x.shape
    dff = w1.shape[0]
    tm = _tile(tm, M, _row_quantum(x.dtype))
    w_bytes = (w1.size + w2.size) * jnp.dtype(w1.dtype).itemsize

    if w_bytes <= _vmem_limit() // 3:
        # Both FFN weights fit VMEM: keep them resident (streamed from HBM once
        # total, not once per row tile), no dff reduction axis.
        grid = (pl.cdiv(M, tm),)
        return pl.pallas_call(
            functools.partial(_ffn_add_ln_full_kernel, eps=eps),
            out_shape=jax.ShapeDtypeStruct((M, D), x.dtype),
            grid=grid,
            in_specs=[
                pl.BlockSpec((tm, D), lambda i: (i, 0)),
                pl.BlockSpec((dff, D), lambda i: (0, 0)),
                pl.BlockSpec((1, dff), lambda i: (0, 0)),
                pl.BlockSpec((D, dff), lambda i: (0, 0)),
                pl.BlockSpec((1, D), lambda i: (0, 0)),
                pl.BlockSpec((tm, D), lambda i: (i, 0)),
                pl.BlockSpec((1, D), lambda i: (0, 0)),
                pl.BlockSpec((1, D), lambda i: (0, 0)),
            ],
            out_specs=pl.BlockSpec((tm, D), lambda i: (i, 0)),
            compiler_params=_params("parallel"),
        )(x, w1, b1.reshape(1, dff), w2, b2.reshape(1, D), res,
          gamma.reshape(1, D), beta.reshape(1, D))

    # Large dff: stream w1/w2 in dff blocks with an f32 VMEM accumulator.
    t_dff = _reduction_tile(t_dff, dff, 128)
    grid = (pl.cdiv(M, tm), dff // t_dff)
    return pl.pallas_call(
        functools.partial(_ffn_add_ln_kernel, eps=eps),
        out_shape=jax.ShapeDtypeStruct((M, D), x.dtype),
        grid=grid,
        in_specs=[
            pl.BlockSpec((tm, D), lambda i, l: (i, 0)),
            pl.BlockSpec((t_dff, D), lambda i, l: (l, 0)),
            pl.BlockSpec((1, t_dff), lambda i, l: (0, l)),
            pl.BlockSpec((D, t_dff), lambda i, l: (0, l)),
            pl.BlockSpec((1, D), lambda i, l: (0, 0)),
            pl.BlockSpec((tm, D), lambda i, l: (i, 0)),
            pl.BlockSpec((1, D), lambda i, l: (0, 0)),
            pl.BlockSpec((1, D), lambda i, l: (0, 0)),
        ],
        out_specs=pl.BlockSpec((tm, D), lambda i, l: (i, 0)),
        scratch_shapes=[pltpu.VMEM((tm, D), jnp.float32)],
        compiler_params=_params("parallel", "arbitrary"),
    )(x, w1, b1.reshape(1, dff), w2, b2.reshape(1, D), res,
      gamma.reshape(1, D), beta.reshape(1, D))


# ----------------------------------------------------------------------------
# flash-style attention (online softmax, KV axis as grid reduction)
# ----------------------------------------------------------------------------
def _flash_attn_kernel(q_ref, k_ref, v_ref, o_ref, m_sc, l_sc, acc_sc, *,
                       scale):
    kv = pl.program_id(1)

    @pl.when(kv == 0)
    def _():
        m_sc[...] = jnp.full_like(m_sc, -jnp.inf)
        l_sc[...] = jnp.zeros_like(l_sc)
        acc_sc[...] = jnp.zeros_like(acc_sc)

    # q/k/v stay in their native (possibly bf16) dtype for full MXU rate;
    # accumulate in f32 via preferred_element_type.  Scale q (T*Dh elements)
    # instead of the (T, tk) score block.
    q = q_ref[...] * scale
    s = jnp.einsum('bqd,bkd->bqk', q, k_ref[...],
                   preferred_element_type=jnp.float32)
    m_prev = m_sc[...]
    m_new = jnp.maximum(m_prev, jnp.max(s, axis=-1, keepdims=True))
    alpha = jnp.exp(m_prev - m_new)
    p = jnp.exp(s - m_new)
    l_sc[...] = alpha * l_sc[...] + jnp.sum(p, axis=-1, keepdims=True)
    acc_sc[...] = alpha * acc_sc[...] + jnp.einsum(
        'bqk,bkd->bqd', p.astype(v_ref.dtype), v_ref[...],
        preferred_element_type=jnp.float32)
    m_sc[...] = m_new

    @pl.when(kv == pl.num_programs(1) - 1)
    def _():
        o_ref[...] = (acc_sc[...] *
                      pl.reciprocal(l_sc[...], approx=True)).astype(o_ref.dtype)


def _attn_tiles(BH, T, S, Dh, itemsize, budget):
    """Pick (bh_tile, kv_tile) from the VMEM budget; keep >=2 bh blocks so both
    v7x TensorCores get work."""
    tk = _kv_tile(512, S)

    def est(bt):
        io = 2 * bt * (T + 2 * tk) * Dh * itemsize    # double-buffered q/k/v
        out = 2 * bt * T * Dh * itemsize
        scr = bt * T * (Dh + 2) * 4                   # m/l/acc f32 scratch
        tmp = 3 * bt * T * tk * 4                     # s/p f32 temporaries
        return io + out + scr + tmp

    bt = _divisor_tile(8, BH)
    while bt > 1 and est(bt) > budget:
        bt = _divisor_tile(bt - 1, BH)
    if BH >= 2:
        while BH // bt < 2 and bt > 1:
            bt = _divisor_tile(bt - 1, BH)
    return bt, tk


def scaled_dot_attention(q, k, v, scale):
    # q: (BH, T, Dh), k/v: (BH, S, Dh)
    BH, T, Dh = q.shape
    S = k.shape[1]
    itemsize = jnp.dtype(q.dtype).itemsize
    bt, tk = _attn_tiles(BH, T, S, Dh, itemsize, _vmem_limit() // 2)
    grid = (BH // bt, S // tk)
    return pl.pallas_call(
        functools.partial(_flash_attn_kernel, scale=scale),
        out_shape=jax.ShapeDtypeStruct((BH, T, Dh), q.dtype),
        grid=grid,
        in_specs=[
            pl.BlockSpec((bt, T, Dh), lambda i, l: (i, 0, 0)),
            pl.BlockSpec((bt, tk, Dh), lambda i, l: (i, l, 0)),
            pl.BlockSpec((bt, tk, Dh), lambda i, l: (i, l, 0)),
        ],
        out_specs=pl.BlockSpec((bt, T, Dh), lambda i, l: (i, 0, 0)),
        scratch_shapes=[
            pltpu.VMEM((bt, T, 1), jnp.float32),      # running max m
            pltpu.VMEM((bt, T, 1), jnp.float32),      # running denom l
            pltpu.VMEM((bt, T, Dh), jnp.float32),     # output accumulator
        ],
        compiler_params=_params("parallel", "arbitrary"),
    )(q, k, v)


# ----------------------------------------------------------------------------
# Transformer building blocks (glue in plain JAX, compute in kernels above)
# ----------------------------------------------------------------------------
def mha_core(query, kv_input, p, nhead, self_attn):
    """Multi-head attention *without* the output projection (the out-proj is
    fused with the residual-add + LayerNorm by the caller).
    query: (T, N, D), kv_input: (S, N, D) -- attention over axis 0."""
    T, N, D = query.shape
    S = kv_input.shape[0]
    Dh = D // nhead
    q2d = query.reshape(T * N, D)

    if self_attn:
        # fused QKV projection: one matmul, one HBM read of the activations,
        # weight (3D, D) fully VMEM-resident (tn = full output dim).
        qkv = linear(q2d, p["w_in"], p["b_in"])
        q, k, v = qkv[:, :D], qkv[:, D:2 * D], qkv[:, 2 * D:]
    else:
        q = linear(q2d, p["w_in"][:D], p["b_in"][:D])
        kv = linear(kv_input.reshape(S * N, D), p["w_in"][D:], p["b_in"][D:])
        k, v = kv[:, :D], kv[:, D:]

    # TODO(synk): head split/merge transposes are still XLA-level reshuffles;
    #             they could be folded into the QKV / out-proj BlockSpecs.
    q = q.reshape(T, N, nhead, Dh).transpose(1, 2, 0, 3).reshape(N * nhead, T, Dh)
    k = k.reshape(S, N, nhead, Dh).transpose(1, 2, 0, 3).reshape(N * nhead, S, Dh)
    v = v.reshape(S, N, nhead, Dh).transpose(1, 2, 0, 3).reshape(N * nhead, S, Dh)

    out = scaled_dot_attention(q, k, v, scale=1.0 / math.sqrt(Dh))

    out = out.reshape(N, nhead, T, Dh).transpose(2, 0, 1, 3).reshape(T * N, D)
    return out


def encoder_layer(x, p, nhead):
    S, N, D = x.shape
    x2 = x.reshape(S * N, D)
    attn = mha_core(x, x, p["self_attn"], nhead, self_attn=True)
    x2 = linear_add_ln(attn, p["self_attn"]["wo"], p["self_attn"]["bo"],
                       x2, p["ln1_g"], p["ln1_b"])
    x2 = ffn_add_ln(x2, p["w1"], p["b1"], p["w2"], p["b2"],
                    x2, p["ln2_g"], p["ln2_b"])
    return x2.reshape(S, N, D)


def decoder_layer(x, memory, p, nhead):
    T, N, D = x.shape
    x2 = x.reshape(T * N, D)
    attn = mha_core(x, x, p["self_attn"], nhead, self_attn=True)
    x2 = linear_add_ln(attn, p["self_attn"]["wo"], p["self_attn"]["bo"],
                       x2, p["ln1_g"], p["ln1_b"])
    cross = mha_core(x2.reshape(T, N, D), memory, p["cross_attn"], nhead,
                     self_attn=False)
    x2 = linear_add_ln(cross, p["cross_attn"]["wo"], p["cross_attn"]["bo"],
                       x2, p["ln2_g"], p["ln2_b"])
    x2 = ffn_add_ln(x2, p["w1"], p["b1"], p["w2"], p["b2"],
                    x2, p["ln3_g"], p["ln3_b"])
    return x2.reshape(T, N, D)


def bart_forward(params, src, tgt, nhead):
    emb = params["embedding"]          # (vocab, d_model)
    pos = params["pos"]                # (1, 1024, d_model)
    B, Ls = src.shape
    _, Lt = tgt.shape

    src_emb = jnp.take(emb, src, axis=0) + pos[:, :Ls, :]   # (B, Ls, D)
    tgt_emb = jnp.take(emb, tgt, axis=0) + pos[:, :Lt, :]   # (B, Lt, D)

    # Fed directly into (seq, batch, d_model)-style layers, exactly like the
    # reference module (batch_first=False default).
    x = src_emb
    for p in params["enc_layers"]:
        x = encoder_layer(x, p, nhead)
    memory = x

    y = tgt_emb
    for p in params["dec_layers"]:
        y = decoder_layer(y, memory, p, nhead)

    T, N, D = y.shape
    # vocab projection: activations resident (tm=None), w_out streamed once.
    logits = linear(y.reshape(T * N, D), params["w_out"], params["b_out"],
                    tm=None, tn=512)
    return logits.reshape(T, N, -1)    # (batch_size, tgt_len, vocab_size)


# ----------------------------------------------------------------------------
# Deterministic parameter construction (shapes mirror the PyTorch module)
# ----------------------------------------------------------------------------
def init_params(key, vocab_size, d_model, nhead, n_enc, n_dec, dff,
                dtype=jnp.float32):
    keys = iter(jax.random.split(key, 4096))

    def rand(shape, scale=0.02):
        return (scale * jax.random.normal(next(keys), shape, jnp.float32)
                ).astype(dtype)

    def dense(out_d, in_d):
        return rand((out_d, in_d)), jnp.zeros((out_d,), dtype)

    def attn():
        # fused in-projection weight (stacked q/k/v), PyTorch (out, in) layout
        w_in, b_in = dense(3 * d_model, d_model)
        wo, bo = dense(d_model, d_model)
        return dict(w_in=w_in, b_in=b_in, wo=wo, bo=bo)

    ones = lambda: jnp.ones((d_model,), dtype)
    zeros = lambda: jnp.zeros((d_model,), dtype)

    def enc_layer():
        w1, b1 = dense(dff, d_model)
        w2, b2 = dense(d_model, dff)
        return dict(self_attn=attn(), w1=w1, b1=b1, w2=w2, b2=b2,
                    ln1_g=ones(), ln1_b=zeros(), ln2_g=ones(), ln2_b=zeros())

    def dec_layer():
        w1, b1 = dense(dff, d_model)
        w2, b2 = dense(d_model, dff)
        return dict(self_attn=attn(), cross_attn=attn(), w1=w1, b1=b1,
                    w2=w2, b2=b2,
                    ln1_g=ones(), ln1_b=zeros(), ln2_g=ones(), ln2_b=zeros(),
                    ln3_g=ones(), ln3_b=zeros())

    w_out, b_out = dense(vocab_size, d_model)
    return dict(
        embedding=rand((vocab_size, d_model), scale=0.1),
        pos=jnp.zeros((1, 1024, d_model), dtype),   # matches torch.zeros init
        enc_layers=[enc_layer() for _ in range(n_enc)],
        dec_layers=[dec_layer() for _ in range(n_dec)],
        w_out=w_out, b_out=b_out,
    )


# ----------------------------------------------------------------------------
if __name__ == "__main__":
    # Small instantiation consistent with the module's forward
    # (PyTorch defaults are d_model=768, nhead=12, 12+12 layers, dff=2048 —
    #  scaled down here for a fast synthetic test).  Use dtype=jnp.bfloat16 in
    #  init_params for the fast MXU path at real sizes; kernels always
    #  accumulate / normalize in f32.
    VOCAB = 256
    D_MODEL = 128
    NHEAD = 4
    N_ENC = 2
    N_DEC = 2
    DFF = 256
    BATCH = 2
    SRC_LEN = 8
    TGT_LEN = 8   # must equal SRC_LEN (as in the reference module)

    root = jax.random.PRNGKey(0)
    k_params, k_src, k_tgt = jax.random.split(root, 3)

    params = init_params(k_params, VOCAB, D_MODEL, NHEAD, N_ENC, N_DEC, DFF)
    src = jax.random.randint(k_src, (BATCH, SRC_LEN), 0, VOCAB, dtype=jnp.int32)
    tgt = jax.random.randint(k_tgt, (BATCH, TGT_LEN), 0, VOCAB, dtype=jnp.int32)

    fwd = jax.jit(functools.partial(bart_forward, nhead=NHEAD))
    logits = fwd(params, src, tgt)
    jax.block_until_ready(logits)

    assert logits.shape == (BATCH, TGT_LEN, VOCAB), logits.shape
    assert bool(jnp.all(jnp.isfinite(logits)))
    print("KERNEL_OK")
</pallas_src>

<mosaic_0001>
module attributes {stable_mosaic.version = 11 : i64} {
  func.func @_flash_attn_kernel(%arg0: i32, %arg1: i32, %arg2: memref<8x2x32xf32, #tpu.memory_space<vmem>>, %arg3: memref<8x2x32xf32, #tpu.memory_space<vmem>>, %arg4: memref<8x2x32xf32, #tpu.memory_space<vmem>>, %arg5: memref<8x2x32xf32, #tpu.memory_space<vmem>>, %arg6: memref<8x2x1xf32, #tpu.memory_space<vmem>>, %arg7: memref<8x2x1xf32, #tpu.memory_space<vmem>>, %arg8: memref<8x2x32xf32, #tpu.memory_space<vmem>>) attributes {dimension_semantics = [#tpu.dimension_semantics<parallel>, #tpu.dimension_semantics<arbitrary>], iteration_bounds = array<i64: 4, 1>, scalar_prefetch = 0 : i64, scratch_operands = 3 : i64, tpu.core_type = #tpu.core_type<tc>, window_params = [{transform_indices = @transform_0, window_bounds = array<i64: 8, 2, 32>}, {transform_indices = @transform_1, window_bounds = array<i64: 8, 2, 32>}, {transform_indices = @transform_2, window_bounds = array<i64: 8, 2, 32>}, {transform_indices = @transform_3, window_bounds = array<i64: 8, 2, 32>}]} {
    %c0_i32 = arith.constant 0 : i32
    %0 = arith.cmpi eq, %arg1, %c0_i32 : i32
    %1 = arith.extui %0 : i1 to i32
    %c0_i32_0 = arith.constant 0 : i32
    %2 = arith.cmpi ne, %1, %c0_i32_0 : i32
    scf.if %2 {
      %cst_33 = arith.constant 0xFF800000 : f32
      %34 = vector.broadcast %cst_33 : f32 to vector<8x2x1xf32>
      %c0_34 = arith.constant 0 : index
      %c0_35 = arith.constant 0 : index
      %c0_36 = arith.constant 0 : index
      %35 = vector.load %arg6[%c0_34, %c0_35, %c0_36] : memref<8x2x1xf32, #tpu.memory_space<vmem>>, vector<8x2x1xf32>
      tpu.vector_store %arg6[%c0_34, %c0_35, %c0_36], %34 {strides = array<i32>} : memref<8x2x1xf32, #tpu.memory_space<vmem>>, vector<8x2x1xf32>,
      %cst_37 = arith.constant 0.000000e+00 : f32
      %36 = vector.broadcast %cst_37 : f32 to vector<8x2x1xf32>
      %c0_38 = arith.constant 0 : index
      %c0_39 = arith.constant 0 : index
      %c0_40 = arith.constant 0 : index
      %37 = vector.load %arg7[%c0_38, %c0_39, %c0_40] : memref<8x2x1xf32, #tpu.memory_space<vmem>>, vector<8x2x1xf32>
      tpu.vector_store %arg7[%c0_38, %c0_39, %c0_40], %36 {strides = array<i32>} : memref<8x2x1xf32, #tpu.memory_space<vmem>>, vector<8x2x1xf32>,
      %cst_41 = arith.constant 0.000000e+00 : f32
      %38 = vector.broadcast %cst_41 : f32 to vector<8x2x32xf32>
      %c0_42 = arith.constant 0 : index
      %c0_43 = arith.constant 0 : index
      %c0_44 = arith.constant 0 : index
      %39 = vector.load %arg8[%c0_42, %c0_43, %c0_44] : memref<8x2x32xf32, #tpu.memory_space<vmem>>, vector<8x2x32xf32>
      tpu.vector_store %arg8[%c0_42, %c0_43, %c0_44], %38 {strides = array<i32>} : memref<8x2x32xf32, #tpu.memory_space<vmem>>, vector<8x2x32xf32>,
    } else {
    }
    %c0 = arith.constant 0 : index
    %c0_1 = arith.constant 0 : index
    %c0_2 = arith.constant 0 : index
    %3 = vector.load %arg2[%c0, %c0_1, %c0_2] : memref<8x2x32xf32, #tpu.memory_space<vmem>>, vector<8x2x32xf32>
    %cst = arith.constant 0.176776692 : f32
    %4 = vector.broadcast %cst : f32 to vector<8x2x32xf32>
    %5 = arith.mulf %3, %4 : vector<8x2x32xf32>
    %c0_3 = arith.constant 0 : index
    %c0_4 = arith.constant 0 : index
    %c0_5 = arith.constant 0 : index
    %6 = vector.load %arg3[%c0_3, %c0_4, %c0_5] : memref<8x2x32xf32, #tpu.memory_space<vmem>>, vector<8x2x32xf32>
    "tpu.trace_start"() <{level = 10 : i32, message = "bqd,bkd->bqk"}> : () -> ()
    %cst_6 = arith.constant dense<0.000000e+00> : vector<8x2x2xf32>
    %7 = tpu.matmul %5, %6, %cst_6 {dimension_numbers = #tpu.dot_dimension_numbers<[2], [2], [1], [1], [0, 0, 0, 1, 1, 1], [0], [0]>} : vector<8x2x32xf32>, vector<8x2x32xf32>, vector<8x2x2xf32> -> vector<8x2x2xf32>
    "tpu.trace_stop"() : () -> ()
    %c0_7 = arith.constant 0 : index
    %c0_8 = arith.constant 0 : index
    %c0_9 = arith.constant 0 : index
    %8 = vector.load %arg6[%c0_7, %c0_8, %c0_9] : memref<8x2x1xf32, #tpu.memory_space<vmem>>, vector<8x2x1xf32>
    %cst_10 = arith.constant dense<0xFF800000> : vector<8x2xf32>
    %9 = vector.multi_reduction <maximumf>, %7, %cst_10 [2] : vector<8x2x2xf32> to vector<8x2xf32>
    %10 = vector.shape_cast %9 : vector<8x2xf32> to vector<8x2x1xf32>
    %11 = arith.maximumf %8, %10 : vector<8x2x1xf32>
    %12 = arith.subf %8, %11 : vector<8x2x1xf32>
    %13 = math.exp %12 : vector<8x2x1xf32>
    %14 = vector.broadcast %11 : vector<8x2x1xf32> to vector<8x2x2xf32>
    %15 = arith.subf %7, %14 : vector<8x2x2xf32>
    %16 = math.exp %15 : vector<8x2x2xf32>
    %c0_11 = arith.constant 0 : index
    %c0_12 = arith.constant 0 : index
    %c0_13 = arith.constant 0 : index
    %17 = vector.load %arg7[%c0_11, %c0_12, %c0_13] : memref<8x2x1xf32, #tpu.memory_space<vmem>>, vector<8x2x1xf32>
    %18 = arith.mulf %13, %17 : vector<8x2x1xf32>
    %cst_14 = arith.constant dense<0.000000e+00> : vector<8x2xf32>
    %19 = vector.multi_reduction <add>, %16, %cst_14 [2] : vector<8x2x2xf32> to vector<8x2xf32>
    %20 = vector.shape_cast %19 : vector<8x2xf32> to vector<8x2x1xf32>
    %21 = arith.addf %18, %20 : vector<8x2x1xf32>
    %c0_15 = arith.constant 0 : index
    %c0_16 = arith.constant 0 : index
    %c0_17 = arith.constant 0 : index
    %22 = vector.load %arg7[%c0_15, %c0_16, %c0_17] : memref<8x2x1xf32, #tpu.memory_space<vmem>>, vector<8x2x1xf32>
    tpu.vector_store %arg7[%c0_15, %c0_16, %c0_17], %21 {strides = array<i32>} : memref<8x2x1xf32, #tpu.memory_space<vmem>>, vector<8x2x1xf32>,
    %c0_18 = arith.constant 0 : index
    %c0_19 = arith.constant 0 : index
    %c0_20 = arith.constant 0 : index
    %23 = vector.load %arg8[%c0_18, %c0_19, %c0_20] : memref<8x2x32xf32, #tpu.memory_space<vmem>>, vector<8x2x32xf32>
    %24 = vector.broadcast %13 : vector<8x2x1xf32> to vector<8x2x32xf32>
    %25 = arith.mulf %24, %23 : vector<8x2x32xf32>
    %c0_21 = arith.constant 0 : index
    %c0_22 = arith.constant 0 : index
    %c0_23 = arith.constant 0 : index
    %26 = vector.load %arg4[%c0_21, %c0_22, %c0_23] : memref<8x2x32xf32, #tpu.memory_space<vmem>>, vector<8x2x32xf32>
    "tpu.trace_start"() <{level = 10 : i32, message = "bqk,bkd->bqd"}> : () -> ()
    %cst_24 = arith.constant dense<0.000000e+00> : vector<8x2x32xf32>
    %27 = tpu.matmul %16, %26, %cst_24 {dimension_numbers = #tpu.dot_dimension_numbers<[2], [1], [1], [2], [0, 0, 0, 1, 1, 2], [0], [0]>} : vector<8x2x2xf32>, vector<8x2x32xf32>, vector<8x2x32xf32> -> vector<8x2x32xf32>
    "tpu.trace_stop"() : () -> ()
    %28 = arith.addf %25, %27 : vector<8x2x32xf32>
    %c0_25 = arith.constant 0 : index
    %c0_26 = arith.constant 0 : index
    %c0_27 = arith.constant 0 : index
    %29 = vector.load %arg8[%c0_25, %c0_26, %c0_27] : memref<8x2x32xf32, #tpu.memory_space<vmem>>, vector<8x2x32xf32>
    tpu.vector_store %arg8[%c0_25, %c0_26, %c0_27], %28 {strides = array<i32>} : memref<8x2x32xf32, #tpu.memory_space<vmem>>, vector<8x2x32xf32>,
    %c0_28 = arith.constant 0 : index
    %c0_29 = arith.constant 0 : index
    %c0_30 = arith.constant 0 : index
    %30 = vector.load %arg6[%c0_28, %c0_29, %c0_30] : memref<8x2x1xf32, #tpu.memory_space<vmem>>, vector<8x2x1xf32>
    tpu.vector_store %arg6[%c0_28, %c0_29, %c0_30], %11 {strides = array<i32>} : memref<8x2x1xf32, #tpu.memory_space<vmem>>, vector<8x2x1xf32>,
    %c0_i32_31 = arith.constant 0 : i32
    %31 = arith.cmpi eq, %arg1, %c0_i32_31 : i32
    %32 = arith.extui %31 : i1 to i32
    %c0_i32_32 = arith.constant 0 : i32
    %33 = arith.cmpi ne, %32, %c0_i32_32 : i32
    scf.if %33 {
      %c0_33 = arith.constant 0 : index
      %c0_34 = arith.constant 0 : index
      %c0_35 = arith.constant 0 : index
      %34 = vector.load %arg8[%c0_33, %c0_34, %c0_35] : memref<8x2x32xf32, #tpu.memory_space<vmem>>, vector<8x2x32xf32>
      %c0_36 = arith.constant 0 : index
      %c0_37 = arith.constant 0 : index
      %c0_38 = arith.constant 0 : index
      %35 = vector.load %arg7[%c0_36, %c0_37, %c0_38] : memref<8x2x1xf32, #tpu.memory_space<vmem>>, vector<8x2x1xf32>
      %36 = tpu.reciprocal %35 {approx = true} : vector<8x2x1xf32> -> vector<8x2x1xf32>
      %37 = vector.broadcast %36 : vector<8x2x1xf32> to vector<8x2x32xf32>
      %38 = arith.mulf %34, %37 : vector<8x2x32xf32>
      %c0_39 = arith.constant 0 : index
      %c0_40 = arith.constant 0 : index
      %c0_41 = arith.constant 0 : index
      %39 = vector.load %arg5[%c0_39, %c0_40, %c0_41] : memref<8x2x32xf32, #tpu.memory_space<vmem>>, vector<8x2x32xf32>
      tpu.vector_store %arg5[%c0_39, %c0_40, %c0_41], %38 {strides = array<i32>} : memref<8x2x32xf32, #tpu.memory_space<vmem>>, vector<8x2x32xf32>,
    } else {
    }
    return
  }
  func.func @transform_0(%arg0: i32, %arg1: i32) -> (i32, i32, i32) {
    %c0_i32 = arith.constant 0 : i32
    %c0_i32_0 = arith.constant 0 : i32
    %c0_i32_1 = arith.constant 0 : i32
    return %arg0, %c0_i32, %c0_i32_0 : i32, i32, i32
  }
  func.func @transform_1(%arg0: i32, %arg1: i32) -> (i32, i32, i32) {
    %c0_i32 = arith.constant 0 : i32
    %c0_i32_0 = arith.constant 0 : i32
    return %arg0, %arg1, %c0_i32 : i32, i32, i32
  }
  func.func @transform_2(%arg0: i32, %arg1: i32) -> (i32, i32, i32) {
    %c0_i32 = arith.constant 0 : i32
    %c0_i32_0 = arith.constant 0 : i32
    return %arg0, %arg1, %c0_i32 : i32, i32, i32
  }
  func.func @transform_3(%arg0: i32, %arg1: i32) -> (i32, i32, i32) {
    %c0_i32 = arith.constant 0 : i32
    %c0_i32_0 = arith.constant 0 : i32
    %c0_i32_1 = arith.constant 0 : i32
    return %arg0, %c0_i32, %c0_i32_0 : i32, i32, i32
  }
}

module attributes {stable_mosaic.version = 11 : i64} {
  func.func @_linear_kernel(%arg0: i32, %arg1: i32, %arg2: memref<16x128xf32, #tpu.memory_space<vmem>>, %arg3: memref<384x128xf32, #tpu.memory_space<vmem>>, %arg4: memref<1x384xf32, #tpu.memory_space<vmem>>, %arg5: memref<16x384xf32, #tpu.memory_space<vmem>>) attributes {dimension_semantics = [#tpu.dimension_semantics<parallel>, #tpu.dimension_semantics<parallel>], iteration_bounds = array<i64: 1, 1>, scalar_prefetch = 0 : i64, scratch_operands = 0 : i64, tpu.core_type = #tpu.core_type<tc>, window_params = [{transform_indices = @transform_0, window_bounds = array<i64: 16, 128>}, {transform_indices = @transform_1, window_bounds = array<i64: 384, 128>}, {transform_indices = @transform_2, window_bounds = array<i64: 1, 384>}, {transform_indices = @transform_3, window_bounds = array<i64: 16, 384>}]} {
    %c0 = arith.constant 0 : index
    %c0_0 = arith.constant 0 : index
    %0 = vector.load %arg2[%c0, %c0_0] : memref<16x128xf32, #tpu.memory_space<vmem>>, vector<16x128xf32>
    %c0_1 = arith.constant 0 : index
    %c0_2 = arith.constant 0 : index
    %1 = vector.load %arg3[%c0_1, %c0_2] : memref<384x128xf32, #tpu.memory_space<vmem>>, vector<384x128xf32>
    %cst = arith.constant dense<0.000000e+00> : vector<16x384xf32>
    %2 = tpu.matmul %0, %1, %cst {dimension_numbers = #tpu.dot_dimension_numbers<[1], [1], [0], [0], [0, 0, 1, 0], [], []>} : vector<16x128xf32>, vector<384x128xf32>, vector<16x384xf32> -> vector<16x384xf32>
    %c0_3 = arith.constant 0 : index
    %c0_4 = arith.constant 0 : index
    %3 = vector.load %arg4[%c0_3, %c0_4] : memref<1x384xf32, #tpu.memory_space<vmem>>, vector<1x384xf32>
    %4 = vector.broadcast %3 : vector<1x384xf32> to vector<16x384xf32>
    %5 = arith.addf %2, %4 : vector<16x384xf32>
    %c0_5 = arith.constant 0 : index
    %c0_6 = arith.constant 0 : index
    %6 = vector.load %arg5[%c0_5, %c0_6] : memref<16x384xf32, #tpu.memory_space<vmem>>, vector<16x384xf32>
    tpu.vector_store %arg5[%c0_5, %c0_6], %5 {strides = array<i32>} : memref<16x384xf32, #tpu.memory_space<vmem>>, vector<16x384xf32>,
    return
  }
  func.func @transform_0(%arg0: i32, %arg1: i32) -> (i32, i32) {
    %c0_i32 = arith.constant 0 : i32
    %c0_i32_0 = arith.constant 0 : i32
    return %arg1, %c0_i32 : i32, i32
  }
  func.func @transform_1(%arg0: i32, %arg1: i32) -> (i32, i32) {
    %c0_i32 = arith.constant 0 : i32
    %c0_i32_0 = arith.constant 0 : i32
    return %arg0, %c0_i32 : i32, i32
  }
  func.func @transform_2(%arg0: i32, %arg1: i32) -> (i32, i32) {
    %c0_i32 = arith.constant 0 : i32
    %c0_i32_0 = arith.constant 0 : i32
    return %c0_i32, %arg0 : i32, i32
  }
  func.func @transform_3(%arg0: i32, %arg1: i32) -> (i32, i32) {
    %c0_i32 = arith.constant 0 : i32
    return %arg1, %arg0 : i32, i32
  }
}

module attributes {stable_mosaic.version = 11 : i64} {
  func.func @_linear_add_ln_kernel(%arg0: i32, %arg1: memref<16x128xf32, #tpu.memory_space<vmem>>, %arg2: memref<128x128xf32, #tpu.memory_space<vmem>>, %arg3: memref<1x128xf32, #tpu.memory_space<vmem>>, %arg4: memref<16x128xf32, #tpu.memory_space<vmem>>, %arg5: memref<1x128xf32, #tpu.memory_space<vmem>>, %arg6: memref<1x128xf32, #tpu.memory_space<vmem>>, %arg7: memref<16x128xf32, #tpu.memory_space<vmem>>) attributes {dimension_semantics = [#tpu.dimension_semantics<parallel>], iteration_bounds = array<i64: 1>, scalar_prefetch = 0 : i64, scratch_operands = 0 : i64, tpu.core_type = #tpu.core_type<tc>, window_params = [{transform_indices = @transform_0, window_bounds = array<i64: 16, 128>}, {pipeline_mode = #tpu.pipeline_mode<synchronous>, transform_indices = @transform_1, window_bounds = array<i64: 128, 128>}, {pipeline_mode = #tpu.pipeline_mode<synchronous>, transform_indices = @transform_2, window_bounds = array<i64: 1, 128>}, {transform_indices = @transform_3, window_bounds = array<i64: 16, 128>}, {pipeline_mode = #tpu.pipeline_mode<synchronous>, transform_indices = @transform_4, window_bounds = array<i64: 1, 128>}, {pipeline_mode = #tpu.pipeline_mode<synchronous>, transform_indices = @transform_5, window_bounds = array<i64: 1, 128>}, {transform_indices = @transform_6, window_bounds = array<i64: 16, 128>}]} {
    %c0 = arith.constant 0 : index
    %c0_0 = arith.constant 0 : index
    %0 = vector.load %arg1[%c0, %c0_0] : memref<16x128xf32, #tpu.memory_space<vmem>>, vector<16x128xf32>
    %c0_1 = arith.constant 0 : index
    %c0_2 = arith.constant 0 : index
    %1 = vector.load %arg2[%c0_1, %c0_2] : memref<128x128xf32, #tpu.memory_space<vmem>>, vector<128x128xf32>
    %cst = arith.constant dense<0.000000e+00> : vector<16x128xf32>
    %2 = tpu.matmul %0, %1, %cst {dimension_numbers = #tpu.dot_dimension_numbers<[1], [1], [0], [0], [0, 0, 1, 0], [], []>} : vector<16x128xf32>, vector<128x128xf32>, vector<16x128xf32> -> vector<16x128xf32>
    %c0_3 = arith.constant 0 : index
    %c0_4 = arith.constant 0 : index
    %3 = vector.load %arg3[%c0_3, %c0_4] : memref<1x128xf32, #tpu.memory_space<vmem>>, vector<1x128xf32>
    %4 = vector.broadcast %3 : vector<1x128xf32> to vector<16x128xf32>
    %5 = arith.addf %2, %4 : vector<16x128xf32>
    %c0_5 = arith.constant 0 : index
    %c0_6 = arith.constant 0 : index
    %6 = vector.load %arg4[%c0_5, %c0_6] : memref<16x128xf32, #tpu.memory_space<vmem>>, vector<16x128xf32>
    %7 = arith.addf %5, %6 : vector<16x128xf32>
    %c0_7 = arith.constant 0 : index
    %c0_8 = arith.constant 0 : index
    %8 = vector.load %arg5[%c0_7, %c0_8] : memref<1x128xf32, #tpu.memory_space<vmem>>, vector<1x128xf32>
    %c0_9 = arith.constant 0 : index
    %c0_10 = arith.constant 0 : index
    %9 = vector.load %arg6[%c0_9, %c0_10] : memref<1x128xf32, #tpu.memory_space<vmem>>, vector<1x128xf32>
    %cst_11 = arith.constant dense<0.000000e+00> : vector<16xf32>
    %10 = vector.multi_reduction <add>, %7, %cst_11 [1] : vector<16x128xf32> to vector<16xf32>
    %11 = vector.shape_cast %10 : vector<16xf32> to vector<16x1xf32>
    %cst_12 = arith.constant 1.280000e+02 : f32
    %12 = vector.broadcast %cst_12 : f32 to vector<16x1xf32>
    %13 = arith.divf %11, %12 : vector<16x1xf32>
    %14 = vector.broadcast %13 : vector<16x1xf32> to vector<16x128xf32>
    %15 = arith.subf %7, %14 : vector<16x128xf32>
    %16 = arith.mulf %15, %15 : vector<16x128xf32>
    %cst_13 = arith.constant dense<0.000000e+00> : vector<16xf32>
    %17 = vector.multi_reduction <add>, %16, %cst_13 [1] : vector<16x128xf32> to vector<16xf32>
    %18 = vector.shape_cast %17 : vector<16xf32> to vector<16x1xf32>
    %cst_14 = arith.constant 1.280000e+02 : f32
    %19 = vector.broadcast %cst_14 : f32 to vector<16x1xf32>
    %20 = arith.divf %18, %19 : vector<16x1xf32>
    %cst_15 = arith.constant 9.99999974E-6 : f32
    %21 = vector.broadcast %cst_15 : f32 to vector<16x1xf32>
    %22 = arith.addf %20, %21 : vector<16x1xf32>
    %23 = math.rsqrt %22 : vector<16x1xf32>
    %24 = vector.broadcast %23 : vector<16x1xf32> to vector<16x128xf32>
    %25 = arith.mulf %15, %24 : vector<16x128xf32>
    %26 = vector.broadcast %8 : vector<1x128xf32> to vector<16x128xf32>
    %27 = arith.mulf %25, %26 : vector<16x128xf32>
    %28 = vector.broadcast %9 : vector<1x128xf32> to vector<16x128xf32>
    %29 = arith.addf %27, %28 : vector<16x128xf32>
    %c0_16 = arith.constant 0 : index
    %c0_17 = arith.constant 0 : index
    %30 = vector.load %arg7[%c0_16, %c0_17] : memref<16x128xf32, #tpu.memory_space<vmem>>, vector<16x128xf32>
    tpu.vector_store %arg7[%c0_16, %c0_17], %29 {strides = array<i32>} : memref<16x128xf32, #tpu.memory_space<vmem>>, vector<16x128xf32>,
    return
  }
  func.func @transform_0(%arg0: i32) -> (i32, i32) {
    %c0_i32 = arith.constant 0 : i32
    %c0_i32_0 = arith.constant 0 : i32
    return %arg0, %c0_i32 : i32, i32
  }
  func.func @transform_1(%arg0: i32) -> (i32, i32) {
    %c0_i32 = arith.constant 0 : i32
    %c0_i32_0 = arith.constant 0 : i32
    %c0_i32_1 = arith.constant 0 : i32
    return %c0_i32, %c0_i32_0 : i32, i32
  }
  func.func @transform_2(%arg0: i32) -> (i32, i32) {
    %c0_i32 = arith.constant 0 : i32
    %c0_i32_0 = arith.constant 0 : i32
    %c0_i32_1 = arith.constant 0 : i32
    return %c0_i32, %c0_i32_0 : i32, i32
  }
  func.func @transform_3(%arg0: i32) -> (i32, i32) {
    %c0_i32 = arith.constant 0 : i32
    %c0_i32_0 = arith.constant 0 : i32
    return %arg0, %c0_i32 : i32, i32
  }
  func.func @transform_4(%arg0: i32) -> (i32, i32) {
    %c0_i32 = arith.constant 0 : i32
    %c0_i32_0 = arith.constant 0 : i32
    %c0_i32_1 = arith.constant 0 : i32
    return %c0_i32, %c0_i32_0 : i32, i32
  }
  func.func @transform_5(%arg0: i32) -> (i32, i32) {
    %c0_i32 = arith.constant 0 : i32
    %c0_i32_0 = arith.constant 0 : i32
    %c0_i32_1 = arith.constant 0 : i32
    return %c0_i32, %c0_i32_0 : i32, i32
  }
  func.func @transform_6(%arg0: i32) -> (i32, i32) {
    %c0_i32 = arith.constant 0 : i32
    %c0_i32_0 = arith.constant 0 : i32
    return %arg0, %c0_i32 : i32, i32
  }
}

module attributes {stable_mosaic.version = 11 : i64} {
  func.func @_linear_kernel(%arg0: i32, %arg1: i32, %arg2: memref<16x128xf32, #tpu.memory_space<vmem>>, %arg3: memref<128x128xf32, #tpu.memory_space<vmem>>, %arg4: memref<1x128xf32, #tpu.memory_space<vmem>>, %arg5: memref<16x128xf32, #tpu.memory_space<vmem>>) attributes {dimension_semantics = [#tpu.dimension_semantics<parallel>, #tpu.dimension_semantics<parallel>], iteration_bounds = array<i64: 1, 1>, scalar_prefetch = 0 : i64, scratch_operands = 0 : i64, tpu.core_type = #tpu.core_type<tc>, window_params = [{transform_indices = @transform_0, window_bounds = array<i64: 16, 128>}, {transform_indices = @transform_1, window_bounds = array<i64: 128, 128>}, {transform_indices = @transform_2, window_bounds = array<i64: 1, 128>}, {transform_indices = @transform_3, window_bounds = array<i64: 16, 128>}]} {
    %c0 = arith.constant 0 : index
    %c0_0 = arith.constant 0 : index
    %0 = vector.load %arg2[%c0, %c0_0] : memref<16x128xf32, #tpu.memory_space<vmem>>, vector<16x128xf32>
    %c0_1 = arith.constant 0 : index
    %c0_2 = arith.constant 0 : index
    %1 = vector.load %arg3[%c0_1, %c0_2] : memref<128x128xf32, #tpu.memory_space<vmem>>, vector<128x128xf32>
    %cst = arith.constant dense<0.000000e+00> : vector<16x128xf32>
    %2 = tpu.matmul %0, %1, %cst {dimension_numbers = #tpu.dot_dimension_numbers<[1], [1], [0], [0], [0, 0, 1, 0], [], []>} : vector<16x128xf32>, vector<128x128xf32>, vector<16x128xf32> -> vector<16x128xf32>
    %c0_3 = arith.constant 0 : index
    %c0_4 = arith.constant 0 : index
    %3 = vector.load %arg4[%c0_3, %c0_4] : memref<1x128xf32, #tpu.memory_space<vmem>>, vector<1x128xf32>
    %4 = vector.broadcast %3 : vector<1x128xf32> to vector<16x128xf32>
    %5 = arith.addf %2, %4 : vector<16x128xf32>
    %c0_5 = arith.constant 0 : index
    %c0_6 = arith.constant 0 : index
    %6 = vector.load %arg5[%c0_5, %c0_6] : memref<16x128xf32, #tpu.memory_space<vmem>>, vector<16x128xf32>
    tpu.vector_store %arg5[%c0_5, %c0_6], %5 {strides = array<i32>} : memref<16x128xf32, #tpu.memory_space<vmem>>, vector<16x128xf32>,
    return
  }
  func.func @transform_0(%arg0: i32, %arg1: i32) -> (i32, i32) {
    %c0_i32 = arith.constant 0 : i32
    %c0_i32_0 = arith.constant 0 : i32
    return %arg1, %c0_i32 : i32, i32
  }
  func.func @transform_1(%arg0: i32, %arg1: i32) -> (i32, i32) {
    %c0_i32 = arith.constant 0 : i32
    %c0_i32_0 = arith.constant 0 : i32
    return %arg0, %c0_i32 : i32, i32
  }
  func.func @transform_2(%arg0: i32, %arg1: i32) -> (i32, i32) {
    %c0_i32 = arith.constant 0 : i32
    %c0_i32_0 = arith.constant 0 : i32
    return %c0_i32, %arg0 : i32, i32
  }
  func.func @transform_3(%arg0: i32, %arg1: i32) -> (i32, i32) {
    %c0_i32 = arith.constant 0 : i32
    return %arg1, %arg0 : i32, i32
  }
}

module attributes {stable_mosaic.version = 11 : i64} {
  func.func @_linear_kernel(%arg0: i32, %arg1: i32, %arg2: memref<16x128xf32, #tpu.memory_space<vmem>>, %arg3: memref<384x128xf32, #tpu.memory_space<vmem>>, %arg4: memref<1x384xf32, #tpu.memory_space<vmem>>, %arg5: memref<16x384xf32, #tpu.memory_space<vmem>>) attributes {dimension_semantics = [#tpu.dimension_semantics<parallel>, #tpu.dimension_semantics<parallel>], iteration_bounds = array<i64: 1, 1>, scalar_prefetch = 0 : i64, scratch_operands = 0 : i64, tpu.core_type = #tpu.core_type<tc>, window_params = [{transform_indices = @transform_0, window_bounds = array<i64: 16, 128>}, {transform_indices = @transform_1, window_bounds = array<i64: 384, 128>}, {transform_indices = @transform_2, window_bounds = array<i64: 1, 384>}, {transform_indices = @transform_3, window_bounds = array<i64: 16, 384>}]} {
    %c0 = arith.constant 0 : index
    %c0_0 = arith.constant 0 : index
    %0 = vector.load %arg2[%c0, %c0_0] : memref<16x128xf32, #tpu.memory_space<vmem>>, vector<16x128xf32>
    %c0_1 = arith.constant 0 : index
    %c0_2 = arith.constant 0 : index
    %1 = vector.load %arg3[%c0_1, %c0_2] : memref<384x128xf32, #tpu.memory_space<vmem>>, vector<384x128xf32>
    %cst = arith.constant dense<0.000000e+00> : vector<16x384xf32>
    %2 = tpu.matmul %0, %1, %cst {dimension_numbers = #tpu.dot_dimension_numbers<[1], [1], [0], [0], [0, 0, 1, 0], [], []>} : vector<16x128xf32>, vector<384x128xf32>, vector<16x384xf32> -> vector<16x384xf32>
    %c0_3 = arith.constant 0 : index
    %c0_4 = arith.constant 0 : index
    %3 = vector.load %arg4[%c0_3, %c0_4] : memref<1x384xf32, #tpu.memory_space<vmem>>, vector<1x384xf32>
    %4 = vector.broadcast %3 : vector<1x384xf32> to vector<16x384xf32>
    %5 = arith.addf %2, %4 : vector<16x384xf32>
    %c0_5 = arith.constant 0 : index
    %c0_6 = arith.constant 0 : index
    %6 = vector.load %arg5[%c0_5, %c0_6] : memref<16x384xf32, #tpu.memory_space<vmem>>, vector<16x384xf32>
    tpu.vector_store %arg5[%c0_5, %c0_6], %5 {strides = array<i32>} : memref<16x384xf32, #tpu.memory_space<vmem>>, vector<16x384xf32>,
    return
  }
  func.func @transform_0(%arg0: i32, %arg1: i32) -> (i32, i32) {
    %c0_i32 = arith.constant 0 : i32
    %c0_i32_0 = arith.constant 0 : i32
    return %arg1, %c0_i32 : i32, i32
  }
  func.func @transform_1(%arg0: i32, %arg1: i32) -> (i32, i32) {
    %c0_i32 = arith.constant 0 : i32
    %c0_i32_0 = arith.constant 0 : i32
    return %arg0, %c0_i32 : i32, i32
  }
  func.func @transform_2(%arg0: i32, %arg1: i32) -> (i32, i32) {
    %c0_i32 = arith.constant 0 : i32
    %c0_i32_0 = arith.constant 0 : i32
    return %c0_i32, %arg0 : i32, i32
  }
  func.func @transform_3(%arg0: i32, %arg1: i32) -> (i32, i32) {
    %c0_i32 = arith.constant 0 : i32
    return %arg1, %arg0 : i32, i32
  }
}

module attributes {stable_mosaic.version = 11 : i64} {
  func.func @_ffn_add_ln_full_kernel(%arg0: i32, %arg1: memref<16x128xf32, #tpu.memory_space<vmem>>, %arg2: memref<256x128xf32, #tpu.memory_space<vmem>>, %arg3: memref<1x256xf32, #tpu.memory_space<vmem>>, %arg4: memref<128x256xf32, #tpu.memory_space<vmem>>, %arg5: memref<1x128xf32, #tpu.memory_space<vmem>>, %arg6: memref<16x128xf32, #tpu.memory_space<vmem>>, %arg7: memref<1x128xf32, #tpu.memory_space<vmem>>, %arg8: memref<1x128xf32, #tpu.memory_space<vmem>>, %arg9: memref<16x128xf32, #tpu.memory_space<vmem>>) attributes {dimension_semantics = [#tpu.dimension_semantics<parallel>], iteration_bounds = array<i64: 1>, scalar_prefetch = 0 : i64, scratch_operands = 0 : i64, tpu.core_type = #tpu.core_type<tc>, window_params = [{transform_indices = @transform_0, window_bounds = array<i64: 16, 128>}, {pipeline_mode = #tpu.pipeline_mode<synchronous>, transform_indices = @transform_1, window_bounds = array<i64: 256, 128>}, {pipeline_mode = #tpu.pipeline_mode<synchronous>, transform_indices = @transform_2, window_bounds = array<i64: 1, 256>}, {pipeline_mode = #tpu.pipeline_mode<synchronous>, transform_indices = @transform_3, window_bounds = array<i64: 128, 256>}, {pipeline_mode = #tpu.pipeline_mode<synchronous>, transform_indices = @transform_4, window_bounds = array<i64: 1, 128>}, {transform_indices = @transform_5, window_bounds = array<i64: 16, 128>}, {pipeline_mode = #tpu.pipeline_mode<synchronous>, transform_indices = @transform_6, window_bounds = array<i64: 1, 128>}, {pipeline_mode = #tpu.pipeline_mode<synchronous>, transform_indices = @transform_7, window_bounds = array<i64: 1, 128>}, {transform_indices = @transform_8, window_bounds = array<i64: 16, 128>}]} {
    %c0 = arith.constant 0 : index
    %c0_0 = arith.constant 0 : index
    %0 = vector.load %arg1[%c0, %c0_0] : memref<16x128xf32, #tpu.memory_space<vmem>>, vector<16x128xf32>
    %c0_1 = arith.constant 0 : index
    %c0_2 = arith.constant 0 : index
    %1 = vector.load %arg2[%c0_1, %c0_2] : memref<256x128xf32, #tpu.memory_space<vmem>>, vector<256x128xf32>
    %cst = arith.constant dense<0.000000e+00> : vector<16x256xf32>
    %2 = tpu.matmul %0, %1, %cst {dimension_numbers = #tpu.dot_dimension_numbers<[1], [1], [0], [0], [0, 0, 1, 0], [], []>} : vector<16x128xf32>, vector<256x128xf32>, vector<16x256xf32> -> vector<16x256xf32>
    %c0_3 = arith.constant 0 : index
    %c0_4 = arith.constant 0 : index
    %3 = vector.load %arg3[%c0_3, %c0_4] : memref<1x256xf32, #tpu.memory_space<vmem>>, vector<1x256xf32>
    %4 = vector.broadcast %3 : vector<1x256xf32> to vector<16x256xf32>
    %5 = arith.addf %2, %4 : vector<16x256xf32>
    %cst_5 = arith.constant 0.000000e+00 : f32
    %6 = vector.broadcast %cst_5 : f32 to vector<16x256xf32>
    %7 = arith.maximumf %5, %6 : vector<16x256xf32>
    %c0_6 = arith.constant 0 : index
    %c0_7 = arith.constant 0 : index
    %8 = vector.load %arg4[%c0_6, %c0_7] : memref<128x256xf32, #tpu.memory_space<vmem>>, vector<128x256xf32>
    %cst_8 = arith.constant dense<0.000000e+00> : vector<16x128xf32>
    %9 = tpu.matmul %7, %8, %cst_8 {dimension_numbers = #tpu.dot_dimension_numbers<[1], [1], [0], [0], [0, 0, 1, 0], [], []>} : vector<16x256xf32>, vector<128x256xf32>, vector<16x128xf32> -> vector<16x128xf32>
    %c0_9 = arith.constant 0 : index
    %c0_10 = arith.constant 0 : index
    %10 = vector.load %arg5[%c0_9, %c0_10] : memref<1x128xf32, #tpu.memory_space<vmem>>, vector<1x128xf32>
    %11 = vector.broadcast %10 : vector<1x128xf32> to vector<16x128xf32>
    %12 = arith.addf %9, %11 : vector<16x128xf32>
    %c0_11 = arith.constant 0 : index
    %c0_12 = arith.constant 0 : index
    %13 = vector.load %arg6[%c0_11, %c0_12] : memref<16x128xf32, #tpu.memory_space<vmem>>, vector<16x128xf32>
    %14 = arith.addf %12, %13 : vector<16x128xf32>
    %c0_13 = arith.constant 0 : index
    %c0_14 = arith.constant 0 : index
    %15 = vector.load %arg7[%c0_13, %c0_14] : memref<1x128xf32, #tpu.memory_space<vmem>>, vector<1x128xf32>
    %c0_15 = arith.constant 0 : index
    %c0_16 = arith.constant 0 : index
    %16 = vector.load %arg8[%c0_15, %c0_16] : memref<1x128xf32, #tpu.memory_space<vmem>>, vector<1x128xf32>
    %cst_17 = arith.constant dense<0.000000e+00> : vector<16xf32>
    %17 = vector.multi_reduction <add>, %14, %cst_17 [1] : vector<16x128xf32> to vector<16xf32>
    %18 = vector.shape_cast %17 : vector<16xf32> to vector<16x1xf32>
    %cst_18 = arith.constant 1.280000e+02 : f32
    %19 = vector.broadcast %cst_18 : f32 to vector<16x1xf32>
    %20 = arith.divf %18, %19 : vector<16x1xf32>
    %21 = vector.broadcast %20 : vector<16x1xf32> to vector<16x128xf32>
    %22 = arith.subf %14, %21 : vector<16x128xf32>
    %23 = arith.mulf %22, %22 : vector<16x128xf32>
    %cst_19 = arith.constant dense<0.000000e+00> : vector<16xf32>
    %24 = vector.multi_reduction <add>, %23, %cst_19 [1] : vector<16x128xf32> to vector<16xf32>
    %25 = vector.shape_cast %24 : vector<16xf32> to vector<16x1xf32>
    %cst_20 = arith.constant 1.280000e+02 : f32
    %26 = vector.broadcast %cst_20 : f32 to vector<16x1xf32>
    %27 = arith.divf %25, %26 : vector<16x1xf32>
    %cst_21 = arith.constant 9.99999974E-6 : f32
    %28 = vector.broadcast %cst_21 : f32 to vector<16x1xf32>
    %29 = arith.addf %27, %28 : vector<16x1xf32>
    %30 = math.rsqrt %29 : vector<16x1xf32>
    %31 = vector.broadcast %30 : vector<16x1xf32> to vector<16x128xf32>
    %32 = arith.mulf %22, %31 : vector<16x128xf32>
    %33 = vector.broadcast %15 : vector<1x128xf32> to vector<16x128xf32>
    %34 = arith.mulf %32, %33 : vector<16x128xf32>
    %35 = vector.broadcast %16 : vector<1x128xf32> to vector<16x128xf32>
    %36 = arith.addf %34, %35 : vector<16x128xf32>
    %c0_22 = arith.constant 0 : index
    %c0_23 = arith.constant 0 : index
    %37 = vector.load %arg9[%c0_22, %c0_23] : memref<16x128xf32, #tpu.memory_space<vmem>>, vector<16x128xf32>
    tpu.vector_store %arg9[%c0_22, %c0_23], %36 {strides = array<i32>} : memref<16x128xf32, #tpu.memory_space<vmem>>, vector<16x128xf32>,
    return
  }
  func.func @transform_0(%arg0: i32) -> (i32, i32) {
    %c0_i32 = arith.constant 0 : i32
    %c0_i32_0 = arith.constant 0 : i32
    return %arg0, %c0_i32 : i32, i32
  }
  func.func @transform_1(%arg0: i32) -> (i32, i32) {
    %c0_i32 = arith.constant 0 : i32
    %c0_i32_0 = arith.constant 0 : i32
    %c0_i32_1 = arith.constant 0 : i32
    return %c0_i32, %c0_i32_0 : i32, i32
  }
  func.func @transform_2(%arg0: i32) -> (i32, i32) {
    %c0_i32 = arith.constant 0 : i32
    %c0_i32_0 = arith.constant 0 : i32
    %c0_i32_1 = arith.constant 0 : i32
    return %c0_i32, %c0_i32_0 : i32, i32
  }
  func.func @transform_3(%arg0: i32) -> (i32, i32) {
    %c0_i32 = arith.constant 0 : i32
    %c0_i32_0 = arith.constant 0 : i32
    %c0_i32_1 = arith.constant 0 : i32
    return %c0_i32, %c0_i32_0 : i32, i32
  }
  func.func @transform_4(%arg0: i32) -> (i32, i32) {
    %c0_i32 = arith.constant 0 : i32
    %c0_i32_0 = arith.constant 0 : i32
    %c0_i32_1 = arith.constant 0 : i32
    return %c0_i32, %c0_i32_0 : i32, i32
  }
  func.func @transform_5(%arg0: i32) -> (i32, i32) {
    %c0_i32 = arith.constant 0 : i32
    %c0_i32_0 = arith.constant 0 : i32
    return %arg0, %c0_i32 : i32, i32
  }
  func.func @transform_6(%arg0: i32) -> (i32, i32) {
    %c0_i32 = arith.constant 0 : i32
    %c0_i32_0 = arith.constant 0 : i32
    %c0_i32_1 = arith.constant 0 : i32
    return %c0_i32, %c0_i32_0 : i32, i32
  }
  func.func @transform_7(%arg0: i32) -> (i32, i32) {
    %c0_i32 = arith.constant 0 : i32
    %c0_i32_0 = arith.constant 0 : i32
    %c0_i32_1 = arith.constant 0 : i32
    return %c0_i32, %c0_i32_0 : i32, i32
  }
  func.func @transform_8(%arg0: i32) -> (i32, i32) {
    %c0_i32 = arith.constant 0 : i32
    %c0_i32_0 = arith.constant 0 : i32
    return %arg0, %c0_i32 : i32, i32
  }
}

module attributes {stable_mosaic.version = 11 : i64} {
  func.func @_linear_kernel(%arg0: i32, %arg1: i32, %arg2: memref<16x128xf32, #tpu.memory_space<vmem>>, %arg3: memref<256x128xf32, #tpu.memory_space<vmem>>, %arg4: memref<1x256xf32, #tpu.memory_space<vmem>>, %arg5: memref<16x256xf32, #tpu.memory_space<vmem>>) attributes {dimension_semantics = [#tpu.dimension_semantics<parallel>, #tpu.dimension_semantics<parallel>], iteration_bounds = array<i64: 1, 1>, scalar_prefetch = 0 : i64, scratch_operands = 0 : i64, tpu.core_type = #tpu.core_type<tc>, window_params = [{transform_indices = @transform_0, window_bounds = array<i64: 16, 128>}, {transform_indices = @transform_1, window_bounds = array<i64: 256, 128>}, {transform_indices = @transform_2, window_bounds = array<i64: 1, 256>}, {transform_indices = @transform_3, window_bounds = array<i64: 16, 256>}]} {
    %c0 = arith.constant 0 : index
    %c0_0 = arith.constant 0 : index
    %0 = vector.load %arg2[%c0, %c0_0] : memref<16x128xf32, #tpu.memory_space<vmem>>, vector<16x128xf32>
    %c0_1 = arith.constant 0 : index
    %c0_2 = arith.constant 0 : index
    %1 = vector.load %arg3[%c0_1, %c0_2] : memref<256x128xf32, #tpu.memory_space<vmem>>, vector<256x128xf32>
    %cst = arith.constant dense<0.000000e+00> : vector<16x256xf32>
    %2 = tpu.matmul %0, %1, %cst {dimension_numbers = #tpu.dot_dimension_numbers<[1], [1], [0], [0], [0, 0, 1, 0], [], []>} : vector<16x128xf32>, vector<256x128xf32>, vector<16x256xf32> -> vector<16x256xf32>
    %c0_3 = arith.constant 0 : index
    %c0_4 = arith.constant 0 : index
    %3 = vector.load %arg4[%c0_3, %c0_4] : memref<1x256xf32, #tpu.memory_space<vmem>>, vector<1x256xf32>
    %4 = vector.broadcast %3 : vector<1x256xf32> to vector<16x256xf32>
    %5 = arith.addf %2, %4 : vector<16x256xf32>
    %c0_5 = arith.constant 0 : index
    %c0_6 = arith.constant 0 : index
    %6 = vector.load %arg5[%c0_5, %c0_6] : memref<16x256xf32, #tpu.memory_space<vmem>>, vector<16x256xf32>
    tpu.vector_store %arg5[%c0_5, %c0_6], %5 {strides = array<i32>} : memref<16x256xf32, #tpu.memory_space<vmem>>, vector<16x256xf32>,
    return
  }
  func.func @transform_0(%arg0: i32, %arg1: i32) -> (i32, i32) {
    %c0_i32 = arith.constant 0 : i32
    %c0_i32_0 = arith.constant 0 : i32
    return %arg1, %c0_i32 : i32, i32
  }
  func.func @transform_1(%arg0: i32, %arg1: i32) -> (i32, i32) {
    %c0_i32 = arith.constant 0 : i32
    %c0_i32_0 = arith.constant 0 : i32
    return %arg0, %c0_i32 : i32, i32
  }
  func.func @transform_2(%arg0: i32, %arg1: i32) -> (i32, i32) {
    %c0_i32 = arith.constant 0 : i32
    %c0_i32_0 = arith.constant 0 : i32
    return %c0_i32, %arg0 : i32, i32
  }
  func.func @transform_3(%arg0: i32, %arg1: i32) -> (i32, i32) {
    %c0_i32 = arith.constant 0 : i32
    return %arg1, %arg0 : i32, i32
  }
}

module attributes {stable_mosaic.version = 11 : i64} {
  func.func @_linear_kernel(%arg0: i32, %arg1: i32, %arg2: memref<16x128xf32, #tpu.memory_space<vmem>>, %arg3: memref<256x128xf32, #tpu.memory_space<vmem>>, %arg4: memref<1x256xf32, #tpu.memory_space<vmem>>, %arg5: memref<16x256xf32, #tpu.memory_space<vmem>>) attributes {dimension_semantics = [#tpu.dimension_semantics<parallel>, #tpu.dimension_semantics<parallel>], iteration_bounds = array<i64: 1, 1>, scalar_prefetch = 0 : i64, scratch_operands = 0 : i64, tpu.core_type = #tpu.core_type<tc>, window_params = [{transform_indices = @transform_0, window_bounds = array<i64: 16, 128>}, {transform_indices = @transform_1, window_bounds = array<i64: 256, 128>}, {transform_indices = @transform_2, window_bounds = array<i64: 1, 256>}, {transform_indices = @transform_3, window_bounds = array<i64: 16, 256>}]} {
    %c0 = arith.constant 0 : index
    %c0_0 = arith.constant 0 : index
    %0 = vector.load %arg2[%c0, %c0_0] : memref<16x128xf32, #tpu.memory_space<vmem>>, vector<16x128xf32>
    %c0_1 = arith.constant 0 : index
    %c0_2 = arith.constant 0 : index
    %1 = vector.load %arg3[%c0_1, %c0_2] : memref<256x128xf32, #tpu.memory_space<vmem>>, vector<256x128xf32>
    %cst = arith.constant dense<0.000000e+00> : vector<16x256xf32>
    %2 = tpu.matmul %0, %1, %cst {dimension_numbers = #tpu.dot_dimension_numbers<[1], [1], [0], [0], [0, 0, 1, 0], [], []>} : vector<16x128xf32>, vector<256x128xf32>, vector<16x256xf32> -> vector<16x256xf32>
    %c0_3 = arith.constant 0 : index
    %c0_4 = arith.constant 0 : index
    %3 = vector.load %arg4[%c0_3, %c0_4] : memref<1x256xf32, #tpu.memory_space<vmem>>, vector<1x256xf32>
    %4 = vector.broadcast %3 : vector<1x256xf32> to vector<16x256xf32>
    %5 = arith.addf %2, %4 : vector<16x256xf32>
    %c0_5 = arith.constant 0 : index
    %c0_6 = arith.constant 0 : index
    %6 = vector.load %arg5[%c0_5, %c0_6] : memref<16x256xf32, #tpu.memory_space<vmem>>, vector<16x256xf32>
    tpu.vector_store %arg5[%c0_5, %c0_6], %5 {strides = array<i32>} : memref<16x256xf32, #tpu.memory_space<vmem>>, vector<16x256xf32>,
    return
  }
  func.func @transform_0(%arg0: i32, %arg1: i32) -> (i32, i32) {
    %c0_i32 = arith.constant 0 : i32
    %c0_i32_0 = arith.constant 0 : i32
    return %arg1, %c0_i32 : i32, i32
  }
  func.func @transform_1(%arg0: i32, %arg1: i32) -> (i32, i32) {
    %c0_i32 = arith.constant 0 : i32
    %c0_i32_0 = arith.constant 0 : i32
    return %arg0, %c0_i32 : i32, i32
  }
  func.func @transform_2(%arg0: i32, %arg1: i32) -> (i32, i32) {
    %c0_i32 = arith.constant 0 : i32
    %c0_i32_0 = arith.constant 0 : i32
    return %c0_i32, %arg0 : i32, i32
  }
  func.func @transform_3(%arg0: i32, %arg1: i32) -> (i32, i32) {
    %c0_i32 = arith.constant 0 : i32
    return %arg1, %arg0 : i32, i32
  }
}

</mosaic_0001>

<llo_original>
// kernel: bart_forward.33
$region0: #{bart_forward.33}
  #allocation0 [shape = 'u32[]', space=smem, size = 0x4, offset = 0x4, fixed_abs, tag = 'smem constant byte address 0x4 - core index']
  #allocation1 [shape = 'u32[72,128]{1,0:T(1,128)}', space=vmem, size = 0x9000, scoped, tag = 'internal scratch']
  %s0 = inlined_call_operand.vmem [shape: f32[16,128], index: 0, kind: input, shape index: {}]
  %s1 = inlined_call_operand.hbm [shape: f32[384,128], index: 1, kind: input, shape index: {}]
  %s2 = inlined_call_operand.vmem [shape: f32[1,384], index: 2, kind: input, shape index: {}]
  %s3 = inlined_call_operand.vmem [shape: f32[16,384], index: 3, kind: output, shape index: {}]
  %s4 = sld [smem:[#allocation0]]
  $region26: #{bart_forward.33} parent=0
    _
  %s6 = ssub.s32 1, %s4
  %s7 = scalar_select 0, %s6, %s4
  $region1: #{bart_forward.33} parent=0
    #allocation2 [shape = 'u8[196608]{0}', space=vmem, size = 0x30000, scoped, tag = 'input window, operand 1, single buffered']
    #allocation3 [shape = 's32[1]{0}', space=sflag, size = 0x4, scoped, tag = 'scoped memory for bart_forward.33']
    %8 = vsyncpa [#allocation3], 0
    // Predicated region
    $region2: #{bart_forward.33} parent=1 // pred_check
      _
    $region3: #{bart_forward.33} parent=1 // pred_check_branch
      %10 = sbr.rel (0) target = $region5
    $region4: #{bart_forward.33} parent=1 // pred_region
      _
    $region5: #{bart_forward.33} parent=1 // pred_fallthru
      _
    // Predicated region
    $region6: #{bart_forward.33} parent=1 // pred_check
      _
    $region7: #{bart_forward.33} parent=1 // pred_check_branch
      %12 = sbr.rel (0) target = $region9
    $region8: #{bart_forward.33} parent=1 // pred_region
      %14 = vsyncadd [#allocation3], 0
      %s15 = sshll.u32 %s1, 4
      %s16 = int_to_ptr.hbm [resolvable:$true] %s15
      %s17 = sshll.u32 [#allocation2], 4
      %s18 = int_to_ptr.vmem [resolvable:$true] %s17
      %23 = dma.hbm_to_vmem [thread:$0]  %s16, 6144, %s18, [#allocation3], 128, 128, 8
    $region9: #{bart_forward.33} parent=1 // pred_fallthru
      _
    // Predicated region
    $region10: #{bart_forward.33} parent=1 // pred_check
      _
    $region11: #{bart_forward.33} parent=1 // pred_check_branch
      %25 = sbr.rel (0) target = $region13
    $region12: #{bart_forward.33} parent=1 // pred_region
      _
    $region13: #{bart_forward.33} parent=1 // pred_fallthru
      _
    // Predicated region
    $region14: #{bart_forward.33} parent=1 // pred_check
      _
    $region15: #{bart_forward.33} parent=1 // pred_check_branch
      %27 = sbr.rel (0) target = $region17
    $region16: #{bart_forward.33} parent=1 // pred_region
      %29 = dma.done [#allocation3], 6144
    $region17: #{bart_forward.33} parent=1 // pred_fallthru
      _
    %v30 = vld [vmem:[%s0] sm:$0xff]
    %v31 = vld [vmem:[%s0 + $0x8] sm:$0xff]
    %v32 = vld [vmem:[#allocation2] sm:$0xff]
    %v33 = vld [vmem:[#allocation2 + $0x8] sm:$0xff]
    %v34 = vld [vmem:[#allocation2 + $0x10] sm:$0xff]
    %v35 = vld [vmem:[#allocation2 + $0x18] sm:$0xff]
    %v36 = vld [vmem:[#allocation2 + $0x20] sm:$0xff]
    %v37 = vld [vmem:[#allocation2 + $0x28] sm:$0xff]
    %v38 = vld [vmem:[#allocation2 + $0x30] sm:$0xff]
    %v39 = vld [vmem:[#allocation2 + $0x38] sm:$0xff]
    %v40 = vld [vmem:[#allocation2 + $0x40] sm:$0xff]
    %v41 = vld [vmem:[#allocation2 + $0x48] sm:$0xff]
    %v42 = vld [vmem:[#allocation2 + $0x50] sm:$0xff]
    %v43 = vld [vmem:[#allocation2 + $0x58] sm:$0xff]
    %v44 = vld [vmem:[#allocation2 + $0x60] sm:$0xff]
    %v45 = vld [vmem:[#allocation2 + $0x68] sm:$0xff]
    %v46 = vld [vmem:[#allocation2 + $0x70] sm:$0xff]
    %v47 = vld [vmem:[#allocation2 + $0x78] sm:$0xff]
    %v48 = vld [vmem:[#allocation2 + $0x80] sm:$0xff]
    %v49 = vld [vmem:[#allocation2 + $0x88] sm:$0xff]
    %v50 = vld [vmem:[#allocation2 + $0x90] sm:$0xff]
    %v51 = vld [vmem:[#allocation2 + $0x98] sm:$0xff]
    %v52 = vld [vmem:[#allocation2 + $0xa0] sm:$0xff]
    %v53 = vld [vmem:[#allocation2 + $0xa8] sm:$0xff]
    %v54 = vld [vmem:[#allocation2 + $0xb0] sm:$0xff]
    %v55 = vld [vmem:[#allocation2 + $0xb8] sm:$0xff]
    %v56 = vld [vmem:[#allocation2 + $0xc0] sm:$0xff]
    %v57 = vld [vmem:[#allocation2 + $0xc8] sm:$0xff]
    %v58 = vld [vmem:[#allocation2 + $0xd0] sm:$0xff]
    %v59 = vld [vmem:[#allocation2 + $0xd8] sm:$0xff]
    %v60 = vld [vmem:[#allocation2 + $0xe0] sm:$0xff]
    %v61 = vld [vmem:[#allocation2 + $0xe8] sm:$0xff]
    %v62 = vld [vmem:[#allocation2 + $0xf0] sm:$0xff]
    %v63 = vld [vmem:[#allocation2 + $0xf8] sm:$0xff]
    %v64 = vld [vmem:[#allocation2 + $0x100] sm:$0xff]
    %v65 = vld [vmem:[#allocation2 + $0x108] sm:$0xff]
    %v66 = vld [vmem:[#allocation2 + $0x110] sm:$0xff]
    %v67 = vld [vmem:[#allocation2 + $0x118] sm:$0xff]
    %v68 = vld [vmem:[#allocation2 + $0x120] sm:$0xff]
    %v69 = vld [vmem:[#allocation2 + $0x128] sm:$0xff]
    %v70 = vld [vmem:[#allocation2 + $0x130] sm:$0xff]
    %v71 = vld [vmem:[#allocation2 + $0x138] sm:$0xff]
    %v72 = vld [vmem:[#allocation2 + $0x140] sm:$0xff]
    %v73 = vld [vmem:[#allocation2 + $0x148] sm:$0xff]
    %v74 = vld [vmem:[#allocation2 + $0x150] sm:$0xff]
    %v75 = vld [vmem:[#allocation2 + $0x158] sm:$0xff]
    %v76 = vld [vmem:[#allocation2 + $0x160] sm:$0xff]
    %v77 = vld [vmem:[#allocation2 + $0x168] sm:$0xff]
    %v78 = vld [vmem:[#allocation2 + $0x170] sm:$0xff]
    %v79 = vld [vmem:[#allocation2 + $0x178] sm:$0xff]
    %v80 = vld [vmem:[%s2] sm:$0x7]
    %v82 = vperm.slane %v80, 0
    %v83 = vperm.slane %v80, 1
    %v84 = vperm.slane %v80, 2
    %88 = vmatpush.xpose.msra.mxu0 %v47
    %89 = vmatpush.xpose.msra.mxu0 %v46
    %90 = vmatpush.xpose.msra.mxu0 %v45
    %91 = vmatpush.xpose.msra.mxu0 %v44
    %92 = vmatpush.xpose.msra.mxu0 %v43
    %93 = vmatpush.xpose.msra.mxu0 %v42
    %94 = vmatpush.xpose.msra.mxu0 %v41
    %95 = vmatpush.xpose.msra.mxu0 %v40
    %96 = vmatpush.xpose.msra.mxu0 %v39
    %97 = vmatpush.xpose.msra.mxu0 %v38
    %98 = vmatpush.xpose.msra.mxu0 %v37
    %99 = vmatpush.xpose.msra.mxu0 %v36
    %100 = vmatpush.xpose.msra.mxu0 %v35
    %101 = vmatpush.xpose.msra.mxu0 %v34
    %102 = vmatpush.xpose.msra.mxu0 %v33
    %103 = vmatpush.xpose.msra.mxu0 %v32
    %104 = vmatmul.f32.gmra.mxu0 %v30
    %v105 = vpop.f32.mrf.mxu0
    %v106 = vadd.f32 %v82, %v105
    %107 = vmatmul.f32.gmra.mxu0 %v31
    %v108 = vpop.f32.mrf.mxu0
    %v109 = vadd.f32 %v82, %v108
    %110 = vdwg.mxu0
    %111 = vmatpush.xpose.msra.mxu0 %v63
    %112 = vmatpush.xpose.msra.mxu0 %v62
    %113 = vmatpush.xpose.msra.mxu0 %v61
    %114 = vmatpush.xpose.msra.mxu0 %v60
    %115 = vmatpush.xpose.msra.mxu0 %v59
    %116 = vmatpush.xpose.msra.mxu0 %v58
    %117 = vmatpush.xpose.msra.mxu0 %v57
    %118 = vmatpush.xpose.msra.mxu0 %v56
    %119 = vmatpush.xpose.msra.mxu0 %v55
    %120 = vmatpush.xpose.msra.mxu0 %v54
    %121 = vmatpush.xpose.msra.mxu0 %v53
    %122 = vmatpush.xpose.msra.mxu0 %v52
    %123 = vmatpush.xpose.msra.mxu0 %v51
    %124 = vmatpush.xpose.msra.mxu0 %v50
    %125 = vmatpush.xpose.msra.mxu0 %v49
    %126 = vmatpush.xpose.msra.mxu0 %v48
    %127 = vmatmul.f32.gmra.mxu0 %v30
    %v128 = vpop.f32.mrf.mxu0
    %v129 = vadd.f32 %v83, %v128
    %130 = vmatmul.f32.gmra.mxu0 %v31
    %v131 = vpop.f32.mrf.mxu0
    %v132 = vadd.f32 %v83, %v131
    %133 = vdwg.mxu0
    %134 = vmatpush.xpose.msra.mxu0 %v79
    %135 = vmatpush.xpose.msra.mxu0 %v78
    %136 = vmatpush.xpose.msra.mxu0 %v77
    %137 = vmatpush.xpose.msra.mxu0 %v76
    %138 = vmatpush.xpose.msra.mxu0 %v75
    %139 = vmatpush.xpose.msra.mxu0 %v74
    %140 = vmatpush.xpose.msra.mxu0 %v73
    %141 = vmatpush.xpose.msra.mxu0 %v72
    %142 = vmatpush.xpose.msra.mxu0 %v71
    %143 = vmatpush.xpose.msra.mxu0 %v70
    %144 = vmatpush.xpose.msra.mxu0 %v69
    %145 = vmatpush.xpose.msra.mxu0 %v68
    %146 = vmatpush.xpose.msra.mxu0 %v67
    %147 = vmatpush.xpose.msra.mxu0 %v66
    %148 = vmatpush.xpose.msra.mxu0 %v65
    %149 = vmatpush.xpose.msra.mxu0 %v64
    %150 = vmatmul.f32.gmra.mxu0 %v30
    %v151 = vpop.f32.mrf.mxu0
    %v152 = vadd.f32 %v84, %v151
    %153 = vmatmul.f32.gmra.mxu0 %v31
    %v154 = vpop.f32.mrf.mxu0
    %v155 = vadd.f32 %v84, %v154
    %156 = vdwg.mxu0
    %157 = vst [vmem:[%s3] sm:$0xff] %v106
    %158 = vst [vmem:[%s3 + $0x8] sm:$0xff] %v129
    %159 = vst [vmem:[%s3 + $0x10] sm:$0xff] %v152
    %160 = vst [vmem:[%s3 + $0x18] sm:$0xff] %v109
    %161 = vst [vmem:[%s3 + $0x20] sm:$0xff] %v132
    %162 = vst [vmem:[%s3 + $0x28] sm:$0xff] %v155
    // Predicated region
    $region18: #{bart_forward.33} parent=1 // pred_check
      _
    $region19: #{bart_forward.33} parent=1 // pred_check_branch
      %164 = sbr.rel (0) target = $region21
    $region20: #{bart_forward.33} parent=1 // pred_region
      _
    $region21: #{bart_forward.33} parent=1 // pred_fallthru
      _
    // Predicated region
    $region22: #{bart_forward.33} parent=1 // pred_check
      _
    $region23: #{bart_forward.33} parent=1 // pred_check_branch
      %166 = sbr.rel (0) target = $region25
    $region24: #{bart_forward.33} parent=1 // pred_region
      _
    $region25: #{bart_forward.33} parent=1 // pred_fallthru
      _
    %167 = vsyncpa [#allocation3], 1

// kernel: bart_forward.34
$region0: #{bart_forward.34}
  #allocation0 [shape = 'u32[]', space=smem, size = 0x4, offset = 0x4, fixed_abs, tag = 'smem constant byte address 0x4 - core index']
  #allocation1 [shape = 'u32[72,128]{1,0:T(1,128)}', space=vmem, size = 0x9000, scoped, tag = 'internal scratch']
  #allocation2 [shape = 'f32[8,2,1]{2,1,0:T(2,128)}', space=vmem, size = 0x2000, scoped, tag = 'scratch operand']
  #allocation3 [shape = 'f32[8,2,1]{2,1,0:T(2,128)}', space=vmem, size = 0x2000, scoped, tag = 'scratch operand']
  #allocation4 [shape = 'f32[8,2,32]{2,1,0:T(2,128)}', space=vmem, size = 0x2000, scoped, tag = 'scratch operand']
  %s0 = inlined_call_operand.vmem [shape: f32[32,2,32], index: 0, kind: input, shape index: {}]
  %s1 = inlined_call_operand.vmem [shape: f32[32,2,32], index: 1, kind: input, shape index: {}]
  %s2 = inlined_call_operand.vmem [shape: f32[32,2,32], index: 2, kind: input, shape index: {}]
  %s3 = inlined_call_operand.vmem [shape: f32[32,2,32], index: 3, kind: output, shape index: {}]
  %s4 = sld [smem:[#allocation0]]
  $region53: #{bart_forward.34} parent=0
    _
  %s6 = ssub.s32 1, %s4
  %s7 = scalar_select 0, %s6, %s4
  loop: start=0, step=1, limit=6
  $region2: #{bart_forward.34} parent=0 // loop_pre_header
    _
  $region3: #{bart_forward.34} parent=0 // loop_header
    %s9 = sphi 0, %s13
    %p10 = scmp.ge.s32.totalorder %s9, 6
    %s16 = sphi 0, %s28
    %s17 = sphi 0, %s24
    %s18 = sphi 0, %s16
    %s19 = sphi 0, %s17
    %s20 = sphi 0, %s18
    %s21 = sphi 0, %s19
    %s31 = sphi 0, %s33
    %s34 = sphi 0, %s31
    %s35 = sphi 0, %s34
    %s51 = sphi 0, %s35
    %s59 = sphi 0, %s61
    %s62 = sphi 0, %s59
    %s63 = sphi 0, %s62
    %s79 = sphi 0, %s63
    %s87 = sphi 0, %s89
    %s90 = sphi 0, %s87
    %s91 = sphi 0, %s90
    %s107 = sphi 0, %s91
    %s113 = sphi 0, %s115
    %s116 = sphi 0, %s113
    %s117 = sphi 0, %s116
    %s133 = sphi 0, %s117
  $region4: #{bart_forward.34} parent=0 // loop_header_branch
    %12 = sbr.rel (%p10) target = $region8
  $region5: #{bart_forward.34} parent=0 // loop_body
    %s14 = ssub.s32 %s9, 1
    %s15 = ssub.s32 %s9, 2
    %s22 = sadd.s32 1, %s17
    %p23 = scmp.ge.s32.totalorder %s22, 1
    %s24 = scalar_select %p23, 0, %s22
    %s25 = sadd.s32 1, %s16
    %s26 = scalar_select %p23, %s25, %s16
    %p27 = scmp.ge.s32.totalorder %s26, 4
    %s28 = scalar_select %p27, 0, %s26
    %s29 = ssub.s32 %s16, %s28
    %p30 = scmp.eq.s32.totalorder %s29, 0
    %s32 = sadd.s32 %s31, 1
    %s33 = scalar_select %p30, %s31, %s32
    %p36 = pneg %p30
    %p37 = scmp.eq.s32.totalorder %s9, 3
    %p38 = por %p36, %p37
    %p39 = scmp.ne.s32.totalorder %s31, %s34
    %p40 = scmp.eq.s32.totalorder %s9, 0
    %p41 = por %p39, %p40
    %p42 = scmp.ne.s32.totalorder %s31, %s34
    %p43 = scmp.eq.s32.totalorder %s14, 3
    %p44 = por %p42, %p43
    %p45 = scmp.ne.s32.totalorder %s34, %s35
    %p46 = scmp.eq.s32.totalorder %s14, 0
    %p47 = por %p45, %p46
    %p48 = scmp.ne.s32.totalorder %s34, %s35
    %p49 = scmp.eq.s32.totalorder %s15, 3
    %p50 = por %p48, %p49
    %p52 = scmp.ne.s32.totalorder %s35, %s51
    %p53 = scmp.eq.s32.totalorder %s15, 0
    %p54 = por %p52, %p53
    %s55 = ssub.s32 %s16, %s28
    %s56 = ssub.s32 %s17, %s24
    %s57 = sor.u32 %s55, %s56
    %p58 = scmp.eq.s32.totalorder %s57, 0
    %s60 = sadd.s32 %s59, 1
    %s61 = scalar_select %p58, %s59, %s60
    %p64 = pneg %p58
    %p65 = scmp.eq.s32.totalorder %s9, 3
    %p66 = por %p64, %p65
    %p67 = scmp.ne.s32.totalorder %s59, %s62
    %p68 = scmp.eq.s32.totalorder %s9, 0
    %p69 = por %p67, %p68
    %p70 = scmp.ne.s32.totalorder %s59, %s62
    %p71 = scmp.eq.s32.totalorder %s14, 3
    %p72 = por %p70, %p71
    %p73 = scmp.ne.s32.totalorder %s62, %s63
    %p74 = scmp.eq.s32.totalorder %s14, 0
    %p75 = por %p73, %p74
    %p76 = scmp.ne.s32.totalorder %s62, %s63
    %p77 = scmp.eq.s32.totalorder %s15, 3
    %p78 = por %p76, %p77
    %p80 = scmp.ne.s32.totalorder %s63, %s79
    %p81 = scmp.eq.s32.totalorder %s15, 0
    %p82 = por %p80, %p81
    %s83 = ssub.s32 %s16, %s28
    %s84 = ssub.s32 %s17, %s24
    %s85 = sor.u32 %s83, %s84
    %p86 = scmp.eq.s32.totalorder %s85, 0
    %s88 = sadd.s32 %s87, 1
    %s89 = scalar_select %p86, %s87, %s88
    %p92 = pneg %p86
    %p93 = scmp.eq.s32.totalorder %s9, 3
    %p94 = por %p92, %p93
    %p95 = scmp.ne.s32.totalorder %s87, %s90
    %p96 = scmp.eq.s32.totalorder %s9, 0
    %p97 = por %p95, %p96
    %p98 = scmp.ne.s32.totalorder %s87, %s90
    %p99 = scmp.eq.s32.totalorder %s14, 3
    %p100 = por %p98, %p99
    %p101 = scmp.ne.s32.totalorder %s90, %s91
    %p102 = scmp.eq.s32.totalorder %s14, 0
    %p103 = por %p101, %p102
    %p104 = scmp.ne.s32.totalorder %s90, %s91
    %p105 = scmp.eq.s32.totalorder %s15, 3
    %p106 = por %p104, %p105
    %p108 = scmp.ne.s32.totalorder %s91, %s107
    %p109 = scmp.eq.s32.totalorder %s15, 0
    %p110 = por %p108, %p109
    %s111 = ssub.s32 %s16, %s28
    %p112 = scmp.eq.s32.totalorder %s111, 0
    %s114 = sadd.s32 %s113, 1
    %s115 = scalar_select %p112, %s113, %s114
    %p118 = pneg %p112
    %p119 = scmp.eq.s32.totalorder %s9, 3
    %p120 = por %p118, %p119
    %p121 = scmp.ne.s32.totalorder %s113, %s116
    %p122 = scmp.eq.s32.totalorder %s9, 0
    %p123 = por %p121, %p122
    %p124 = scmp.ne.s32.totalorder %s113, %s116
    %p125 = scmp.eq.s32.totalorder %s14, 3
    %p126 = por %p124, %p125
    %p127 = scmp.ne.s32.totalorder %s116, %s117
    %p128 = scmp.eq.s32.totalorder %s14, 0
    %p129 = por %p127, %p128
    %p130 = scmp.ne.s32.totalorder %s116, %s117
    %p131 = scmp.eq.s32.totalorder %s15, 3
    %p132 = por %p130, %p131
    %p134 = scmp.ne.s32.totalorder %s117, %s133
    %p135 = scmp.eq.s32.totalorder %s15, 0
    %p136 = por %p134, %p135
    %p137 = scmp.le.s32.totalorder 1, %s9
    %p138 = scmp.lt.s32.totalorder %s9, 5
    %p139 = pnand %p137, %p138
    %p140 = pneg %p139
    // Predicated region
    $region9: #{bart_forward.34} parent=5 // pred_check
      _
    $region10: #{bart_forward.34} parent=5 // pred_check_branch
      %142 = sbr.rel (%p139) target = $region12
    $region11: #{bart_forward.34} parent=5 // pred_region
      %s143 = ssub.s32 %s9, 1
    $region12: #{bart_forward.34} parent=5 // pred_fallthru
      _
    %p144 = scmp.lt.s32.totalorder %s9, 4
    // Predicated region
    $region13: #{bart_forward.34} parent=5 // pred_check
      %p145 = pneg %p144
    $region14: #{bart_forward.34} parent=5 // pred_check_branch
      %147 = sbr.rel (%p145) target = $region16
    $region15: #{bart_forward.34} parent=5 // pred_region
      // Predicated region
      $region17: #{bart_forward.34} parent=15 // pred_check
        %p148 = pneg %p41
      $region18: #{bart_forward.34} parent=15 // pred_check_branch
        %150 = sbr.rel (%p148) target = $region20
      $region19: #{bart_forward.34} parent=15 // pred_region
        %s151 = smul.u32 8, %s16
        %p152 = scmp.lt.s32.totalorder %s151, 31
        %s153 = scalar_select %p152, %s151, 31
        %s154 = smul.addr %s153, 2
        %s155 = scalar_lea.vmem %s0, %s154
        %s156 = smul.u32 8, %s16
      $region20: #{bart_forward.34} parent=15 // pred_fallthru
        _
      // Predicated region
      $region21: #{bart_forward.34} parent=15 // pred_check
        %p157 = pneg %p69
      $region22: #{bart_forward.34} parent=15 // pred_check_branch
        %159 = sbr.rel (%p157) target = $region24
      $region23: #{bart_forward.34} parent=15 // pred_region
        %s160 = smul.u32 8, %s16
        %p161 = scmp.lt.s32.totalorder %s160, 31
        %s162 = scalar_select %p161, %s160, 31
        %p163 = scmp.lt.s32.totalorder %s17, 0
        %s164 = scalar_select %p163, %s17, 0
        %s165 = sadd.s32 %s164, %s162
        %s166 = smul.addr %s165, 2
        %s167 = scalar_lea.vmem %s1, %s166
        %s168 = smul.u32 8, %s16
      $region24: #{bart_forward.34} parent=15 // pred_fallthru
        _
      // Predicated region
      $region25: #{bart_forward.34} parent=15 // pred_check
        %p169 = pneg %p97
      $region26: #{bart_forward.34} parent=15 // pred_check_branch
        %171 = sbr.rel (%p169) target = $region28
      $region27: #{bart_forward.34} parent=15 // pred_region
        %s172 = smul.u32 8, %s16
        %p173 = scmp.lt.s32.totalorder %s172, 31
        %s174 = scalar_select %p173, %s172, 31
        %p175 = scmp.lt.s32.totalorder %s17, 0
        %s176 = scalar_select %p175, %s17, 0
        %s177 = sadd.s32 %s176, %s174
        %s178 = smul.addr %s177, 2
        %s179 = scalar_lea.vmem %s2, %s178
        %s180 = smul.u32 8, %s16
      $region28: #{bart_forward.34} parent=15 // pred_fallthru
        _
    $region16: #{bart_forward.34} parent=5 // pred_fallthru
      _
    %p181 = scmp.le.s32.totalorder 1, %s9
    %p182 = scmp.lt.s32.totalorder %s9, 5
    %p183 = pnand %p181, %p182
    %p184 = pneg %p183
    // Predicated region
    $region29: #{bart_forward.34} parent=5 // pred_check
      _
    $region30: #{bart_forward.34} parent=5 // pred_check_branch
      %186 = sbr.rel (%p183) target = $region32
    $region31: #{bart_forward.34} parent=5 // pred_region
      %s187 = ssub.s32 %s9, 1
      %s188 = smul.u32 8, %s18
      %p189 = scmp.lt.s32.totalorder %s188, 31
      %s190 = scalar_select %p189, %s188, 31
      %s191 = smul.addr %s190, 2
      %s192 = scalar_lea.vmem %s0, %s191
      %p193 = pneg %p47
      %p194 = pneg %p44
      %s195 = smul.u32 8, %s18
      %p196 = scmp.lt.s32.totalorder %s195, 31
      %s197 = scalar_select %p196, %s195, 31
      %p198 = scmp.lt.s32.totalorder %s19, 0
      %s199 = scalar_select %p198, %s19, 0
      %s200 = sadd.s32 %s199, %s197
      %s201 = smul.addr %s200, 2
      %s202 = scalar_lea.vmem %s1, %s201
      %p203 = pneg %p75
      %p204 = pneg %p72
      %s205 = smul.u32 8, %s18
      %p206 = scmp.lt.s32.totalorder %s205, 31
      %s207 = scalar_select %p206, %s205, 31
      %p208 = scmp.lt.s32.totalorder %s19, 0
      %s209 = scalar_select %p208, %s19, 0
      %s210 = sadd.s32 %s209, %s207
      %s211 = smul.addr %s210, 2
      %s212 = scalar_lea.vmem %s2, %s211
      %p213 = pneg %p103
      %p214 = pneg %p100
      %p215 = pneg %p129
      %p216 = pneg %p126
      %s217 = smul.u32 8, %s18
      %p218 = scmp.lt.s32.totalorder %s217, 31
      %s219 = scalar_select %p218, %s217, 31
      %s220 = smul.addr %s219, 2
      %s221 = scalar_lea.vmem %s3, %s220
      %s222 = smul.u32 8, %s18
      %p223 = scmp.lt.s32.totalorder %s222, 31
      %s224 = scalar_select %p223, %s222, 31
      %s225 = smul.addr %s224, 2
      %s226 = scalar_lea.vmem %s0, %s225
      %s227 = smul.u32 8, %s18
      %s228 = smul.u32 8, %s18
      %p229 = scmp.lt.s32.totalorder %s228, 31
      %s230 = scalar_select %p229, %s228, 31
      %p231 = scmp.lt.s32.totalorder %s19, 0
      %s232 = scalar_select %p231, %s19, 0
      %s233 = sadd.s32 %s232, %s230
      %s234 = smul.addr %s233, 2
      %s235 = scalar_lea.vmem %s1, %s234
      %s236 = smul.u32 8, %s18
      %s237 = smul.u32 8, %s18
      %p238 = scmp.lt.s32.totalorder %s237, 31
      %s239 = scalar_select %p238, %s237, 31
      %p240 = scmp.lt.s32.totalorder %s19, 0
      %s241 = scalar_select %p240, %s19, 0
      %s242 = sadd.s32 %s241, %s239
      %s243 = smul.addr %s242, 2
      %s244 = scalar_lea.vmem %s2, %s243
      %s245 = smul.u32 8, %s18
      %s246 = smul.u32 8, %s18
      %p247 = scmp.lt.s32.totalorder %s246, 31
      %s248 = scalar_select %p247, %s246, 31
      %s249 = smul.addr %s248, 2
      %s250 = scalar_lea.vmem %s3, %s249
      %s251 = smul.u32 8, %s18
      %p252 = scmp.eq.s32.totalorder %s19, 0
      // Predicated region
      $region33: #{bart_forward.34} parent=31 // pred_check
        %p253 = pneg %p252
      $region34: #{bart_forward.34} parent=31 // pred_check_branch
        %255 = sbr.rel (%p253) target = $region36
      $region35: #{bart_forward.34} parent=31 // pred_region
        %vm256 = vcmask 1024
        %257 = vst.msk [vmem:[#allocation2] sm:$0x3] %vm256, -inf
        %258 = vst.msk [vmem:[#allocation2 + $0x2] sm:$0x3] %vm256, -inf
        %259 = vst.msk [vmem:[#allocation2 + $0x4] sm:$0x3] %vm256, -inf
        %260 = vst.msk [vmem:[#allocation2 + $0x6] sm:$0x3] %vm256, -inf
        %261 = vst.msk [vmem:[#allocation2 + $0x8] sm:$0x3] %vm256, -inf
        %262 = vst.msk [vmem:[#allocation2 + $0xa] sm:$0x3] %vm256, -inf
        %263 = vst.msk [vmem:[#allocation2 + $0xc] sm:$0x3] %vm256, -inf
        %264 = vst.msk [vmem:[#allocation2 + $0xe] sm:$0x3] %vm256, -inf
        %265 = vst.msk [vmem:[#allocation3] sm:$0x3] %vm256, 0.0
        %266 = vst.msk [vmem:[#allocation3 + $0x2] sm:$0x3] %vm256, 0.0
        %267 = vst.msk [vmem:[#allocation3 + $0x4] sm:$0x3] %vm256, 0.0
        %268 = vst.msk [vmem:[#allocation3 + $0x6] sm:$0x3] %vm256, 0.0
        %269 = vst.msk [vmem:[#allocation3 + $0x8] sm:$0x3] %vm256, 0.0
        %270 = vst.msk [vmem:[#allocation3 + $0xa] sm:$0x3] %vm256, 0.0
        %271 = vst.msk [vmem:[#allocation3 + $0xc] sm:$0x3] %vm256, 0.0
        %272 = vst.msk [vmem:[#allocation3 + $0xe] sm:$0x3] %vm256, 0.0
        %vm273 = vcmask 254976
        %274 = vst.msk [vmem:[#allocation4] sm:$0x3] %vm273, 0.0
        %275 = vst.msk [vmem:[#allocation4 + $0x2] sm:$0x3] %vm273, 0.0
        %276 = vst.msk [vmem:[#allocation4 + $0x4] sm:$0x3] %vm273, 0.0
        %277 = vst.msk [vmem:[#allocation4 + $0x6] sm:$0x3] %vm273, 0.0
        %278 = vst.msk [vmem:[#allocation4 + $0x8] sm:$0x3] %vm273, 0.0
        %279 = vst.msk [vmem:[#allocation4 + $0xa] sm:$0x3] %vm273, 0.0
        %280 = vst.msk [vmem:[#allocation4 + $0xc] sm:$0x3] %vm273, 0.0
        %281 = vst.msk [vmem:[#allocation4 + $0xe] sm:$0x3] %vm273, 0.0
      $region36: #{bart_forward.34} parent=31 // pred_fallthru
        _
      %v282 = vld [vmem:[%s226] sm:$0x3]
      %v283 = vld [vmem:[%s226 + $0x2] sm:$0x3]
      %v284 = vld [vmem:[%s226 + $0x4] sm:$0x3]
      %v285 = vld [vmem:[%s226 + $0x6] sm:$0x3]
      %v286 = vld [vmem:[%s226 + $0x8] sm:$0x3]
      %v287 = vld [vmem:[%s226 + $0xa] sm:$0x3]
      %v288 = vld [vmem:[%s226 + $0xc] sm:$0x3]
      %v289 = vld [vmem:[%s226 + $0xe] sm:$0x3]
      %v290 = vmul.f32 %v282, 0.17677669
      %v291 = vmul.f32 %v283, 0.17677669
      %v292 = vmul.f32 %v284, 0.17677669
      %v293 = vmul.f32 %v285, 0.17677669
      %v294 = vmul.f32 %v286, 0.17677669
      %v295 = vmul.f32 %v287, 0.17677669
      %v296 = vmul.f32 %v288, 0.17677669
      %v297 = vmul.f32 %v289, 0.17677669
      %v298 = vld [vmem:[%s235] sm:$0x3]
      %v299 = vld [vmem:[%s235 + $0x2] sm:$0x3]
      %v300 = vld [vmem:[%s235 + $0x4] sm:$0x3]
      %v301 = vld [vmem:[%s235 + $0x6] sm:$0x3]
      %v302 = vld [vmem:[%s235 + $0x8] sm:$0x3]
      %v303 = vld [vmem:[%s235 + $0xa] sm:$0x3]
      %v304 = vld [vmem:[%s235 + $0xc] sm:$0x3]
      %v305 = vld [vmem:[%s235 + $0xe] sm:$0x3]
      %vm306 = vcmask 261120
      %v308 = vsel %vm306, %v290, 0
      %v311 = vsel %vm306, %v298, 0
      %313 = vmatpush.xpose.msra.mxu0 0.0
      %314 = vmatpush.xpose.msra.mxu0 0.0
      %315 = vmatpush.xpose.msra.mxu0 0.0
      %316 = vmatpush.xpose.msra.mxu0 0.0
      %317 = vmatpush.xpose.msra.mxu0 0.0
      %318 = vmatpush.xpose.msra.mxu0 0.0
      %319 = vmatpush.xpose.msra.mxu0 0.0
      %320 = vmatpush.xpose.msra.mxu0 0.0
      %321 = vmatpush.xpose.msra.mxu0 0.0
      %322 = vmatpush.xpose.msra.mxu0 0.0
      %323 = vmatpush.xpose.msra.mxu0 0.0
      %324 = vmatpush.xpose.msra.mxu0 0.0
      %325 = vmatpush.xpose.msra.mxu0 0.0
      %326 = vmatpush.xpose.msra.mxu0 0.0
      %327 = vmatpush.xpose.msra.mxu0 0.0
      %328 = vmatpush.xpose.msra.mxu0 %v311
      %329 = vmatmul.f32.gmra.mxu0 %v308
      %v330 = vpop.f32.mrf.mxu0
      %v331 = vadd.f32 0.0, %v330
      %332 = vdwg.mxu0
      %v334 = vsel %vm306, %v291, 0
      %v337 = vsel %vm306, %v299, 0
      %339 = vmatpush.xpose.msra.mxu0 0.0
      %340 = vmatpush.xpose.msra.mxu0 0.0
      %341 = vmatpush.xpose.msra.mxu0 0.0
      %342 = vmatpush.xpose.msra.mxu0 0.0
      %343 = vmatpush.xpose.msra.mxu0 0.0
      %344 = vmatpush.xpose.msra.mxu0 0.0
      %345 = vmatpush.xpose.msra.mxu0 0.0
      %346 = vmatpush.xpose.msra.mxu0 0.0
      %347 = vmatpush.xpose.msra.mxu0 0.0
      %348 = vmatpush.xpose.msra.mxu0 0.0
      %349 = vmatpush.xpose.msra.mxu0 0.0
      %350 = vmatpush.xpose.msra.mxu0 0.0
      %351 = vmatpush.xpose.msra.mxu0 0.0
      %352 = vmatpush.xpose.msra.mxu0 0.0
      %353 = vmatpush.xpose.msra.mxu0 0.0
      %354 = vmatpush.xpose.msra.mxu0 %v337
      %355 = vmatmul.f32.gmra.mxu0 %v334
      %v356 = vpop.f32.mrf.mxu0
      %v357 = vadd.f32 0.0, %v356
      %358 = vdwg.mxu0
      %v360 = vsel %vm306, %v292, 0
      %v363 = vsel %vm306, %v300, 0
      %365 = vmatpush.xpose.msra.mxu0 0.0
      %366 = vmatpush.xpose.msra.mxu0 0.0
      %367 = vmatpush.xpose.msra.mxu0 0.0
      %368 = vmatpush.xpose.msra.mxu0 0.0
      %369 = vmatpush.xpose.msra.mxu0 0.0
      %370 = vmatpush.xpose.msra.mxu0 0.0
      %371 = vmatpush.xpose.msra.mxu0 0.0
      %372 = vmatpush.xpose.msra.mxu0 0.0
      %373 = vmatpush.xpose.msra.mxu0 0.0
      %374 = vmatpush.xpose.msra.mxu0 0.0
      %375 = vmatpush.xpose.msra.mxu0 0.0
      %376 = vmatpush.xpose.msra.mxu0 0.0
      %377 = vmatpush.xpose.msra.mxu0 0.0
      %378 = vmatpush.xpose.msra.mxu0 0.0
      %379 = vmatpush.xpose.msra.mxu0 0.0
      %380 = vmatpush.xpose.msra.mxu0 %v363
      %381 = vmatmul.f32.gmra.mxu0 %v360
      %v382 = vpop.f32.mrf.mxu0
      %v383 = vadd.f32 0.0, %v382
      %384 = vdwg.mxu0
      %v386 = vsel %vm306, %v293, 0
      %v389 = vsel %vm306, %v301, 0
      %391 = vmatpush.xpose.msra.mxu0 0.0
      %392 = vmatpush.xpose.msra.mxu0 0.0
      %393 = vmatpush.xpose.msra.mxu0 0.0
      %394 = vmatpush.xpose.msra.mxu0 0.0
      %395 = vmatpush.xpose.msra.mxu0 0.0
      %396 = vmatpush.xpose.msra.mxu0 0.0
      %397 = vmatpush.xpose.msra.mxu0 0.0
      %398 = vmatpush.xpose.msra.mxu0 0.0
      %399 = vmatpush.xpose.msra.mxu0 0.0
      %400 = vmatpush.xpose.msra.mxu0 0.0
      %401 = vmatpush.xpose.msra.mxu0 0.0
      %402 = vmatpush.xpose.msra.mxu0 0.0
      %403 = vmatpush.xpose.msra.mxu0 0.0
      %404 = vmatpush.xpose.msra.mxu0 0.0
      %405 = vmatpush.xpose.msra.mxu0 0.0
      %406 = vmatpush.xpose.msra.mxu0 %v389
      %407 = vmatmul.f32.gmra.mxu0 %v386
      %v408 = vpop.f32.mrf.mxu0
      %v409 = vadd.f32 0.0, %v408
      %410 = vdwg.mxu0
      %v412 = vsel %vm306, %v294, 0
      %v415 = vsel %vm306, %v302, 0
      %417 = vmatpush.xpose.msra.mxu0 0.0
      %418 = vmatpush.xpose.msra.mxu0 0.0
      %419 = vmatpush.xpose.msra.mxu0 0.0
      %420 = vmatpush.xpose.msra.mxu0 0.0
      %421 = vmatpush.xpose.msra.mxu0 0.0
      %422 = vmatpush.xpose.msra.mxu0 0.0
      %423 = vmatpush.xpose.msra.mxu0 0.0
      %424 = vmatpush.xpose.msra.mxu0 0.0
      %425 = vmatpush.xpose.msra.mxu0 0.0
      %426 = vmatpush.xpose.msra.mxu0 0.0
      %427 = vmatpush.xpose.msra.mxu0 0.0
      %428 = vmatpush.xpose.msra.mxu0 0.0
      %429 = vmatpush.xpose.msra.mxu0 0.0
      %430 = vmatpush.xpose.msra.mxu0 0.0
      %431 = vmatpush.xpose.msra.mxu0 0.0
      %432 = vmatpush.xpose.msra.mxu0 %v415
      %433 = vmatmul.f32.gmra.mxu0 %v412
      %v434 = vpop.f32.mrf.mxu0
      %v435 = vadd.f32 0.0, %v434
      %436 = vdwg.mxu0
      %v438 = vsel %vm306, %v295, 0
      %v441 = vsel %vm306, %v303, 0
      %443 = vmatpush.xpose.msra.mxu0 0.0
      %444 = vmatpush.xpose.msra.mxu0 0.0
      %445 = vmatpush.xpose.msra.mxu0 0.0
      %446 = vmatpush.xpose.msra.mxu0 0.0
      %447 = vmatpush.xpose.msra.mxu0 0.0
      %448 = vmatpush.xpose.msra.mxu0 0.0
      %449 = vmatpush.xpose.msra.mxu0 0.0
      %450 = vmatpush.xpose.msra.mxu0 0.0
      %451 = vmatpush.xpose.msra.mxu0 0.0
      %452 = vmatpush.xpose.msra.mxu0 0.0
      %453 = vmatpush.xpose.msra.mxu0 0.0
      %454 = vmatpush.xpose.msra.mxu0 0.0
      %455 = vmatpush.xpose.msra.mxu0 0.0
      %456 = vmatpush.xpose.msra.mxu0 0.0
      %457 = vmatpush.xpose.msra.mxu0 0.0
      %458 = vmatpush.xpose.msra.mxu0 %v441
      %459 = vmatmul.f32.gmra.mxu0 %v438
      %v460 = vpop.f32.mrf.mxu0
      %v461 = vadd.f32 0.0, %v460
      %462 = vdwg.mxu0
      %v464 = vsel %vm306, %v296, 0
      %v467 = vsel %vm306, %v304, 0
      %469 = vmatpush.xpose.msra.mxu0 0.0
      %470 = vmatpush.xpose.msra.mxu0 0.0
      %471 = vmatpush.xpose.msra.mxu0 0.0
      %472 = vmatpush.xpose.msra.mxu0 0.0
      %473 = vmatpush.xpose.msra.mxu0 0.0
      %474 = vmatpush.xpose.msra.mxu0 0.0
      %475 = vmatpush.xpose.msra.mxu0 0.0
      %476 = vmatpush.xpose.msra.mxu0 0.0
      %477 = vmatpush.xpose.msra.mxu0 0.0
      %478 = vmatpush.xpose.msra.mxu0 0.0
      %479 = vmatpush.xpose.msra.mxu0 0.0
      %480 = vmatpush.xpose.msra.mxu0 0.0
      %481 = vmatpush.xpose.msra.mxu0 0.0
      %482 = vmatpush.xpose.msra.mxu0 0.0
      %483 = vmatpush.xpose.msra.mxu0 0.0
      %484 = vmatpush.xpose.msra.mxu0 %v467
      %485 = vmatmul.f32.gmra.mxu0 %v464
      %v486 = vpop.f32.mrf.mxu0
      %v487 = vadd.f32 0.0, %v486
      %488 = vdwg.mxu0
      %v490 = vsel %vm306, %v297, 0
      %v493 = vsel %vm306, %v305, 0
      %495 = vmatpush.xpose.msra.mxu0 0.0
      %496 = vmatpush.xpose.msra.mxu0 0.0
      %497 = vmatpush.xpose.msra.mxu0 0.0
      %498 = vmatpush.xpose.msra.mxu0 0.0
      %499 = vmatpush.xpose.msra.mxu0 0.0
      %500 = vmatpush.xpose.msra.mxu0 0.0
      %501 = vmatpush.xpose.msra.mxu0 0.0
      %502 = vmatpush.xpose.msra.mxu0 0.0
      %503 = vmatpush.xpose.msra.mxu0 0.0
      %504 = vmatpush.xpose.msra.mxu0 0.0
      %505 = vmatpush.xpose.msra.mxu0 0.0
      %506 = vmatpush.xpose.msra.mxu0 0.0
      %507 = vmatpush.xpose.msra.mxu0 0.0
      %508 = vmatpush.xpose.msra.mxu0 0.0
      %509 = vmatpush.xpose.msra.mxu0 0.0
      %510 = vmatpush.xpose.msra.mxu0 %v493
      %511 = vmatmul.f32.gmra.mxu0 %v490
      %v512 = vpop.f32.mrf.mxu0
      %v513 = vadd.f32 0.0, %v512
      %514 = vdwg.mxu0
      %v515 = vld [vmem:[#allocation2] sm:$0x3]
      %v516 = vld [vmem:[#allocation2 + $0x2] sm:$0x3]
      %v517 = vld [vmem:[#allocation2 + $0x4] sm:$0x3]
      %v518 = vld [vmem:[#allocation2 + $0x6] sm:$0x3]
      %v519 = vld [vmem:[#allocation2 + $0x8] sm:$0x3]
      %v520 = vld [vmem:[#allocation2 + $0xa] sm:$0x3]
      %v521 = vld [vmem:[#allocation2 + $0xc] sm:$0x3]
      %v522 = vld [vmem:[#allocation2 + $0xe] sm:$0x3]
      %vm523 = vcmask 9216
      %v524 = vsel %vm523, %v331, -inf
      %525 = vmax.xlane.f32.xlu0 %v524
      %v526 = vpop.xlane.xlu0 %525
      %v527 = vsel %vm523, %v357, -inf
      %528 = vmax.xlane.f32.xlu0 %v527
      %v529 = vpop.xlane.xlu0 %528
      %v530 = vsel %vm523, %v383, -inf
      %531 = vmax.xlane.f32.xlu0 %v530
      %v532 = vpop.xlane.xlu0 %531
      %v533 = vsel %vm523, %v409, -inf
      %534 = vmax.xlane.f32.xlu0 %v533
      %v535 = vpop.xlane.xlu0 %534
      %v536 = vsel %vm523, %v435, -inf
      %537 = vmax.xlane.f32.xlu0 %v536
      %v538 = vpop.xlane.xlu0 %537
      %v539 = vsel %vm523, %v461, -inf
      %540 = vmax.xlane.f32.xlu0 %v539
      %v541 = vpop.xlane.xlu0 %540
      %v542 = vsel %vm523, %v487, -inf
      %543 = vmax.xlane.f32.xlu0 %v542
      %v544 = vpop.xlane.xlu0 %543
      %v545 = vsel %vm523, %v513, -inf
      %546 = vmax.xlane.f32.xlu0 %v545
      %v547 = vpop.xlane.xlu0 %546
      %v548 = vmax.f32 %v515, %v526
      %v549 = vmax.f32 %v516, %v529
      %v550 = vmax.f32 %v517, %v532
      %v551 = vmax.f32 %v518, %v535
      %v552 = vmax.f32 %v519, %v538
      %v553 = vmax.f32 %v520, %v541
      %v554 = vmax.f32 %v521, %v544
      %v555 = vmax.f32 %v522, %v547
      %v556 = vsub.f32 %v515, %v548
      %v557 = vsub.f32 %v516, %v549
      %v558 = vsub.f32 %v517, %v550
      %v559 = vsub.f32 %v518, %v551
      %v560 = vsub.f32 %v519, %v552
      %v561 = vsub.f32 %v520, %v553
      %v562 = vsub.f32 %v521, %v554
      %v563 = vsub.f32 %v522, %v555
      %v564 = vmul.f32 %v556, 1.442695
      %v565 = vpow.pop %v564
      %v566 = vmul.f32 %v557, 1.442695
      %v567 = vpow.pop %v566
      %v568 = vmul.f32 %v558, 1.442695
      %v569 = vpow.pop %v568
      %v570 = vmul.f32 %v559, 1.442695
      %v571 = vpow.pop %v570
      %v572 = vmul.f32 %v560, 1.442695
      %v573 = vpow.pop %v572
      %v574 = vmul.f32 %v561, 1.442695
      %v575 = vpow.pop %v574
      %v576 = vmul.f32 %v562, 1.442695
      %v577 = vpow.pop %v576
      %v578 = vmul.f32 %v563, 1.442695
      %v579 = vpow.pop %v578
      %581 = vset.pattern.permute.xlu0 0
      %582 = vperm.xlu0 %581, %v548
      %v583 = vpop.permute.xlu0 %582
      %586 = vset.pattern.permute.xlu0 0
      %587 = vperm.xlu0 %586, %v549
      %v588 = vpop.permute.xlu0 %587
      %591 = vset.pattern.permute.xlu0 0
      %592 = vperm.xlu0 %591, %v550
      %v593 = vpop.permute.xlu0 %592
      %596 = vset.pattern.permute.xlu0 0
      %597 = vperm.xlu0 %596, %v551
      %v598 = vpop.permute.xlu0 %597
      %601 = vset.pattern.permute.xlu0 0
      %602 = vperm.xlu0 %601, %v552
      %v603 = vpop.permute.xlu0 %602
      %606 = vset.pattern.permute.xlu0 0
      %607 = vperm.xlu0 %606, %v553
      %v608 = vpop.permute.xlu0 %607
      %611 = vset.pattern.permute.xlu0 0
      %612 = vperm.xlu0 %611, %v554
      %v613 = vpop.permute.xlu0 %612
      %616 = vset.pattern.permute.xlu0 0
      %617 = vperm.xlu0 %616, %v555
      %v618 = vpop.permute.xlu0 %617
      %v620 = vsub.f32 %v331, %v583
      %v621 = vsub.f32 %v357, %v588
      %v622 = vsub.f32 %v383, %v593
      %v623 = vsub.f32 %v409, %v598
      %v624 = vsub.f32 %v435, %v603
      %v625 = vsub.f32 %v461, %v608
      %v626 = vsub.f32 %v487, %v613
      %v627 = vsub.f32 %v513, %v618
      %v628 = vmul.f32 %v620, 1.442695
      %v629 = vpow.pop %v628
      %v630 = vmul.f32 %v621, 1.442695
      %v631 = vpow.pop %v630
      %v632 = vmul.f32 %v622, 1.442695
      %v633 = vpow.pop %v632
      %v634 = vmul.f32 %v623, 1.442695
      %v635 = vpow.pop %v634
      %v636 = vmul.f32 %v624, 1.442695
      %v637 = vpow.pop %v636
      %v638 = vmul.f32 %v625, 1.442695
      %v639 = vpow.pop %v638
      %v640 = vmul.f32 %v626, 1.442695
      %v641 = vpow.pop %v640
      %v642 = vmul.f32 %v627, 1.442695
      %v643 = vpow.pop %v642
      %v644 = vld [vmem:[#allocation3] sm:$0x3]
      %v645 = vld [vmem:[#allocation3 + $0x2] sm:$0x3]
      %v646 = vld [vmem:[#allocation3 + $0x4] sm:$0x3]
      %v647 = vld [vmem:[#allocation3 + $0x6] sm:$0x3]
      %v648 = vld [vmem:[#allocation3 + $0x8] sm:$0x3]
      %v649 = vld [vmem:[#allocation3 + $0xa] sm:$0x3]
      %v650 = vld [vmem:[#allocation3 + $0xc] sm:$0x3]
      %v651 = vld [vmem:[#allocation3 + $0xe] sm:$0x3]
      %v652 = vmul.f32 %v565, %v644
      %v653 = vmul.f32 %v567, %v645
      %v654 = vmul.f32 %v569, %v646
      %v655 = vmul.f32 %v571, %v647
      %v656 = vmul.f32 %v573, %v648
      %v657 = vmul.f32 %v575, %v649
      %v658 = vmul.f32 %v577, %v650
      %v659 = vmul.f32 %v579, %v651
      %v660 = vsel %vm523, %v629, 0.0
      %661 = vadd.xlane.f32.xlu0 %v660
      %v662 = vpop.xlane.xlu0 %661
      %v663 = vsel %vm523, %v631, 0.0
      %664 = vadd.xlane.f32.xlu0 %v663
      %v665 = vpop.xlane.xlu0 %664
      %v666 = vsel %vm523, %v633, 0.0
      %667 = vadd.xlane.f32.xlu0 %v666
      %v668 = vpop.xlane.xlu0 %667
      %v669 = vsel %vm523, %v635, 0.0
      %670 = vadd.xlane.f32.xlu0 %v669
      %v671 = vpop.xlane.xlu0 %670
      %v672 = vsel %vm523, %v637, 0.0
      %673 = vadd.xlane.f32.xlu0 %v672
      %v674 = vpop.xlane.xlu0 %673
      %v675 = vsel %vm523, %v639, 0.0
      %676 = vadd.xlane.f32.xlu0 %v675
      %v677 = vpop.xlane.xlu0 %676
      %v678 = vsel %vm523, %v641, 0.0
      %679 = vadd.xlane.f32.xlu0 %v678
      %v680 = vpop.xlane.xlu0 %679
      %v681 = vsel %vm523, %v643, 0.0
      %682 = vadd.xlane.f32.xlu0 %v681
      %v683 = vpop.xlane.xlu0 %682
      %v684 = vadd.f32 %v652, %v662
      %v685 = vadd.f32 %v653, %v665
      %v686 = vadd.f32 %v654, %v668
      %v687 = vadd.f32 %v655, %v671
      %v688 = vadd.f32 %v656, %v674
      %v689 = vadd.f32 %v657, %v677
      %v690 = vadd.f32 %v658, %v680
      %v691 = vadd.f32 %v659, %v683
      %vm692 = vcmask 1024
      %693 = vst.msk [vmem:[#allocation3] sm:$0x3] %vm692, %v684
      %694 = vst.msk [vmem:[#allocation3 + $0x2] sm:$0x3] %vm692, %v685
      %695 = vst.msk [vmem:[#allocation3 + $0x4] sm:$0x3] %vm692, %v686
      %696 = vst.msk [vmem:[#allocation3 + $0x6] sm:$0x3] %vm692, %v687
      %697 = vst.msk [vmem:[#allocation3 + $0x8] sm:$0x3] %vm692, %v688
      %698 = vst.msk [vmem:[#allocation3 + $0xa] sm:$0x3] %vm692, %v689
      %699 = vst.msk [vmem:[#allocation3 + $0xc] sm:$0x3] %vm692, %v690
      %700 = vst.msk [vmem:[#allocation3 + $0xe] sm:$0x3] %vm692, %v691
      %v701 = vld [vmem:[#allocation4] sm:$0x3]
      %v702 = vld [vmem:[#allocation4 + $0x2] sm:$0x3]
      %v703 = vld [vmem:[#allocation4 + $0x4] sm:$0x3]
      %v704 = vld [vmem:[#allocation4 + $0x6] sm:$0x3]
      %v705 = vld [vmem:[#allocation4 + $0x8] sm:$0x3]
      %v706 = vld [vmem:[#allocation4 + $0xa] sm:$0x3]
      %v707 = vld [vmem:[#allocation4 + $0xc] sm:$0x3]
      %v708 = vld [vmem:[#allocation4 + $0xe] sm:$0x3]
      %710 = vset.pattern.permute.xlu0 0
      %711 = vperm.xlu0 %710, %v565
      %v712 = vpop.permute.xlu0 %711
      %715 = vset.pattern.permute.xlu0 0
      %716 = vperm.xlu0 %715, %v567
      %v717 = vpop.permute.xlu0 %716
      %720 = vset.pattern.permute.xlu0 0
      %721 = vperm.xlu0 %720, %v569
      %v722 = vpop.permute.xlu0 %721
      %725 = vset.pattern.permute.xlu0 0
      %726 = vperm.xlu0 %725, %v571
      %v727 = vpop.permute.xlu0 %726
      %730 = vset.pattern.permute.xlu0 0
      %731 = vperm.xlu0 %730, %v573
      %v732 = vpop.permute.xlu0 %731
      %735 = vset.pattern.permute.xlu0 0
      %736 = vperm.xlu0 %735, %v575
      %v737 = vpop.permute.xlu0 %736
      %740 = vset.pattern.permute.xlu0 0
      %741 = vperm.xlu0 %740, %v577
      %v742 = vpop.permute.xlu0 %741
      %745 = vset.pattern.permute.xlu0 0
      %746 = vperm.xlu0 %745, %v579
      %v747 = vpop.permute.xlu0 %746
      %v749 = vmul.f32 %v712, %v701
      %v750 = vmul.f32 %v717, %v702
      %v751 = vmul.f32 %v722, %v703
      %v752 = vmul.f32 %v727, %v704
      %v753 = vmul.f32 %v732, %v705
      %v754 = vmul.f32 %v737, %v706
      %v755 = vmul.f32 %v742, %v707
      %v756 = vmul.f32 %v747, %v708
      %v757 = vld [vmem:[%s244] sm:$0x3]
      %v758 = vld [vmem:[%s244 + $0x2] sm:$0x3]
      %v759 = vld [vmem:[%s244 + $0x4] sm:$0x3]
      %v760 = vld [vmem:[%s244 + $0x6] sm:$0x3]
      %v761 = vld [vmem:[%s244 + $0x8] sm:$0x3]
      %v762 = vld [vmem:[%s244 + $0xa] sm:$0x3]
      %v763 = vld [vmem:[%s244 + $0xc] sm:$0x3]
      %v764 = vld [vmem:[%s244 + $0xe] sm:$0x3]
      %vm765 = vcmask 15360
      %v767 = vsel %vm765, %v629, 0
      %vm769 = vcmask 1041408
      %v771 = vsel %vm769, %v757, 0
      %773 = vmatpush.msra.mxu0 0.0
      %774 = vmatpush.msra.mxu0 0.0
      %775 = vmatpush.msra.mxu0 0.0
      %776 = vmatpush.msra.mxu0 0.0
      %777 = vmatpush.msra.mxu0 0.0
      %778 = vmatpush.msra.mxu0 0.0
      %779 = vmatpush.msra.mxu0 0.0
      %780 = vmatpush.msra.mxu0 0.0
      %781 = vmatpush.msra.mxu0 0.0
      %782 = vmatpush.msra.mxu0 0.0
      %783 = vmatpush.msra.mxu0 0.0
      %784 = vmatpush.msra.mxu0 0.0
      %785 = vmatpush.msra.mxu0 0.0
      %786 = vmatpush.msra.mxu0 0.0
      %787 = vmatpush.msra.mxu0 0.0
      %788 = vmatpush.msra.mxu0 %v771
      %789 = vmatmul.f32.gmra.mxu0 %v767
      %v790 = vpop.f32.mrf.mxu0
      %v791 = vadd.f32 0.0, %v790
      %792 = vdwg.mxu0
      %v794 = vsel %vm765, %v631, 0
      %v797 = vsel %vm769, %v758, 0
      %799 = vmatpush.msra.mxu0 0.0
      %800 = vmatpush.msra.mxu0 0.0
      %801 = vmatpush.msra.mxu0 0.0
      %802 = vmatpush.msra.mxu0 0.0
      %803 = vmatpush.msra.mxu0 0.0
      %804 = vmatpush.msra.mxu0 0.0
      %805 = vmatpush.msra.mxu0 0.0
      %806 = vmatpush.msra.mxu0 0.0
      %807 = vmatpush.msra.mxu0 0.0
      %808 = vmatpush.msra.mxu0 0.0
      %809 = vmatpush.msra.mxu0 0.0
      %810 = vmatpush.msra.mxu0 0.0
      %811 = vmatpush.msra.mxu0 0.0
      %812 = vmatpush.msra.mxu0 0.0
      %813 = vmatpush.msra.mxu0 0.0
      %814 = vmatpush.msra.mxu0 %v797
      %815 = vmatmul.f32.gmra.mxu0 %v794
      %v816 = vpop.f32.mrf.mxu0
      %v817 = vadd.f32 0.0, %v816
      %818 = vdwg.mxu0
      %v820 = vsel %vm765, %v633, 0
      %v823 = vsel %vm769, %v759, 0
      %825 = vmatpush.msra.mxu0 0.0
      %826 = vmatpush.msra.mxu0 0.0
      %827 = vmatpush.msra.mxu0 0.0
      %828 = vmatpush.msra.mxu0 0.0
      %829 = vmatpush.msra.mxu0 0.0
      %830 = vmatpush.msra.mxu0 0.0
      %831 = vmatpush.msra.mxu0 0.0
      %832 = vmatpush.msra.mxu0 0.0
      %833 = vmatpush.msra.mxu0 0.0
      %834 = vmatpush.msra.mxu0 0.0
      %835 = vmatpush.msra.mxu0 0.0
      %836 = vmatpush.msra.mxu0 0.0
      %837 = vmatpush.msra.mxu0 0.0
      %838 = vmatpush.msra.mxu0 0.0
      %839 = vmatpush.msra.mxu0 0.0
      %840 = vmatpush.msra.mxu0 %v823
      %841 = vmatmul.f32.gmra.mxu0 %v820
      %v842 = vpop.f32.mrf.mxu0
      %v843 = vadd.f32 0.0, %v842
      %844 = vdwg.mxu0
      %v846 = vsel %vm765, %v635, 0
      %v849 = vsel %vm769, %v760, 0
      %851 = vmatpush.msra.mxu0 0.0
      %852 = vmatpush.msra.mxu0 0.0
      %853 = vmatpush.msra.mxu0 0.0
      %854 = vmatpush.msra.mxu0 0.0
      %855 = vmatpush.msra.mxu0 0.0
      %856 = vmatpush.msra.mxu0 0.0
      %857 = vmatpush.msra.mxu0 0.0
      %858 = vmatpush.msra.mxu0 0.0
      %859 = vmatpush.msra.mxu0 0.0
      %860 = vmatpush.msra.mxu0 0.0
      %861 = vmatpush.msra.mxu0 0.0
      %862 = vmatpush.msra.mxu0 0.0
      %863 = vmatpush.msra.mxu0 0.0
      %864 = vmatpush.msra.mxu0 0.0
      %865 = vmatpush.msra.mxu0 0.0
      %866 = vmatpush.msra.mxu0 %v849
      %867 = vmatmul.f32.gmra.mxu0 %v846
      %v868 = vpop.f32.mrf.mxu0
      %v869 = vadd.f32 0.0, %v868
      %870 = vdwg.mxu0
      %v872 = vsel %vm765, %v637, 0
      %v875 = vsel %vm769, %v761, 0
      %877 = vmatpush.msra.mxu0 0.0
      %878 = vmatpush.msra.mxu0 0.0
      %879 = vmatpush.msra.mxu0 0.0
      %880 = vmatpush.msra.mxu0 0.0
      %881 = vmatpush.msra.mxu0 0.0
      %882 = vmatpush.msra.mxu0 0.0
      %883 = vmatpush.msra.mxu0 0.0
      %884 = vmatpush.msra.mxu0 0.0
      %885 = vmatpush.msra.mxu0 0.0
      %886 = vmatpush.msra.mxu0 0.0
      %887 = vmatpush.msra.mxu0 0.0
      %888 = vmatpush.msra.mxu0 0.0
      %889 = vmatpush.msra.mxu0 0.0
      %890 = vmatpush.msra.mxu0 0.0
      %891 = vmatpush.msra.mxu0 0.0
      %892 = vmatpush.msra.mxu0 %v875
      %893 = vmatmul.f32.gmra.mxu0 %v872
      %v894 = vpop.f32.mrf.mxu0
      %v895 = vadd.f32 0.0, %v894
      %896 = vdwg.mxu0
      %v898 = vsel %vm765, %v639, 0
      %v901 = vsel %vm769, %v762, 0
      %903 = vmatpush.msra.mxu0 0.0
      %904 = vmatpush.msra.mxu0 0.0
      %905 = vmatpush.msra.mxu0 0.0
      %906 = vmatpush.msra.mxu0 0.0
      %907 = vmatpush.msra.mxu0 0.0
      %908 = vmatpush.msra.mxu0 0.0
      %909 = vmatpush.msra.mxu0 0.0
      %910 = vmatpush.msra.mxu0 0.0
      %911 = vmatpush.msra.mxu0 0.0
      %912 = vmatpush.msra.mxu0 0.0
      %913 = vmatpush.msra.mxu0 0.0
      %914 = vmatpush.msra.mxu0 0.0
      %915 = vmatpush.msra.mxu0 0.0
      %916 = vmatpush.msra.mxu0 0.0
      %917 = vmatpush.msra.mxu0 0.0
      %918 = vmatpush.msra.mxu0 %v901
      %919 = vmatmul.f32.gmra.mxu0 %v898
      %v920 = vpop.f32.mrf.mxu0
      %v921 = vadd.f32 0.0, %v920
      %922 = vdwg.mxu0
      %v924 = vsel %vm765, %v641, 0
      %v927 = vsel %vm769, %v763, 0
      %929 = vmatpush.msra.mxu0 0.0
      %930 = vmatpush.msra.mxu0 0.0
      %931 = vmatpush.msra.mxu0 0.0
      %932 = vmatpush.msra.mxu0 0.0
      %933 = vmatpush.msra.mxu0 0.0
      %934 = vmatpush.msra.mxu0 0.0
      %935 = vmatpush.msra.mxu0 0.0
      %936 = vmatpush.msra.mxu0 0.0
      %937 = vmatpush.msra.mxu0 0.0
      %938 = vmatpush.msra.mxu0 0.0
      %939 = vmatpush.msra.mxu0 0.0
      %940 = vmatpush.msra.mxu0 0.0
      %941 = vmatpush.msra.mxu0 0.0
      %942 = vmatpush.msra.mxu0 0.0
      %943 = vmatpush.msra.mxu0 0.0
      %944 = vmatpush.msra.mxu0 %v927
      %945 = vmatmul.f32.gmra.mxu0 %v924
      %v946 = vpop.f32.mrf.mxu0
      %v947 = vadd.f32 0.0, %v946
      %948 = vdwg.mxu0
      %v950 = vsel %vm765, %v643, 0
      %v953 = vsel %vm769, %v764, 0
      %955 = vmatpush.msra.mxu0 0.0
      %956 = vmatpush.msra.mxu0 0.0
      %957 = vmatpush.msra.mxu0 0.0
      %958 = vmatpush.msra.mxu0 0.0
      %959 = vmatpush.msra.mxu0 0.0
      %960 = vmatpush.msra.mxu0 0.0
      %961 = vmatpush.msra.mxu0 0.0
      %962 = vmatpush.msra.mxu0 0.0
      %963 = vmatpush.msra.mxu0 0.0
      %964 = vmatpush.msra.mxu0 0.0
      %965 = vmatpush.msra.mxu0 0.0
      %966 = vmatpush.msra.mxu0 0.0
      %967 = vmatpush.msra.mxu0 0.0
      %968 = vmatpush.msra.mxu0 0.0
      %969 = vmatpush.msra.mxu0 0.0
      %970 = vmatpush.msra.mxu0 %v953
      %971 = vmatmul.f32.gmra.mxu0 %v950
      %v972 = vpop.f32.mrf.mxu0
      %v973 = vadd.f32 0.0, %v972
      %974 = vdwg.mxu0
      %v975 = vadd.f32 %v749, %v791
      %v976 = vadd.f32 %v750, %v817
      %v977 = vadd.f32 %v751, %v843
      %v978 = vadd.f32 %v752, %v869
      %v979 = vadd.f32 %v753, %v895
      %v980 = vadd.f32 %v754, %v921
      %v981 = vadd.f32 %v755, %v947
      %v982 = vadd.f32 %v756, %v973
      %vm983 = vcmask 254976
      %984 = vst.msk [vmem:[#allocation4] sm:$0x3] %vm983, %v975
      %985 = vst.msk [vmem:[#allocation4 + $0x2] sm:$0x3] %vm983, %v976
      %986 = vst.msk [vmem:[#allocation4 + $0x4] sm:$0x3] %vm983, %v977
      %987 = vst.msk [vmem:[#allocation4 + $0x6] sm:$0x3] %vm983, %v978
      %988 = vst.msk [vmem:[#allocation4 + $0x8] sm:$0x3] %vm983, %v979
      %989 = vst.msk [vmem:[#allocation4 + $0xa] sm:$0x3] %vm983, %v980
      %990 = vst.msk [vmem:[#allocation4 + $0xc] sm:$0x3] %vm983, %v981
      %991 = vst.msk [vmem:[#allocation4 + $0xe] sm:$0x3] %vm983, %v982
      %992 = vst.msk [vmem:[#allocation2] sm:$0x3] %vm692, %v548
      %993 = vst.msk [vmem:[#allocation2 + $0x2] sm:$0x3] %vm692, %v549
      %994 = vst.msk [vmem:[#allocation2 + $0x4] sm:$0x3] %vm692, %v550
      %995 = vst.msk [vmem:[#allocation2 + $0x6] sm:$0x3] %vm692, %v551
      %996 = vst.msk [vmem:[#allocation2 + $0x8] sm:$0x3] %vm692, %v552
      %997 = vst.msk [vmem:[#allocation2 + $0xa] sm:$0x3] %vm692, %v553
      %998 = vst.msk [vmem:[#allocation2 + $0xc] sm:$0x3] %vm692, %v554
      %999 = vst.msk [vmem:[#allocation2 + $0xe] sm:$0x3] %vm692, %v555
      // Predicated region
      $region37: #{bart_forward.34} parent=31 // pred_check
        %p1000 = pneg %p252
      $region38: #{bart_forward.34} parent=31 // pred_check_branch
        %1002 = sbr.rel (%p1000) target = $region40
      $region39: #{bart_forward.34} parent=31 // pred_region
        %v1003 = vld [vmem:[#allocation4] sm:$0x3]
        %v1004 = vld [vmem:[#allocation4 + $0x2] sm:$0x3]
        %v1005 = vld [vmem:[#allocation4 + $0x4] sm:$0x3]
        %v1006 = vld [vmem:[#allocation4 + $0x6] sm:$0x3]
        %v1007 = vld [vmem:[#allocation4 + $0x8] sm:$0x3]
        %v1008 = vld [vmem:[#allocation4 + $0xa] sm:$0x3]
        %v1009 = vld [vmem:[#allocation4 + $0xc] sm:$0x3]
        %v1010 = vld [vmem:[#allocation4 + $0xe] sm:$0x3]
        %v1011 = vld [vmem:[#allocation3] sm:$0x3]
        %v1012 = vld [vmem:[#allocation3 + $0x2] sm:$0x3]
        %v1013 = vld [vmem:[#allocation3 + $0x4] sm:$0x3]
        %v1014 = vld [vmem:[#allocation3 + $0x6] sm:$0x3]
        %v1015 = vld [vmem:[#allocation3 + $0x8] sm:$0x3]
        %v1016 = vld [vmem:[#allocation3 + $0xa] sm:$0x3]
        %v1017 = vld [vmem:[#allocation3 + $0xc] sm:$0x3]
        %v1018 = vld [vmem:[#allocation3 + $0xe] sm:$0x3]
        %v1019 = vrcp.pop %v1011
        %v1020 = vrcp.pop %v1012
        %v1021 = vrcp.pop %v1013
        %v1022 = vrcp.pop %v1014
        %v1023 = vrcp.pop %v1015
        %v1024 = vrcp.pop %v1016
        %v1025 = vrcp.pop %v1017
        %v1026 = vrcp.pop %v1018
        %1028 = vset.pattern.permute.xlu0 0
        %1029 = vperm.xlu0 %1028, %v1019
        %v1030 = vpop.permute.xlu0 %1029
        %1033 = vset.pattern.permute.xlu0 0
        %1034 = vperm.xlu0 %1033, %v1020
        %v1035 = vpop.permute.xlu0 %1034
        %1038 = vset.pattern.permute.xlu0 0
        %1039 = vperm.xlu0 %1038, %v1021
        %v1040 = vpop.permute.xlu0 %1039
        %1043 = vset.pattern.permute.xlu0 0
        %1044 = vperm.xlu0 %1043, %v1022
        %v1045 = vpop.permute.xlu0 %1044
        %1048 = vset.pattern.permute.xlu0 0
        %1049 = vperm.xlu0 %1048, %v1023
        %v1050 = vpop.permute.xlu0 %1049
        %1053 = vset.pattern.permute.xlu0 0
        %1054 = vperm.xlu0 %1053, %v1024
        %v1055 = vpop.permute.xlu0 %1054
        %1058 = vset.pattern.permute.xlu0 0
        %1059 = vperm.xlu0 %1058, %v1025
        %v1060 = vpop.permute.xlu0 %1059
        %1063 = vset.pattern.permute.xlu0 0
        %1064 = vperm.xlu0 %1063, %v1026
        %v1065 = vpop.permute.xlu0 %1064
        %v1067 = vmul.f32 %v1003, %v1030
        %v1068 = vmul.f32 %v1004, %v1035
        %v1069 = vmul.f32 %v1005, %v1040
        %v1070 = vmul.f32 %v1006, %v1045
        %v1071 = vmul.f32 %v1007, %v1050
        %v1072 = vmul.f32 %v1008, %v1055
        %v1073 = vmul.f32 %v1009, %v1060
        %v1074 = vmul.f32 %v1010, %v1065
        %1075 = vst.msk [vmem:[%s250] sm:$0x3] %vm983, %v1067
        %1076 = vst.msk [vmem:[%s250 + $0x2] sm:$0x3] %vm983, %v1068
        %1077 = vst.msk [vmem:[%s250 + $0x4] sm:$0x3] %vm983, %v1069
        %1078 = vst.msk [vmem:[%s250 + $0x6] sm:$0x3] %vm983, %v1070
        %1079 = vst.msk [vmem:[%s250 + $0x8] sm:$0x3] %vm983, %v1071
        %1080 = vst.msk [vmem:[%s250 + $0xa] sm:$0x3] %vm983, %v1072
        %1081 = vst.msk [vmem:[%s250 + $0xc] sm:$0x3] %vm983, %v1073
        %1082 = vst.msk [vmem:[%s250 + $0xe] sm:$0x3] %vm983, %v1074
      $region40: #{bart_forward.34} parent=31 // pred_fallthru
        _
      %s1083 = smul.u32 8, %s18
      %p1084 = scmp.lt.s32.totalorder %s1083, 31
      %s1085 = scalar_select %p1084, %s1083, 31
      %s1086 = smul.addr %s1085, 2
      %s1087 = scalar_lea.vmem %s3, %s1086
      // Predicated region
      $region41: #{bart_forward.34} parent=31 // pred_check
        %p1088 = pneg %p126
      $region42: #{bart_forward.34} parent=31 // pred_check_branch
        %1090 = sbr.rel (%p1088) target = $region44
      $region43: #{bart_forward.34} parent=31 // pred_region
        %s1091 = smul.u32 8, %s18
      $region44: #{bart_forward.34} parent=31 // pred_fallthru
        _
    $region32: #{bart_forward.34} parent=5 // pred_fallthru
      _
    %p1092 = scmp.le.s32.totalorder 2, %s9
    // Predicated region
    $region45: #{bart_forward.34} parent=5 // pred_check
      %p1093 = pneg %p1092
    $region46: #{bart_forward.34} parent=5 // pred_check_branch
      %1095 = sbr.rel (%p1093) target = $region48
    $region47: #{bart_forward.34} parent=5 // pred_region
      %s1096 = ssub.s32 %s9, 2
      // Predicated region
      $region49: #{bart_forward.34} parent=47 // pred_check
        %p1097 = pneg %p132
      $region50: #{bart_forward.34} parent=47 // pred_check_branch
        %1099 = sbr.rel (%p1097) target = $region52
      $region51: #{bart_forward.34} parent=47 // pred_region
        %s1100 = smul.u32 8, %s20
        %p1101 = scmp.lt.s32.totalorder %s1100, 31
        %s1102 = scalar_select %p1101, %s1100, 31
        %s1103 = smul.addr %s1102, 2
        %s1104 = scalar_lea.vmem %s3, %s1103
      $region52: #{bart_forward.34} parent=47 // pred_fallthru
        _
    $region48: #{bart_forward.34} parent=5 // pred_fallthru
      _
  $region6: #{bart_forward.34} parent=0 // loop_footer
    %s13 = sadd.s32 1, %s9
  $region7: #{bart_forward.34} parent=0 // loop_footer_branch
    %8 = sbr.rel target = $region3
  $region8: #{bart_forward.34} parent=0 // loop_exit
    _

// kernel: bart_forward.36
$region0: #{bart_forward.36}
  #allocation0 [shape = 'u32[]', space=smem, size = 0x4, offset = 0x4, fixed_abs, tag = 'smem constant byte address 0x4 - core index']
  #allocation1 [shape = 'u32[72,128]{1,0:T(1,128)}', space=vmem, size = 0x9000, scoped, tag = 'internal scratch']
  %s0 = inlined_call_operand.vmem [shape: f32[16,128], index: 0, kind: input, shape index: {}]
  %s1 = inlined_call_operand.vmem [shape: f32[128,128], index: 1, kind: input, shape index: {}]
  %s2 = inlined_call_operand.vmem [shape: f32[1,128], index: 2, kind: input, shape index: {}]
  %s3 = inlined_call_operand.vmem [shape: f32[16,128], index: 3, kind: output, shape index: {}]
  %s4 = sld [smem:[#allocation0]]
  $region22: #{bart_forward.36} parent=0
    _
  %s6 = ssub.s32 1, %s4
  %s7 = scalar_select 0, %s6, %s4
  // Predicated region
  $region2: #{bart_forward.36} parent=0 // pred_check
    _
  $region3: #{bart_forward.36} parent=0 // pred_check_branch
    %9 = sbr.rel (0) target = $region5
  $region4: #{bart_forward.36} parent=0 // pred_region
    _
  $region5: #{bart_forward.36} parent=0 // pred_fallthru
    _
  // Predicated region
  $region6: #{bart_forward.36} parent=0 // pred_check
    _
  $region7: #{bart_forward.36} parent=0 // pred_check_branch
    %11 = sbr.rel (0) target = $region9
  $region8: #{bart_forward.36} parent=0 // pred_region
    _
  $region9: #{bart_forward.36} parent=0 // pred_fallthru
    _
  // Predicated region
  $region10: #{bart_forward.36} parent=0 // pred_check
    _
  $region11: #{bart_forward.36} parent=0 // pred_check_branch
    %13 = sbr.rel (0) target = $region13
  $region12: #{bart_forward.36} parent=0 // pred_region
    _
  $region13: #{bart_forward.36} parent=0 // pred_fallthru
    _
  %v14 = vld [vmem:[%s0] sm:$0xff]
  %v15 = vld [vmem:[%s0 + $0x8] sm:$0xff]
  %v16 = vld [vmem:[%s1] sm:$0xff]
  %v17 = vld [vmem:[%s1 + $0x8] sm:$0xff]
  %v18 = vld [vmem:[%s1 + $0x10] sm:$0xff]
  %v19 = vld [vmem:[%s1 + $0x18] sm:$0xff]
  %v20 = vld [vmem:[%s1 + $0x20] sm:$0xff]
  %v21 = vld [vmem:[%s1 + $0x28] sm:$0xff]
  %v22 = vld [vmem:[%s1 + $0x30] sm:$0xff]
  %v23 = vld [vmem:[%s1 + $0x38] sm:$0xff]
  %v24 = vld [vmem:[%s1 + $0x40] sm:$0xff]
  %v25 = vld [vmem:[%s1 + $0x48] sm:$0xff]
  %v26 = vld [vmem:[%s1 + $0x50] sm:$0xff]
  %v27 = vld [vmem:[%s1 + $0x58] sm:$0xff]
  %v28 = vld [vmem:[%s1 + $0x60] sm:$0xff]
  %v29 = vld [vmem:[%s1 + $0x68] sm:$0xff]
  %v30 = vld [vmem:[%s1 + $0x70] sm:$0xff]
  %v31 = vld [vmem:[%s1 + $0x78] sm:$0xff]
  %v32 = vld [vmem:[%s2] sm:$0x1]
  %v34 = vperm.slane %v32, 0
  %36 = vmatpush.xpose.msra.mxu0 %v31
  %37 = vmatpush.xpose.msra.mxu0 %v30
  %38 = vmatpush.xpose.msra.mxu0 %v29
  %39 = vmatpush.xpose.msra.mxu0 %v28
  %40 = vmatpush.xpose.msra.mxu0 %v27
  %41 = vmatpush.xpose.msra.mxu0 %v26
  %42 = vmatpush.xpose.msra.mxu0 %v25
  %43 = vmatpush.xpose.msra.mxu0 %v24
  %44 = vmatpush.xpose.msra.mxu0 %v23
  %45 = vmatpush.xpose.msra.mxu0 %v22
  %46 = vmatpush.xpose.msra.mxu0 %v21
  %47 = vmatpush.xpose.msra.mxu0 %v20
  %48 = vmatpush.xpose.msra.mxu0 %v19
  %49 = vmatpush.xpose.msra.mxu0 %v18
  %50 = vmatpush.xpose.msra.mxu0 %v17
  %51 = vmatpush.xpose.msra.mxu0 %v16
  %52 = vmatmul.f32.gmra.mxu0 %v14
  %v53 = vpop.f32.mrf.mxu0
  %v54 = vadd.f32 %v34, %v53
  %55 = vmatmul.f32.gmra.mxu0 %v15
  %v56 = vpop.f32.mrf.mxu0
  %v57 = vadd.f32 %v34, %v56
  %58 = vdwg.mxu0
  %59 = vst [vmem:[%s3] sm:$0xff] %v54
  %60 = vst [vmem:[%s3 + $0x8] sm:$0xff] %v57
  // Predicated region
  $region14: #{bart_forward.36} parent=0 // pred_check
    _
  $region15: #{bart_forward.36} parent=0 // pred_check_branch
    %62 = sbr.rel (0) target = $region17
  $region16: #{bart_forward.36} parent=0 // pred_region
    _
  $region17: #{bart_forward.36} parent=0 // pred_fallthru
    _
  // Predicated region
  $region18: #{bart_forward.36} parent=0 // pred_check
    _
  $region19: #{bart_forward.36} parent=0 // pred_check_branch
    %64 = sbr.rel (0) target = $region21
  $region20: #{bart_forward.36} parent=0 // pred_region
    _
  $region21: #{bart_forward.36} parent=0 // pred_fallthru
    _

// kernel: bart_forward.35
$region0: #{bart_forward.35}
  #allocation0 [shape = 'u32[]', space=smem, size = 0x4, offset = 0x4, fixed_abs, tag = 'smem constant byte address 0x4 - core index']
  #allocation1 [shape = 'u32[72,128]{1,0:T(1,128)}', space=vmem, size = 0x9000, scoped, tag = 'internal scratch']
  %s0 = inlined_call_operand.vmem [shape: f32[16,128], index: 0, kind: input, shape index: {}]
  %s1 = inlined_call_operand.vmem [shape: f32[128,128], index: 1, kind: input, shape index: {}]
  %s2 = inlined_call_operand.vmem [shape: f32[1,128], index: 2, kind: input, shape index: {}]
  %s3 = inlined_call_operand.vmem [shape: f32[16,128], index: 3, kind: input, shape index: {}]
  %s4 = inlined_call_operand.vmem [shape: f32[1,128], index: 4, kind: input, shape index: {}]
  %s5 = inlined_call_operand.vmem [shape: f32[1,128], index: 5, kind: input, shape index: {}]
  %s6 = inlined_call_operand.vmem [shape: f32[16,128], index: 6, kind: output, shape index: {}]
  %s7 = sld [smem:[#allocation0]]
  $region34: #{bart_forward.35} parent=0
    _
  %s9 = ssub.s32 1, %s7
  %s10 = scalar_select 0, %s9, %s7
  // Predicated region
  $region2: #{bart_forward.35} parent=0 // pred_check
    _
  $region3: #{bart_forward.35} parent=0 // pred_check_branch
    %12 = sbr.rel (0) target = $region5
  $region4: #{bart_forward.35} parent=0 // pred_region
    _
  $region5: #{bart_forward.35} parent=0 // pred_fallthru
    _
  // Predicated region
  $region6: #{bart_forward.35} parent=0 // pred_check
    _
  $region7: #{bart_forward.35} parent=0 // pred_check_branch
    %14 = sbr.rel (0) target = $region9
  $region8: #{bart_forward.35} parent=0 // pred_region
    _
  $region9: #{bart_forward.35} parent=0 // pred_fallthru
    _
  // Predicated region
  $region10: #{bart_forward.35} parent=0 // pred_check
    _
  $region11: #{bart_forward.35} parent=0 // pred_check_branch
    %16 = sbr.rel (0) target = $region13
  $region12: #{bart_forward.35} parent=0 // pred_region
    _
  $region13: #{bart_forward.35} parent=0 // pred_fallthru
    _
  // Predicated region
  $region14: #{bart_forward.35} parent=0 // pred_check
    _
  $region15: #{bart_forward.35} parent=0 // pred_check_branch
    %18 = sbr.rel (0) target = $region17
  $region16: #{bart_forward.35} parent=0 // pred_region
    _
  $region17: #{bart_forward.35} parent=0 // pred_fallthru
    _
  // Predicated region
  $region18: #{bart_forward.35} parent=0 // pred_check
    _
  $region19: #{bart_forward.35} parent=0 // pred_check_branch
    %20 = sbr.rel (0) target = $region21
  $region20: #{bart_forward.35} parent=0 // pred_region
    _
  $region21: #{bart_forward.35} parent=0 // pred_fallthru
    _
  // Predicated region
  $region22: #{bart_forward.35} parent=0 // pred_check
    _
  $region23: #{bart_forward.35} parent=0 // pred_check_branch
    %22 = sbr.rel (0) target = $region25
  $region24: #{bart_forward.35} parent=0 // pred_region
    _
  $region25: #{bart_forward.35} parent=0 // pred_fallthru
    _
  %v23 = vld [vmem:[%s0] sm:$0xff]
  %v24 = vld [vmem:[%s0 + $0x8] sm:$0xff]
  %v25 = vld [vmem:[%s1] sm:$0xff]
  %v26 = vld [vmem:[%s1 + $0x8] sm:$0xff]
  %v27 = vld [vmem:[%s1 + $0x10] sm:$0xff]
  %v28 = vld [vmem:[%s1 + $0x18] sm:$0xff]
  %v29 = vld [vmem:[%s1 + $0x20] sm:$0xff]
  %v30 = vld [vmem:[%s1 + $0x28] sm:$0xff]
  %v31 = vld [vmem:[%s1 + $0x30] sm:$0xff]
  %v32 = vld [vmem:[%s1 + $0x38] sm:$0xff]
  %v33 = vld [vmem:[%s1 + $0x40] sm:$0xff]
  %v34 = vld [vmem:[%s1 + $0x48] sm:$0xff]
  %v35 = vld [vmem:[%s1 + $0x50] sm:$0xff]
  %v36 = vld [vmem:[%s1 + $0x58] sm:$0xff]
  %v37 = vld [vmem:[%s1 + $0x60] sm:$0xff]
  %v38 = vld [vmem:[%s1 + $0x68] sm:$0xff]
  %v39 = vld [vmem:[%s1 + $0x70] sm:$0xff]
  %v40 = vld [vmem:[%s1 + $0x78] sm:$0xff]
  %v41 = vld [vmem:[%s2] sm:$0x1]
  %v43 = vperm.slane %v41, 0
  %45 = vmatpush.xpose.msra.mxu0 %v40
  %46 = vmatpush.xpose.msra.mxu0 %v39
  %47 = vmatpush.xpose.msra.mxu0 %v38
  %48 = vmatpush.xpose.msra.mxu0 %v37
  %49 = vmatpush.xpose.msra.mxu0 %v36
  %50 = vmatpush.xpose.msra.mxu0 %v35
  %51 = vmatpush.xpose.msra.mxu0 %v34
  %52 = vmatpush.xpose.msra.mxu0 %v33
  %53 = vmatpush.xpose.msra.mxu0 %v32
  %54 = vmatpush.xpose.msra.mxu0 %v31
  %55 = vmatpush.xpose.msra.mxu0 %v30
  %56 = vmatpush.xpose.msra.mxu0 %v29
  %57 = vmatpush.xpose.msra.mxu0 %v28
  %58 = vmatpush.xpose.msra.mxu0 %v27
  %59 = vmatpush.xpose.msra.mxu0 %v26
  %60 = vmatpush.xpose.msra.mxu0 %v25
  %61 = vmatmul.f32.gmra.mxu0 %v23
  %v62 = vpop.f32.mrf.mxu0
  %v63 = vadd.f32 %v43, %v62
  %64 = vmatmul.f32.gmra.mxu0 %v24
  %v65 = vpop.f32.mrf.mxu0
  %v66 = vadd.f32 %v43, %v65
  %67 = vdwg.mxu0
  %v68 = vld [vmem:[%s3] sm:$0xff]
  %v69 = vld [vmem:[%s3 + $0x8] sm:$0xff]
  %v70 = vadd.f32 %v63, %v68
  %v71 = vadd.f32 %v66, %v69
  %v72 = vld [vmem:[%s4] sm:$0x1]
  %v73 = vld [vmem:[%s5] sm:$0x1]
  %74 = vadd.xlane.f32.xlu0 %v70
  %v75 = vpop.xlane.xlu0 %74
  %76 = vadd.xlane.f32.xlu0 %v71
  %v77 = vpop.xlane.xlu0 %76
  %v78 = vrcp.pop 128.0
  %v79 = vmul.f32 128.0, %v78
  %v80 = vsub.f32 1.0, %v79
  %v81 = vmul.f32 %v78, %v80
  %v82 = vadd.f32 %v78, %v81
  %vm83 = vweird.f32 %v78
  %v84 = vsel %vm83, %v78, %v82
  %v85 = vmul.f32 %v75, %v84
  %v86 = vmul.f32 %v77, %v84
  %v87 = vsub.f32 %v70, %v85
  %v88 = vsub.f32 %v71, %v86
  %v89 = vmul.f32 %v87, %v87
  %v90 = vmul.f32 %v88, %v88
  %91 = vadd.xlane.f32.xlu0 %v89
  %v92 = vpop.xlane.xlu0 %91
  %93 = vadd.xlane.f32.xlu0 %v90
  %v94 = vpop.xlane.xlu0 %93
  %v95 = vmul.f32 %v92, %v84
  %v96 = vmul.f32 %v94, %v84
  %v97 = vadd.f32 %v95, 1e-05
  %v98 = vadd.f32 %v96, 1e-05
  %v99 = vrsqrt.pop %v97
  %v100 = vmul.f32 %v99, %v97
  %v101 = vmul.f32 %v100, %v99
  %v102 = vmul.f32 0.5, %v101
  %v103 = vsub.f32 1.5, %v102
  %v104 = vmul.f32 %v99, %v103
  %vm105 = vweird.f32 %v97
  %vm106 = vweird.f32 %v99
  %vm107 = vmor %vm105, %vm106
  %v108 = vsel %vm107, %v99, %v104
  %v109 = vrsqrt.pop %v98
  %v110 = vmul.f32 %v109, %v98
  %v111 = vmul.f32 %v110, %v109
  %v112 = vmul.f32 0.5, %v111
  %v113 = vsub.f32 1.5, %v112
  %v114 = vmul.f32 %v109, %v113
  %vm115 = vweird.f32 %v98
  %vm116 = vweird.f32 %v109
  %vm117 = vmor %vm115, %vm116
  %v118 = vsel %vm117, %v109, %v114
  %v119 = vmul.f32 %v87, %v108
  %v120 = vmul.f32 %v88, %v118
  %v122 = vperm.slane %v72, 0
  %v124 = vmul.f32 %v119, %v122
  %v125 = vmul.f32 %v120, %v122
  %v127 = vperm.slane %v73, 0
  %v129 = vadd.f32 %v124, %v127
  %v130 = vadd.f32 %v125, %v127
  %131 = vst [vmem:[%s6] sm:$0xff] %v129
  %132 = vst [vmem:[%s6 + $0x8] sm:$0xff] %v130
  // Predicated region
  $region26: #{bart_forward.35} parent=0 // pred_check
    _
  $region27: #{bart_forward.35} parent=0 // pred_check_branch
    %134 = sbr.rel (0) target = $region29
  $region28: #{bart_forward.35} parent=0 // pred_region
    _
  $region29: #{bart_forward.35} parent=0 // pred_fallthru
    _
  // Predicated region
  $region30: #{bart_forward.35} parent=0 // pred_check
    _
  $region31: #{bart_forward.35} parent=0 // pred_check_branch
    %136 = sbr.rel (0) target = $region33
  $region32: #{bart_forward.35} parent=0 // pred_region
    _
  $region33: #{bart_forward.35} parent=0 // pred_fallthru
    _

// kernel: bart_forward.25
$region0: #{bart_forward.25}
  #allocation0 [shape = 'u32[]', space=smem, size = 0x4, offset = 0x4, fixed_abs, tag = 'smem constant byte address 0x4 - core index']
  #allocation1 [shape = 'u32[72,128]{1,0:T(1,128)}', space=vmem, size = 0x9000, scoped, tag = 'internal scratch']
  %s0 = inlined_call_operand.vmem [shape: f32[16,128], index: 0, kind: input, shape index: {}]
  %s1 = inlined_call_operand.vmem [shape: f32[384,128], index: 1, kind: input, shape index: {}]
  %s2 = inlined_call_operand.vmem [shape: f32[1,384], index: 2, kind: input, shape index: {}]
  %s3 = inlined_call_operand.vmem [shape: f32[16,384], index: 3, kind: output, shape index: {}]
  %s4 = sld [smem:[#allocation0]]
  $region22: #{bart_forward.25} parent=0
    _
  %s6 = ssub.s32 1, %s4
  %s7 = scalar_select 0, %s6, %s4
  // Predicated region
  $region2: #{bart_forward.25} parent=0 // pred_check
    _
  $region3: #{bart_forward.25} parent=0 // pred_check_branch
    %9 = sbr.rel (0) target = $region5
  $region4: #{bart_forward.25} parent=0 // pred_region
    _
  $region5: #{bart_forward.25} parent=0 // pred_fallthru
    _
  // Predicated region
  $region6: #{bart_forward.25} parent=0 // pred_check
    _
  $region7: #{bart_forward.25} parent=0 // pred_check_branch
    %11 = sbr.rel (0) target = $region9
  $region8: #{bart_forward.25} parent=0 // pred_region
    _
  $region9: #{bart_forward.25} parent=0 // pred_fallthru
    _
  // Predicated region
  $region10: #{bart_forward.25} parent=0 // pred_check
    _
  $region11: #{bart_forward.25} parent=0 // pred_check_branch
    %13 = sbr.rel (0) target = $region13
  $region12: #{bart_forward.25} parent=0 // pred_region
    _
  $region13: #{bart_forward.25} parent=0 // pred_fallthru
    _
  %v14 = vld [vmem:[%s0] sm:$0xff]
  %v15 = vld [vmem:[%s0 + $0x8] sm:$0xff]
  %v16 = vld [vmem:[%s1] sm:$0xff]
  %v17 = vld [vmem:[%s1 + $0x8] sm:$0xff]
  %v18 = vld [vmem:[%s1 + $0x10] sm:$0xff]
  %v19 = vld [vmem:[%s1 + $0x18] sm:$0xff]
  %v20 = vld [vmem:[%s1 + $0x20] sm:$0xff]
  %v21 = vld [vmem:[%s1 + $0x28] sm:$0xff]
  %v22 = vld [vmem:[%s1 + $0x30] sm:$0xff]
  %v23 = vld [vmem:[%s1 + $0x38] sm:$0xff]
  %v24 = vld [vmem:[%s1 + $0x40] sm:$0xff]
  %v25 = vld [vmem:[%s1 + $0x48] sm:$0xff]
  %v26 = vld [vmem:[%s1 + $0x50] sm:$0xff]
  %v27 = vld [vmem:[%s1 + $0x58] sm:$0xff]
  %v28 = vld [vmem:[%s1 + $0x60] sm:$0xff]
  %v29 = vld [vmem:[%s1 + $0x68] sm:$0xff]
  %v30 = vld [vmem:[%s1 + $0x70] sm:$0xff]
  %v31 = vld [vmem:[%s1 + $0x78] sm:$0xff]
  %v32 = vld [vmem:[%s1 + $0x80] sm:$0xff]
  %v33 = vld [vmem:[%s1 + $0x88] sm:$0xff]
  %v34 = vld [vmem:[%s1 + $0x90] sm:$0xff]
  %v35 = vld [vmem:[%s1 + $0x98] sm:$0xff]
  %v36 = vld [vmem:[%s1 + $0xa0] sm:$0xff]
  %v37 = vld [vmem:[%s1 + $0xa8] sm:$0xff]
  %v38 = vld [vmem:[%s1 + $0xb0] sm:$0xff]
  %v39 = vld [vmem:[%s1 + $0xb8] sm:$0xff]
  %v40 = vld [vmem:[%s1 + $0xc0] sm:$0xff]
  %v41 = vld [vmem:[%s1 + $0xc8] sm:$0xff]
  %v42 = vld [vmem:[%s1 + $0xd0] sm:$0xff]
  %v43 = vld [vmem:[%s1 + $0xd8] sm:$0xff]
  %v44 = vld [vmem:[%s1 + $0xe0] sm:$0xff]
  %v45 = vld [vmem:[%s1 + $0xe8] sm:$0xff]
  %v46 = vld [vmem:[%s1 + $0xf0] sm:$0xff]
  %v47 = vld [vmem:[%s1 + $0xf8] sm:$0xff]
  %v48 = vld [vmem:[%s1 + $0x100] sm:$0xff]
  %v49 = vld [vmem:[%s1 + $0x108] sm:$0xff]
  %v50 = vld [vmem:[%s1 + $0x110] sm:$0xff]
  %v51 = vld [vmem:[%s1 + $0x118] sm:$0xff]
  %v52 = vld [vmem:[%s1 + $0x120] sm:$0xff]
  %v53 = vld [vmem:[%s1 + $0x128] sm:$0xff]
  %v54 = vld [vmem:[%s1 + $0x130] sm:$0xff]
  %v55 = vld [vmem:[%s1 + $0x138] sm:$0xff]
  %v56 = vld [vmem:[%s1 + $0x140] sm:$0xff]
  %v57 = vld [vmem:[%s1 + $0x148] sm:$0xff]
  %v58 = vld [vmem:[%s1 + $0x150] sm:$0xff]
  %v59 = vld [vmem:[%s1 + $0x158] sm:$0xff]
  %v60 = vld [vmem:[%s1 + $0x160] sm:$0xff]
  %v61 = vld [vmem:[%s1 + $0x168] sm:$0xff]
  %v62 = vld [vmem:[%s1 + $0x170] sm:$0xff]
  %v63 = vld [vmem:[%s1 + $0x178] sm:$0xff]
  %v64 = vld [vmem:[%s2] sm:$0x7]
  %v66 = vperm.slane %v64, 0
  %v67 = vperm.slane %v64, 1
  %v68 = vperm.slane %v64, 2
  %72 = vmatpush.xpose.msra.mxu0 %v31
  %73 = vmatpush.xpose.msra.mxu0 %v30
  %74 = vmatpush.xpose.msra.mxu0 %v29
  %75 = vmatpush.xpose.msra.mxu0 %v28
  %76 = vmatpush.xpose.msra.mxu0 %v27
  %77 = vmatpush.xpose.msra.mxu0 %v26
  %78 = vmatpush.xpose.msra.mxu0 %v25
  %79 = vmatpush.xpose.msra.mxu0 %v24
  %80 = vmatpush.xpose.msra.mxu0 %v23
  %81 = vmatpush.xpose.msra.mxu0 %v22
  %82 = vmatpush.xpose.msra.mxu0 %v21
  %83 = vmatpush.xpose.msra.mxu0 %v20
  %84 = vmatpush.xpose.msra.mxu0 %v19
  %85 = vmatpush.xpose.msra.mxu0 %v18
  %86 = vmatpush.xpose.msra.mxu0 %v17
  %87 = vmatpush.xpose.msra.mxu0 %v16
  %88 = vmatmul.f32.gmra.mxu0 %v14
  %v89 = vpop.f32.mrf.mxu0
  %v90 = vadd.f32 %v66, %v89
  %91 = vmatmul.f32.gmra.mxu0 %v15
  %v92 = vpop.f32.mrf.mxu0
  %v93 = vadd.f32 %v66, %v92
  %94 = vdwg.mxu0
  %95 = vmatpush.xpose.msra.mxu0 %v47
  %96 = vmatpush.xpose.msra.mxu0 %v46
  %97 = vmatpush.xpose.msra.mxu0 %v45
  %98 = vmatpush.xpose.msra.mxu0 %v44
  %99 = vmatpush.xpose.msra.mxu0 %v43
  %100 = vmatpush.xpose.msra.mxu0 %v42
  %101 = vmatpush.xpose.msra.mxu0 %v41
  %102 = vmatpush.xpose.msra.mxu0 %v40
  %103 = vmatpush.xpose.msra.mxu0 %v39
  %104 = vmatpush.xpose.msra.mxu0 %v38
  %105 = vmatpush.xpose.msra.mxu0 %v37
  %106 = vmatpush.xpose.msra.mxu0 %v36
  %107 = vmatpush.xpose.msra.mxu0 %v35
  %108 = vmatpush.xpose.msra.mxu0 %v34
  %109 = vmatpush.xpose.msra.mxu0 %v33
  %110 = vmatpush.xpose.msra.mxu0 %v32
  %111 = vmatmul.f32.gmra.mxu0 %v14
  %v112 = vpop.f32.mrf.mxu0
  %v113 = vadd.f32 %v67, %v112
  %114 = vmatmul.f32.gmra.mxu0 %v15
  %v115 = vpop.f32.mrf.mxu0
  %v116 = vadd.f32 %v67, %v115
  %117 = vdwg.mxu0
  %118 = vmatpush.xpose.msra.mxu0 %v63
  %119 = vmatpush.xpose.msra.mxu0 %v62
  %120 = vmatpush.xpose.msra.mxu0 %v61
  %121 = vmatpush.xpose.msra.mxu0 %v60
  %122 = vmatpush.xpose.msra.mxu0 %v59
  %123 = vmatpush.xpose.msra.mxu0 %v58
  %124 = vmatpush.xpose.msra.mxu0 %v57
  %125 = vmatpush.xpose.msra.mxu0 %v56
  %126 = vmatpush.xpose.msra.mxu0 %v55
  %127 = vmatpush.xpose.msra.mxu0 %v54
  %128 = vmatpush.xpose.msra.mxu0 %v53
  %129 = vmatpush.xpose.msra.mxu0 %v52
  %130 = vmatpush.xpose.msra.mxu0 %v51
  %131 = vmatpush.xpose.msra.mxu0 %v50
  %132 = vmatpush.xpose.msra.mxu0 %v49
  %133 = vmatpush.xpose.msra.mxu0 %v48
  %134 = vmatmul.f32.gmra.mxu0 %v14
  %v135 = vpop.f32.mrf.mxu0
  %v136 = vadd.f32 %v68, %v135
  %137 = vmatmul.f32.gmra.mxu0 %v15
  %v138 = vpop.f32.mrf.mxu0
  %v139 = vadd.f32 %v68, %v138
  %140 = vdwg.mxu0
  %141 = vst [vmem:[%s3] sm:$0xff] %v90
  %142 = vst [vmem:[%s3 + $0x8] sm:$0xff] %v113
  %143 = vst [vmem:[%s3 + $0x10] sm:$0xff] %v136
  %144 = vst [vmem:[%s3 + $0x18] sm:$0xff] %v93
  %145 = vst [vmem:[%s3 + $0x20] sm:$0xff] %v116
  %146 = vst [vmem:[%s3 + $0x28] sm:$0xff] %v139
  // Predicated region
  $region14: #{bart_forward.25} parent=0 // pred_check
    _
  $region15: #{bart_forward.25} parent=0 // pred_check_branch
    %148 = sbr.rel (0) target = $region17
  $region16: #{bart_forward.25} parent=0 // pred_region
    _
  $region17: #{bart_forward.25} parent=0 // pred_fallthru
    _
  // Predicated region
  $region18: #{bart_forward.25} parent=0 // pred_check
    _
  $region19: #{bart_forward.25} parent=0 // pred_check_branch
    %150 = sbr.rel (0) target = $region21
  $region20: #{bart_forward.25} parent=0 // pred_region
    _
  $region21: #{bart_forward.25} parent=0 // pred_fallthru
    _

// kernel: bart_forward.37
$region0: #{bart_forward.37}
  #allocation0 [shape = 'u32[]', space=smem, size = 0x4, offset = 0x4, fixed_abs, tag = 'smem constant byte address 0x4 - core index']
  #allocation1 [shape = 'u32[72,128]{1,0:T(1,128)}', space=vmem, size = 0x9000, scoped, tag = 'internal scratch']
  %s0 = inlined_call_operand.vmem [shape: f32[16,128], index: 0, kind: input, shape index: {}]
  %s1 = inlined_call_operand.vmem [shape: f32[256,128], index: 1, kind: input, shape index: {}]
  %s2 = inlined_call_operand.vmem [shape: f32[1,256], index: 2, kind: input, shape index: {}]
  %s3 = inlined_call_operand.vmem [shape: f32[16,256], index: 3, kind: output, shape index: {}]
  %s4 = sld [smem:[#allocation0]]
  $region22: #{bart_forward.37} parent=0
    _
  %s6 = ssub.s32 1, %s4
  %s7 = scalar_select 0, %s6, %s4
  // Predicated region
  $region2: #{bart_forward.37} parent=0 // pred_check
    _
  $region3: #{bart_forward.37} parent=0 // pred_check_branch
    %9 = sbr.rel (0) target = $region5
  $region4: #{bart_forward.37} parent=0 // pred_region
    _
  $region5: #{bart_forward.37} parent=0 // pred_fallthru
    _
  // Predicated region
  $region6: #{bart_forward.37} parent=0 // pred_check
    _
  $region7: #{bart_forward.37} parent=0 // pred_check_branch
    %11 = sbr.rel (0) target = $region9
  $region8: #{bart_forward.37} parent=0 // pred_region
    _
  $region9: #{bart_forward.37} parent=0 // pred_fallthru
    _
  // Predicated region
  $region10: #{bart_forward.37} parent=0 // pred_check
    _
  $region11: #{bart_forward.37} parent=0 // pred_check_branch
    %13 = sbr.rel (0) target = $region13
  $region12: #{bart_forward.37} parent=0 // pred_region
    _
  $region13: #{bart_forward.37} parent=0 // pred_fallthru
    _
  %v14 = vld [vmem:[%s0] sm:$0xff]
  %v15 = vld [vmem:[%s0 + $0x8] sm:$0xff]
  %v16 = vld [vmem:[%s1] sm:$0xff]
  %v17 = vld [vmem:[%s1 + $0x8] sm:$0xff]
  %v18 = vld [vmem:[%s1 + $0x10] sm:$0xff]
  %v19 = vld [vmem:[%s1 + $0x18] sm:$0xff]
  %v20 = vld [vmem:[%s1 + $0x20] sm:$0xff]
  %v21 = vld [vmem:[%s1 + $0x28] sm:$0xff]
  %v22 = vld [vmem:[%s1 + $0x30] sm:$0xff]
  %v23 = vld [vmem:[%s1 + $0x38] sm:$0xff]
  %v24 = vld [vmem:[%s1 + $0x40] sm:$0xff]
  %v25 = vld [vmem:[%s1 + $0x48] sm:$0xff]
  %v26 = vld [vmem:[%s1 + $0x50] sm:$0xff]
  %v27 = vld [vmem:[%s1 + $0x58] sm:$0xff]
  %v28 = vld [vmem:[%s1 + $0x60] sm:$0xff]
  %v29 = vld [vmem:[%s1 + $0x68] sm:$0xff]
  %v30 = vld [vmem:[%s1 + $0x70] sm:$0xff]
  %v31 = vld [vmem:[%s1 + $0x78] sm:$0xff]
  %v32 = vld [vmem:[%s1 + $0x80] sm:$0xff]
  %v33 = vld [vmem:[%s1 + $0x88] sm:$0xff]
  %v34 = vld [vmem:[%s1 + $0x90] sm:$0xff]
  %v35 = vld [vmem:[%s1 + $0x98] sm:$0xff]
  %v36 = vld [vmem:[%s1 + $0xa0] sm:$0xff]
  %v37 = vld [vmem:[%s1 + $0xa8] sm:$0xff]
  %v38 = vld [vmem:[%s1 + $0xb0] sm:$0xff]
  %v39 = vld [vmem:[%s1 + $0xb8] sm:$0xff]
  %v40 = vld [vmem:[%s1 + $0xc0] sm:$0xff]
  %v41 = vld [vmem:[%s1 + $0xc8] sm:$0xff]
  %v42 = vld [vmem:[%s1 + $0xd0] sm:$0xff]
  %v43 = vld [vmem:[%s1 + $0xd8] sm:$0xff]
  %v44 = vld [vmem:[%s1 + $0xe0] sm:$0xff]
  %v45 = vld [vmem:[%s1 + $0xe8] sm:$0xff]
  %v46 = vld [vmem:[%s1 + $0xf0] sm:$0xff]
  %v47 = vld [vmem:[%s1 + $0xf8] sm:$0xff]
  %v48 = vld [vmem:[%s2] sm:$0x3]
  %v50 = vperm.slane %v48, 0
  %v51 = vperm.slane %v48, 1
  %54 = vmatpush.xpose.msra.mxu0 %v31
  %55 = vmatpush.xpose.msra.mxu0 %v30
  %56 = vmatpush.xpose.msra.mxu0 %v29
  %57 = vmatpush.xpose.msra.mxu0 %v28
  %58 = vmatpush.xpose.msra.mxu0 %v27
  %59 = vmatpush.xpose.msra.mxu0 %v26
  %60 = vmatpush.xpose.msra.mxu0 %v25
  %61 = vmatpush.xpose.msra.mxu0 %v24
  %62 = vmatpush.xpose.msra.mxu0 %v23
  %63 = vmatpush.xpose.msra.mxu0 %v22
  %64 = vmatpush.xpose.msra.mxu0 %v21
  %65 = vmatpush.xpose.msra.mxu0 %v20
  %66 = vmatpush.xpose.msra.mxu0 %v19
  %67 = vmatpush.xpose.msra.mxu0 %v18
  %68 = vmatpush.xpose.msra.mxu0 %v17
  %69 = vmatpush.xpose.msra.mxu0 %v16
  %70 = vmatmul.f32.gmra.mxu0 %v14
  %v71 = vpop.f32.mrf.mxu0
  %v72 = vadd.f32 %v50, %v71
  %73 = vmatmul.f32.gmra.mxu0 %v15
  %v74 = vpop.f32.mrf.mxu0
  %v75 = vadd.f32 %v50, %v74
  %76 = vdwg.mxu0
  %77 = vmatpush.xpose.msra.mxu0 %v47
  %78 = vmatpush.xpose.msra.mxu0 %v46
  %79 = vmatpush.xpose.msra.mxu0 %v45
  %80 = vmatpush.xpose.msra.mxu0 %v44
  %81 = vmatpush.xpose.msra.mxu0 %v43
  %82 = vmatpush.xpose.msra.mxu0 %v42
  %83 = vmatpush.xpose.msra.mxu0 %v41
  %84 = vmatpush.xpose.msra.mxu0 %v40
  %85 = vmatpush.xpose.msra.mxu0 %v39
  %86 = vmatpush.xpose.msra.mxu0 %v38
  %87 = vmatpush.xpose.msra.mxu0 %v37
  %88 = vmatpush.xpose.msra.mxu0 %v36
  %89 = vmatpush.xpose.msra.mxu0 %v35
  %90 = vmatpush.xpose.msra.mxu0 %v34
  %91 = vmatpush.xpose.msra.mxu0 %v33
  %92 = vmatpush.xpose.msra.mxu0 %v32
  %93 = vmatmul.f32.gmra.mxu0 %v14
  %v94 = vpop.f32.mrf.mxu0
  %v95 = vadd.f32 %v51, %v94
  %96 = vmatmul.f32.gmra.mxu0 %v15
  %v97 = vpop.f32.mrf.mxu0
  %v98 = vadd.f32 %v51, %v97
  %99 = vdwg.mxu0
  %100 = vst [vmem:[%s3] sm:$0xff] %v72
  %101 = vst [vmem:[%s3 + $0x8] sm:$0xff] %v95
  %102 = vst [vmem:[%s3 + $0x10] sm:$0xff] %v75
  %103 = vst [vmem:[%s3 + $0x18] sm:$0xff] %v98
  // Predicated region
  $region14: #{bart_forward.37} parent=0 // pred_check
    _
  $region15: #{bart_forward.37} parent=0 // pred_check_branch
    %105 = sbr.rel (0) target = $region17
  $region16: #{bart_forward.37} parent=0 // pred_region
    _
  $region17: #{bart_forward.37} parent=0 // pred_fallthru
    _
  // Predicated region
  $region18: #{bart_forward.37} parent=0 // pred_check
    _
  $region19: #{bart_forward.37} parent=0 // pred_check_branch
    %107 = sbr.rel (0) target = $region21
  $region20: #{bart_forward.37} parent=0 // pred_region
    _
  $region21: #{bart_forward.37} parent=0 // pred_fallthru
    _

// kernel: bart_forward.28
$region0: #{bart_forward.28}
  #allocation0 [shape = 'u32[]', space=smem, size = 0x4, offset = 0x4, fixed_abs, tag = 'smem constant byte address 0x4 - core index']
  #allocation1 [shape = 'u32[72,128]{1,0:T(1,128)}', space=vmem, size = 0x9000, scoped, tag = 'internal scratch']
  %s0 = inlined_call_operand.vmem [shape: f32[16,128], index: 0, kind: input, shape index: {}, may-alias: {0,5}]
  %s1 = inlined_call_operand.vmem [shape: f32[256,128], index: 1, kind: input, shape index: {}]
  %s2 = inlined_call_operand.vmem [shape: f32[1,256], index: 2, kind: input, shape index: {}]
  %s3 = inlined_call_operand.vmem [shape: f32[128,256], index: 3, kind: input, shape index: {}]
  %s4 = inlined_call_operand.vmem [shape: f32[1,128], index: 4, kind: input, shape index: {}]
  %s5 = inlined_call_operand.vmem [shape: f32[16,128], index: 5, kind: input, shape index: {}, may-alias: {0,5}]
  %s6 = inlined_call_operand.vmem [shape: f32[1,128], index: 6, kind: input, shape index: {}]
  %s7 = inlined_call_operand.vmem [shape: f32[1,128], index: 7, kind: input, shape index: {}]
  %s8 = inlined_call_operand.vmem [shape: f32[16,128], index: 8, kind: output, shape index: {}]
  %s9 = sld [smem:[#allocation0]]
  $region42: #{bart_forward.28} parent=0
    _
  %s11 = ssub.s32 1, %s9
  %s12 = scalar_select 0, %s11, %s9
  // Predicated region
  $region2: #{bart_forward.28} parent=0 // pred_check
    _
  $region3: #{bart_forward.28} parent=0 // pred_check_branch
    %14 = sbr.rel (0) target = $region5
  $region4: #{bart_forward.28} parent=0 // pred_region
    _
  $region5: #{bart_forward.28} parent=0 // pred_fallthru
    _
  // Predicated region
  $region6: #{bart_forward.28} parent=0 // pred_check
    _
  $region7: #{bart_forward.28} parent=0 // pred_check_branch
    %16 = sbr.rel (0) target = $region9
  $region8: #{bart_forward.28} parent=0 // pred_region
    _
  $region9: #{bart_forward.28} parent=0 // pred_fallthru
    _
  // Predicated region
  $region10: #{bart_forward.28} parent=0 // pred_check
    _
  $region11: #{bart_forward.28} parent=0 // pred_check_branch
    %18 = sbr.rel (0) target = $region13
  $region12: #{bart_forward.28} parent=0 // pred_region
    _
  $region13: #{bart_forward.28} parent=0 // pred_fallthru
    _
  // Predicated region
  $region14: #{bart_forward.28} parent=0 // pred_check
    _
  $region15: #{bart_forward.28} parent=0 // pred_check_branch
    %20 = sbr.rel (0) target = $region17
  $region16: #{bart_forward.28} parent=0 // pred_region
    _
  $region17: #{bart_forward.28} parent=0 // pred_fallthru
    _
  // Predicated region
  $region18: #{bart_forward.28} parent=0 // pred_check
    _
  $region19: #{bart_forward.28} parent=0 // pred_check_branch
    %22 = sbr.rel (0) target = $region21
  $region20: #{bart_forward.28} parent=0 // pred_region
    _
  $region21: #{bart_forward.28} parent=0 // pred_fallthru
    _
  // Predicated region
  $region22: #{bart_forward.28} parent=0 // pred_check
    _
  $region23: #{bart_forward.28} parent=0 // pred_check_branch
    %24 = sbr.rel (0) target = $region25
  $region24: #{bart_forward.28} parent=0 // pred_region
    _
  $region25: #{bart_forward.28} parent=0 // pred_fallthru
    _
  // Predicated region
  $region26: #{bart_forward.28} parent=0 // pred_check
    _
  $region27: #{bart_forward.28} parent=0 // pred_check_branch
    %26 = sbr.rel (0) target = $region29
  $region28: #{bart_forward.28} parent=0 // pred_region
    _
  $region29: #{bart_forward.28} parent=0 // pred_fallthru
    _
  // Predicated region
  $region30: #{bart_forward.28} parent=0 // pred_check
    _
  $region31: #{bart_forward.28} parent=0 // pred_check_branch
    %28 = sbr.rel (0) target = $region33
  $region32: #{bart_forward.28} parent=0 // pred_region
    _
  $region33: #{bart_forward.28} parent=0 // pred_fallthru
    _
  %v29 = vld [vmem:[%s0] sm:$0xff]
  %v30 = vld [vmem:[%s0 + $0x8] sm:$0xff]
  %v31 = vld [vmem:[%s1] sm:$0xff]
  %v32 = vld [vmem:[%s1 + $0x8] sm:$0xff]
  %v33 = vld [vmem:[%s1 + $0x10] sm:$0xff]
  %v34 = vld [vmem:[%s1 + $0x18] sm:$0xff]
  %v35 = vld [vmem:[%s1 + $0x20] sm:$0xff]
  %v36 = vld [vmem:[%s1 + $0x28] sm:$0xff]
  %v37 = vld [vmem:[%s1 + $0x30] sm:$0xff]
  %v38 = vld [vmem:[%s1 + $0x38] sm:$0xff]
  %v39 = vld [vmem:[%s1 + $0x40] sm:$0xff]
  %v40 = vld [vmem:[%s1 + $0x48] sm:$0xff]
  %v41 = vld [vmem:[%s1 + $0x50] sm:$0xff]
  %v42 = vld [vmem:[%s1 + $0x58] sm:$0xff]
  %v43 = vld [vmem:[%s1 + $0x60] sm:$0xff]
  %v44 = vld [vmem:[%s1 + $0x68] sm:$0xff]
  %v45 = vld [vmem:[%s1 + $0x70] sm:$0xff]
  %v46 = vld [vmem:[%s1 + $0x78] sm:$0xff]
  %v47 = vld [vmem:[%s1 + $0x80] sm:$0xff]
  %v48 = vld [vmem:[%s1 + $0x88] sm:$0xff]
  %v49 = vld [vmem:[%s1 + $0x90] sm:$0xff]
  %v50 = vld [vmem:[%s1 + $0x98] sm:$0xff]
  %v51 = vld [vmem:[%s1 + $0xa0] sm:$0xff]
  %v52 = vld [vmem:[%s1 + $0xa8] sm:$0xff]
  %v53 = vld [vmem:[%s1 + $0xb0] sm:$0xff]
  %v54 = vld [vmem:[%s1 + $0xb8] sm:$0xff]
  %v55 = vld [vmem:[%s1 + $0xc0] sm:$0xff]
  %v56 = vld [vmem:[%s1 + $0xc8] sm:$0xff]
  %v57 = vld [vmem:[%s1 + $0xd0] sm:$0xff]
  %v58 = vld [vmem:[%s1 + $0xd8] sm:$0xff]
  %v59 = vld [vmem:[%s1 + $0xe0] sm:$0xff]
  %v60 = vld [vmem:[%s1 + $0xe8] sm:$0xff]
  %v61 = vld [vmem:[%s1 + $0xf0] sm:$0xff]
  %v62 = vld [vmem:[%s1 + $0xf8] sm:$0xff]
  %v63 = vld [vmem:[%s2] sm:$0x3]
  %v65 = vperm.slane %v63, 0
  %v66 = vperm.slane %v63, 1
  %69 = vmatpush.xpose.msra.mxu0 %v46
  %70 = vmatpush.xpose.msra.mxu0 %v45
  %71 = vmatpush.xpose.msra.mxu0 %v44
  %72 = vmatpush.xpose.msra.mxu0 %v43
  %73 = vmatpush.xpose.msra.mxu0 %v42
  %74 = vmatpush.xpose.msra.mxu0 %v41
  %75 = vmatpush.xpose.msra.mxu0 %v40
  %76 = vmatpush.xpose.msra.mxu0 %v39
  %77 = vmatpush.xpose.msra.mxu0 %v38
  %78 = vmatpush.xpose.msra.mxu0 %v37
  %79 = vmatpush.xpose.msra.mxu0 %v36
  %80 = vmatpush.xpose.msra.mxu0 %v35
  %81 = vmatpush.xpose.msra.mxu0 %v34
  %82 = vmatpush.xpose.msra.mxu0 %v33
  %83 = vmatpush.xpose.msra.mxu0 %v32
  %84 = vmatpush.xpose.msra.mxu0 %v31
  %85 = vmatmul.f32.gmra.mxu0 %v29
  %v86 = vpop.f32.mrf.mxu0
  %v87 = vadd.f32 %v65, %v86
  %88 = vmatmul.f32.gmra.mxu0 %v30
  %v89 = vpop.f32.mrf.mxu0
  %v90 = vadd.f32 %v65, %v89
  %91 = vdwg.mxu0
  %92 = vmatpush.xpose.msra.mxu0 %v62
  %93 = vmatpush.xpose.msra.mxu0 %v61
  %94 = vmatpush.xpose.msra.mxu0 %v60
  %95 = vmatpush.xpose.msra.mxu0 %v59
  %96 = vmatpush.xpose.msra.mxu0 %v58
  %97 = vmatpush.xpose.msra.mxu0 %v57
  %98 = vmatpush.xpose.msra.mxu0 %v56
  %99 = vmatpush.xpose.msra.mxu0 %v55
  %100 = vmatpush.xpose.msra.mxu0 %v54
  %101 = vmatpush.xpose.msra.mxu0 %v53
  %102 = vmatpush.xpose.msra.mxu0 %v52
  %103 = vmatpush.xpose.msra.mxu0 %v51
  %104 = vmatpush.xpose.msra.mxu0 %v50
  %105 = vmatpush.xpose.msra.mxu0 %v49
  %106 = vmatpush.xpose.msra.mxu0 %v48
  %107 = vmatpush.xpose.msra.mxu0 %v47
  %108 = vmatmul.f32.gmra.mxu0 %v29
  %v109 = vpop.f32.mrf.mxu0
  %v110 = vadd.f32 %v66, %v109
  %111 = vmatmul.f32.gmra.mxu0 %v30
  %v112 = vpop.f32.mrf.mxu0
  %v113 = vadd.f32 %v66, %v112
  %114 = vdwg.mxu0
  %v115 = vmax.f32 %v87, 0.0
  %v116 = vmax.f32 %v110, 0.0
  %v117 = vmax.f32 %v90, 0.0
  %v118 = vmax.f32 %v113, 0.0
  %v119 = vld [vmem:[%s3] sm:$0xff]
  %v120 = vld [vmem:[%s3 + $0x8] sm:$0xff]
  %v121 = vld [vmem:[%s3 + $0x10] sm:$0xff]
  %v122 = vld [vmem:[%s3 + $0x18] sm:$0xff]
  %v123 = vld [vmem:[%s3 + $0x20] sm:$0xff]
  %v124 = vld [vmem:[%s3 + $0x28] sm:$0xff]
  %v125 = vld [vmem:[%s3 + $0x30] sm:$0xff]
  %v126 = vld [vmem:[%s3 + $0x38] sm:$0xff]
  %v127 = vld [vmem:[%s3 + $0x40] sm:$0xff]
  %v128 = vld [vmem:[%s3 + $0x48] sm:$0xff]
  %v129 = vld [vmem:[%s3 + $0x50] sm:$0xff]
  %v130 = vld [vmem:[%s3 + $0x58] sm:$0xff]
  %v131 = vld [vmem:[%s3 + $0x60] sm:$0xff]
  %v132 = vld [vmem:[%s3 + $0x68] sm:$0xff]
  %v133 = vld [vmem:[%s3 + $0x70] sm:$0xff]
  %v134 = vld [vmem:[%s3 + $0x78] sm:$0xff]
  %v135 = vld [vmem:[%s3 + $0x80] sm:$0xff]
  %v136 = vld [vmem:[%s3 + $0x88] sm:$0xff]
  %v137 = vld [vmem:[%s3 + $0x90] sm:$0xff]
  %v138 = vld [vmem:[%s3 + $0x98] sm:$0xff]
  %v139 = vld [vmem:[%s3 + $0xa0] sm:$0xff]
  %v140 = vld [vmem:[%s3 + $0xa8] sm:$0xff]
  %v141 = vld [vmem:[%s3 + $0xb0] sm:$0xff]
  %v142 = vld [vmem:[%s3 + $0xb8] sm:$0xff]
  %v143 = vld [vmem:[%s3 + $0xc0] sm:$0xff]
  %v144 = vld [vmem:[%s3 + $0xc8] sm:$0xff]
  %v145 = vld [vmem:[%s3 + $0xd0] sm:$0xff]
  %v146 = vld [vmem:[%s3 + $0xd8] sm:$0xff]
  %v147 = vld [vmem:[%s3 + $0xe0] sm:$0xff]
  %v148 = vld [vmem:[%s3 + $0xe8] sm:$0xff]
  %v149 = vld [vmem:[%s3 + $0xf0] sm:$0xff]
  %v150 = vld [vmem:[%s3 + $0xf8] sm:$0xff]
  %v151 = vld [vmem:[%s4] sm:$0x1]
  %v153 = vperm.slane %v151, 0
  %155 = vmatpush.xpose.msra.mxu0 %v149
  %156 = vmatpush.xpose.msra.mxu0 %v147
  %157 = vmatpush.xpose.msra.mxu0 %v145
  %158 = vmatpush.xpose.msra.mxu0 %v143
  %159 = vmatpush.xpose.msra.mxu0 %v141
  %160 = vmatpush.xpose.msra.mxu0 %v139
  %161 = vmatpush.xpose.msra.mxu0 %v137
  %162 = vmatpush.xpose.msra.mxu0 %v135
  %163 = vmatpush.xpose.msra.mxu0 %v133
  %164 = vmatpush.xpose.msra.mxu0 %v131
  %165 = vmatpush.xpose.msra.mxu0 %v129
  %166 = vmatpush.xpose.msra.mxu0 %v127
  %167 = vmatpush.xpose.msra.mxu0 %v125
  %168 = vmatpush.xpose.msra.mxu0 %v123
  %169 = vmatpush.xpose.msra.mxu0 %v121
  %170 = vmatpush.xpose.msra.mxu0 %v119
  %171 = vmatmul.f32.gmra.mxu0 %v115
  %v172 = vpop.f32.mrf.mxu0
  %v173 = vadd.f32 %v153, %v172
  %174 = vmatmul.f32.gmra.mxu0 %v117
  %v175 = vpop.f32.mrf.mxu0
  %v176 = vadd.f32 %v153, %v175
  %177 = vdwg.mxu0
  %178 = vmatpush.xpose.msra.mxu0 %v150
  %179 = vmatpush.xpose.msra.mxu0 %v148
  %180 = vmatpush.xpose.msra.mxu0 %v146
  %181 = vmatpush.xpose.msra.mxu0 %v144
  %182 = vmatpush.xpose.msra.mxu0 %v142
  %183 = vmatpush.xpose.msra.mxu0 %v140
  %184 = vmatpush.xpose.msra.mxu0 %v138
  %185 = vmatpush.xpose.msra.mxu0 %v136
  %186 = vmatpush.xpose.msra.mxu0 %v134
  %187 = vmatpush.xpose.msra.mxu0 %v132
  %188 = vmatpush.xpose.msra.mxu0 %v130
  %189 = vmatpush.xpose.msra.mxu0 %v128
  %190 = vmatpush.xpose.msra.mxu0 %v126
  %191 = vmatpush.xpose.msra.mxu0 %v124
  %192 = vmatpush.xpose.msra.mxu0 %v122
  %193 = vmatpush.xpose.msra.mxu0 %v120
  %194 = vmatmul.f32.gmra.mxu0 %v116
  %v195 = vpop.f32.mrf.mxu0
  %v196 = vadd.f32 %v173, %v195
  %197 = vmatmul.f32.gmra.mxu0 %v118
  %v198 = vpop.f32.mrf.mxu0
  %v199 = vadd.f32 %v176, %v198
  %200 = vdwg.mxu0
  %v201 = vld [vmem:[%s5] sm:$0xff]
  %v202 = vld [vmem:[%s5 + $0x8] sm:$0xff]
  %v203 = vadd.f32 %v196, %v201
  %v204 = vadd.f32 %v199, %v202
  %v205 = vld [vmem:[%s6] sm:$0x1]
  %v206 = vld [vmem:[%s7] sm:$0x1]
  %207 = vadd.xlane.f32.xlu0 %v203
  %v208 = vpop.xlane.xlu0 %207
  %209 = vadd.xlane.f32.xlu0 %v204
  %v210 = vpop.xlane.xlu0 %209
  %v211 = vrcp.pop 128.0
  %v212 = vmul.f32 128.0, %v211
  %v213 = vsub.f32 1.0, %v212
  %v214 = vmul.f32 %v211, %v213
  %v215 = vadd.f32 %v211, %v214
  %vm216 = vweird.f32 %v211
  %v217 = vsel %vm216, %v211, %v215
  %v218 = vmul.f32 %v208, %v217
  %v219 = vmul.f32 %v210, %v217
  %v220 = vsub.f32 %v203, %v218
  %v221 = vsub.f32 %v204, %v219
  %v222 = vmul.f32 %v220, %v220
  %v223 = vmul.f32 %v221, %v221
  %224 = vadd.xlane.f32.xlu0 %v222
  %v225 = vpop.xlane.xlu0 %224
  %226 = vadd.xlane.f32.xlu0 %v223
  %v227 = vpop.xlane.xlu0 %226
  %v228 = vmul.f32 %v225, %v217
  %v229 = vmul.f32 %v227, %v217
  %v230 = vadd.f32 %v228, 1e-05
  %v231 = vadd.f32 %v229, 1e-05
  %v232 = vrsqrt.pop %v230
  %v233 = vmul.f32 %v232, %v230
  %v234 = vmul.f32 %v233, %v232
  %v235 = vmul.f32 0.5, %v234
  %v236 = vsub.f32 1.5, %v235
  %v237 = vmul.f32 %v232, %v236
  %vm238 = vweird.f32 %v230
  %vm239 = vweird.f32 %v232
  %vm240 = vmor %vm238, %vm239
  %v241 = vsel %vm240, %v232, %v237
  %v242 = vrsqrt.pop %v231
  %v243 = vmul.f32 %v242, %v231
  %v244 = vmul.f32 %v243, %v242
  %v245 = vmul.f32 0.5, %v244
  %v246 = vsub.f32 1.5, %v245
  %v247 = vmul.f32 %v242, %v246
  %vm248 = vweird.f32 %v231
  %vm249 = vweird.f32 %v242
  %vm250 = vmor %vm248, %vm249
  %v251 = vsel %vm250, %v242, %v247
  %v252 = vmul.f32 %v220, %v241
  %v253 = vmul.f32 %v221, %v251
  %v255 = vperm.slane %v205, 0
  %v257 = vmul.f32 %v252, %v255
  %v258 = vmul.f32 %v253, %v255
  %v260 = vperm.slane %v206, 0
  %v262 = vadd.f32 %v257, %v260
  %v263 = vadd.f32 %v258, %v260
  %264 = vst [vmem:[%s8] sm:$0xff] %v262
  %265 = vst [vmem:[%s8 + $0x8] sm:$0xff] %v263
  // Predicated region
  $region34: #{bart_forward.28} parent=0 // pred_check
    _
  $region35: #{bart_forward.28} parent=0 // pred_check_branch
    %267 = sbr.rel (0) target = $region37
  $region36: #{bart_forward.28} parent=0 // pred_region
    _
  $region37: #{bart_forward.28} parent=0 // pred_fallthru
    _
  // Predicated region
  $region38: #{bart_forward.28} parent=0 // pred_check
    _
  $region39: #{bart_forward.28} parent=0 // pred_check_branch
    %269 = sbr.rel (0) target = $region41
  $region40: #{bart_forward.28} parent=0 // pred_region
    _
  $region41: #{bart_forward.28} parent=0 // pred_fallthru
    _

// kernel: bart_forward.49
$region0: #{bart_forward.49}
  #allocation0 [shape = 'u32[]', space=smem, size = 0x4, offset = 0x4, fixed_abs, tag = 'smem constant byte address 0x4 - core index']
  #allocation1 [shape = 'u32[72,128]{1,0:T(1,128)}', space=vmem, size = 0x9000, scoped, tag = 'internal scratch']
  %s0 = inlined_call_operand.vmem [shape: f32[16,128], index: 0, kind: input, shape index: {}]
  %s1 = inlined_call_operand.vmem [shape: f32[256,128], index: 1, kind: input, shape index: {}]
  %s2 = inlined_call_operand.vmem [shape: f32[1,256], index: 2, kind: input, shape index: {}]
  %s3 = inlined_call_operand.hbm [shape: f32[16,256], index: 3, kind: output, shape index: {}]
  %s4 = sld [smem:[#allocation0]]
  $region22: #{bart_forward.49} parent=0
    _
  %s6 = ssub.s32 1, %s4
  %s7 = scalar_select 0, %s6, %s4
  $region1: #{bart_forward.49} parent=0
    #allocation2 [shape = 'u8[16384]{0}', space=vmem, size = 0x4000, scoped, tag = 'output window, operand 0, single buffered']
    #allocation3 [shape = 's32[1]{0}', space=sflag, size = 0x4, scoped, tag = 'scoped memory for bart_forward.49']
    %8 = vsyncpa [#allocation3], 0
    // Predicated region
    $region2: #{bart_forward.49} parent=1 // pred_check
      _
    $region3: #{bart_forward.49} parent=1 // pred_check_branch
      %10 = sbr.rel (0) target = $region5
    $region4: #{bart_forward.49} parent=1 // pred_region
      _
    $region5: #{bart_forward.49} parent=1 // pred_fallthru
      _
    // Predicated region
    $region6: #{bart_forward.49} parent=1 // pred_check
      _
    $region7: #{bart_forward.49} parent=1 // pred_check_branch
      %12 = sbr.rel (0) target = $region9
    $region8: #{bart_forward.49} parent=1 // pred_region
      _
    $region9: #{bart_forward.49} parent=1 // pred_fallthru
      _
    // Predicated region
    $region10: #{bart_forward.49} parent=1 // pred_check
      _
    $region11: #{bart_forward.49} parent=1 // pred_check_branch
      %14 = sbr.rel (0) target = $region13
    $region12: #{bart_forward.49} parent=1 // pred_region
      _
    $region13: #{bart_forward.49} parent=1 // pred_fallthru
      _
    %v15 = vld [vmem:[%s0] sm:$0xff]
    %v16 = vld [vmem:[%s0 + $0x8] sm:$0xff]
    %v17 = vld [vmem:[%s1] sm:$0xff]
    %v18 = vld [vmem:[%s1 + $0x8] sm:$0xff]
    %v19 = vld [vmem:[%s1 + $0x10] sm:$0xff]
    %v20 = vld [vmem:[%s1 + $0x18] sm:$0xff]
    %v21 = vld [vmem:[%s1 + $0x20] sm:$0xff]
    %v22 = vld [vmem:[%s1 + $0x28] sm:$0xff]
    %v23 = vld [vmem:[%s1 + $0x30] sm:$0xff]
    %v24 = vld [vmem:[%s1 + $0x38] sm:$0xff]
    %v25 = vld [vmem:[%s1 + $0x40] sm:$0xff]
    %v26 = vld [vmem:[%s1 + $0x48] sm:$0xff]
    %v27 = vld [vmem:[%s1 + $0x50] sm:$0xff]
    %v28 = vld [vmem:[%s1 + $0x58] sm:$0xff]
    %v29 = vld [vmem:[%s1 + $0x60] sm:$0xff]
    %v30 = vld [vmem:[%s1 + $0x68] sm:$0xff]
    %v31 = vld [vmem:[%s1 + $0x70] sm:$0xff]
    %v32 = vld [vmem:[%s1 + $0x78] sm:$0xff]
    %v33 = vld [vmem:[%s1 + $0x80] sm:$0xff]
    %v34 = vld [vmem:[%s1 + $0x88] sm:$0xff]
    %v35 = vld [vmem:[%s1 + $0x90] sm:$0xff]
    %v36 = vld [vmem:[%s1 + $0x98] sm:$0xff]
    %v37 = vld [vmem:[%s1 + $0xa0] sm:$0xff]
    %v38 = vld [vmem:[%s1 + $0xa8] sm:$0xff]
    %v39 = vld [vmem:[%s1 + $0xb0] sm:$0xff]
    %v40 = vld [vmem:[%s1 + $0xb8] sm:$0xff]
    %v41 = vld [vmem:[%s1 + $0xc0] sm:$0xff]
    %v42 = vld [vmem:[%s1 + $0xc8] sm:$0xff]
    %v43 = vld [vmem:[%s1 + $0xd0] sm:$0xff]
    %v44 = vld [vmem:[%s1 + $0xd8] sm:$0xff]
    %v45 = vld [vmem:[%s1 + $0xe0] sm:$0xff]
    %v46 = vld [vmem:[%s1 + $0xe8] sm:$0xff]
    %v47 = vld [vmem:[%s1 + $0xf0] sm:$0xff]
    %v48 = vld [vmem:[%s1 + $0xf8] sm:$0xff]
    %v49 = vld [vmem:[%s2] sm:$0x3]
    %v51 = vperm.slane %v49, 0
    %v52 = vperm.slane %v49, 1
    %55 = vmatpush.xpose.msra.mxu0 %v32
    %56 = vmatpush.xpose.msra.mxu0 %v31
    %57 = vmatpush.xpose.msra.mxu0 %v30
    %58 = vmatpush.xpose.msra.mxu0 %v29
    %59 = vmatpush.xpose.msra.mxu0 %v28
    %60 = vmatpush.xpose.msra.mxu0 %v27
    %61 = vmatpush.xpose.msra.mxu0 %v26
    %62 = vmatpush.xpose.msra.mxu0 %v25
    %63 = vmatpush.xpose.msra.mxu0 %v24
    %64 = vmatpush.xpose.msra.mxu0 %v23
    %65 = vmatpush.xpose.msra.mxu0 %v22
    %66 = vmatpush.xpose.msra.mxu0 %v21
    %67 = vmatpush.xpose.msra.mxu0 %v20
    %68 = vmatpush.xpose.msra.mxu0 %v19
    %69 = vmatpush.xpose.msra.mxu0 %v18
    %70 = vmatpush.xpose.msra.mxu0 %v17
    %71 = vmatmul.f32.gmra.mxu0 %v15
    %v72 = vpop.f32.mrf.mxu0
    %v73 = vadd.f32 %v51, %v72
    %74 = vmatmul.f32.gmra.mxu0 %v16
    %v75 = vpop.f32.mrf.mxu0
    %v76 = vadd.f32 %v51, %v75
    %77 = vdwg.mxu0
    %78 = vmatpush.xpose.msra.mxu0 %v48
    %79 = vmatpush.xpose.msra.mxu0 %v47
    %80 = vmatpush.xpose.msra.mxu0 %v46
    %81 = vmatpush.xpose.msra.mxu0 %v45
    %82 = vmatpush.xpose.msra.mxu0 %v44
    %83 = vmatpush.xpose.msra.mxu0 %v43
    %84 = vmatpush.xpose.msra.mxu0 %v42
    %85 = vmatpush.xpose.msra.mxu0 %v41
    %86 = vmatpush.xpose.msra.mxu0 %v40
    %87 = vmatpush.xpose.msra.mxu0 %v39
    %88 = vmatpush.xpose.msra.mxu0 %v38
    %89 = vmatpush.xpose.msra.mxu0 %v37
    %90 = vmatpush.xpose.msra.mxu0 %v36
    %91 = vmatpush.xpose.msra.mxu0 %v35
    %92 = vmatpush.xpose.msra.mxu0 %v34
    %93 = vmatpush.xpose.msra.mxu0 %v33
    %94 = vmatmul.f32.gmra.mxu0 %v15
    %v95 = vpop.f32.mrf.mxu0
    %v96 = vadd.f32 %v52, %v95
    %97 = vmatmul.f32.gmra.mxu0 %v16
    %v98 = vpop.f32.mrf.mxu0
    %v99 = vadd.f32 %v52, %v98
    %100 = vdwg.mxu0
    %101 = vst [vmem:[#allocation2] sm:$0xff] %v73
    %102 = vst [vmem:[#allocation2 + $0x8] sm:$0xff] %v96
    %103 = vst [vmem:[#allocation2 + $0x10] sm:$0xff] %v76
    %104 = vst [vmem:[#allocation2 + $0x18] sm:$0xff] %v99
    // Predicated region
    $region14: #{bart_forward.49} parent=1 // pred_check
      _
    $region15: #{bart_forward.49} parent=1 // pred_check_branch
      %106 = sbr.rel (0) target = $region17
    $region16: #{bart_forward.49} parent=1 // pred_region
      %108 = vsyncadd [#allocation3], 0
      %s109 = sshll.u32 [#allocation2], 4
      %s110 = int_to_ptr.vmem [resolvable:$true] %s109
      %s111 = sshll.u32 %s3, 4
      %s112 = int_to_ptr.hbm [resolvable:$true] %s111
      %117 = dma.vmem_to_hbm [thread:$0]  %s110, 512, %s112, [#allocation3], 256, 256, 16
    $region17: #{bart_forward.49} parent=1 // pred_fallthru
      _
    // Predicated region
    $region18: #{bart_forward.49} parent=1 // pred_check
      _
    $region19: #{bart_forward.49} parent=1 // pred_check_branch
      %119 = sbr.rel (0) target = $region21
    $region20: #{bart_forward.49} parent=1 // pred_region
      %121 = dma.done [#allocation3], 512
    $region21: #{bart_forward.49} parent=1 // pred_fallthru
      _
    %122 = vsyncpa [#allocation3], 1

</llo_original>
